<compile_context>
chip_gen: v6e
topology: v6e:2x2x1
jax: 0.10.0
libtpu: 0.0.40
codegen_flags: <defaults>
</compile_context>

<pallas_src>
import functools

import jax
import jax.numpy as jnp
from jax.experimental import pallas as pl
from jax.experimental.pallas import tpu as pltpu


# --------------------------------------------------------------------------------------
# Fused kernel: one image per grid step, all 6 Basicbl blocks + outer skip.
# Activations are (P, C) with P = H*W flattened row-major and C = 64 on the lane axis.
# --------------------------------------------------------------------------------------

def _basic_u_kernel(x_ref, cw1_ref, cb1_ref, cw2_ref, cb2_ref,
                    aw1t_ref, ab1_ref, aw2_ref, ab2_ref,
                    o_ref, nbuf_ref, wbuf_ref,
                    *, H, W, C, n_blocks, npad, wpad):
    P = H * W
    C3 = 3 * C

    # Zero ONLY the (never-written) border rows of the two staging buffers, once per image.
    nbuf_ref[0:npad, :] = jnp.zeros((npad, C), jnp.float32)
    nbuf_ref[npad + P:npad + P + npad, :] = jnp.zeros((npad, C), jnp.float32)
    wbuf_ref[0:wpad, :] = jnp.zeros((wpad, C3), jnp.bfloat16)
    wbuf_ref[wpad + P:wpad + P + wpad, :] = jnp.zeros((wpad, C3), jnp.bfloat16)

    def conv3x3(t, w_ref, b_ref, blk, relu):
        # --- horizontal (+/-1 column) taps: masked +/-1-row reads of a small f32 buffer.
        #     Masks are recomputed here from an iota so they are never live across blocks.
        nbuf_ref[npad:npad + P, :] = t
        col = jax.lax.broadcasted_iota(jnp.int32, (P, C), 0) % W
        ctr = t.astype(jnp.bfloat16)
        lft = jnp.where(col != 0,
                        nbuf_ref[npad - 1:npad - 1 + P, :], 0.0).astype(jnp.bfloat16)
        rgt = jnp.where(col != W - 1,
                        nbuf_ref[npad + 1:npad + 1 + P, :], 0.0).astype(jnp.bfloat16)

        # --- dx-fold: (P, 3C) bf16 LHS tile [left | center | right] stored once into the
        #     zero-bordered wide buffer.  Both stores are vreg-aligned (lane offsets 0 and 128).
        wbuf_ref[wpad:wpad + P, 0:2 * C] = jnp.concatenate([lft, ctr], axis=1)
        wbuf_ref[wpad:wpad + P, 2 * C:C3] = rgt

        # --- vertical (dy) taps: read the tile at row offset dy*W (borders supply the zero
        #     padding) and accumulate the 3 K=3C dots purely in registers (no VMEM accumulator).
        acc = None
        for kdy in range(3):                               # dy = kdy - 1
            off = wpad + (kdy - 1) * W                     # multiple of W -> aligned offset
            lhs = wbuf_ref[off:off + P, :]
            d = jnp.dot(lhs, w_ref[blk * 3 + kdy], preferred_element_type=jnp.float32)
            acc = d if acc is None else acc + d
        out = acc + b_ref[blk]
        if relu:
            out = jnp.maximum(out, 0.0)
        return out

    def block_step(blk, h):
        t = conv3x3(h, cw1_ref, cb1_ref, blk, relu=True)    # conv3x3 + ReLU
        t = conv3x3(t, cw2_ref, cb2_ref, blk, relu=False)   # conv3x3
        # Channel attention: att = sigmoid(relu(mean_hw(t) @ W1 + b1) @ W2 + b2); h + t * att.
        # Done on the VPU (broadcast-mul + reductions) so it never touches the MXU weight path.
        pooled = jnp.mean(t, axis=0, keepdims=True)                                  # (1, C)
        s = jnp.sum(pooled * aw1t_ref[blk], axis=1, keepdims=True) + ab1_ref[blk]    # (Cr, 1)
        s = jnp.maximum(s, 0.0)
        logits = jnp.sum(s * aw2_ref[blk], axis=0, keepdims=True) + ab2_ref[blk]     # (1, C)
        att = jax.nn.sigmoid(logits)
        return h + t * att

    h = jax.lax.fori_loop(0, n_blocks, block_step, x_ref[...])
    o_ref[...] = (x_ref[...] + h).astype(o_ref.dtype)       # outer skip; x re-read from VMEM


# --------------------------------------------------------------------------------------
# Wrapper: fold/stack weights once, single pallas_call over the batch.
# --------------------------------------------------------------------------------------

def basic_u_forward(x, params):
    N, H, W, C = x.shape
    n_blocks = len(params)
    Cr = params[0]["aw1"].shape[1]
    P = H * W
    npad = 8                                   # front border of the +/-1 column-shift buffer
    wpad = max(16, -(-W // 16) * 16)           # >= W, multiple of 16 (bf16 row-tile alignment)

    # dx taps folded onto the contraction axis: (3,3,C,C) HWIO -> row blocks [kx=0 | kx=1 | kx=2]
    # of a (3C, C) matrix per vertical tap, matching the [left|center|right] LHS lane layout.
    cw1 = jnp.stack([p["cw1"] for p in params]).reshape(
        n_blocks * 3, 3 * C, C).astype(jnp.bfloat16)
    cw2 = jnp.stack([p["cw2"] for p in params]).reshape(
        n_blocks * 3, 3 * C, C).astype(jnp.bfloat16)
    cb1 = jnp.stack([p["cb1"] for p in params])                     # (nb, 1, C)  f32
    cb2 = jnp.stack([p["cb2"] for p in params])                     # (nb, 1, C)  f32
    aw1t = jnp.stack([p["aw1"].T for p in params])                  # (nb, Cr, C) f32
    ab1 = jnp.stack([p["ab1"].reshape(Cr, 1) for p in params])      # (nb, Cr, 1) f32
    aw2 = jnp.stack([p["aw2"] for p in params])                     # (nb, Cr, C) f32
    ab2 = jnp.stack([p["ab2"] for p in params])                     # (nb, 1, C)  f32

    xf = x.reshape(N, P, C)
    kern = functools.partial(_basic_u_kernel, H=H, W=W, C=C,
                             n_blocks=n_blocks, npad=npad, wpad=wpad)

    full3 = lambda n: (0, 0, 0)
    out = pl.pallas_call(
        kern,
        out_shape=jax.ShapeDtypeStruct((N, P, C), x.dtype),
        grid=(N,),
        in_specs=[
            pl.BlockSpec((None, P, C), lambda n: (n, 0, 0)),
            pl.BlockSpec((n_blocks * 3, 3 * C, C), full3),
            pl.BlockSpec((n_blocks, 1, C), full3),
            pl.BlockSpec((n_blocks * 3, 3 * C, C), full3),
            pl.BlockSpec((n_blocks, 1, C), full3),
            pl.BlockSpec((n_blocks, Cr, C), full3),
            pl.BlockSpec((n_blocks, Cr, 1), full3),
            pl.BlockSpec((n_blocks, Cr, C), full3),
            pl.BlockSpec((n_blocks, 1, C), full3),
        ],
        out_specs=pl.BlockSpec((None, P, C), lambda n: (n, 0, 0)),
        scratch_shapes=[
            pltpu.VMEM((P + 2 * npad, C), jnp.float32),        # +/-1 column-shift buffer
            pltpu.VMEM((P + 2 * wpad, 3 * C), jnp.bfloat16),   # zero-bordered dy-offset LHS tile
        ],
        compiler_params=pltpu.CompilerParams(
            dimension_semantics=("parallel",),                 # v7x: one image per TensorCore
        ),
    )(xf, cw1, cb1, cw2, cb2, aw1t, ab1, aw2, ab2)
    return out.reshape(N, H, W, C)


# --------------------------------------------------------------------------------------
# Pure-JAX reference (same math, XLA ops) for a correctness check.
# --------------------------------------------------------------------------------------

def basic_u_reference(x, params, conv_dtype=jnp.float32):
    def conv(h, w, b):
        y = jax.lax.conv_general_dilated(
            h.astype(conv_dtype), w.astype(conv_dtype), (1, 1), "SAME",
            dimension_numbers=("NHWC", "HWIO", "NHWC"),
            preferred_element_type=jnp.float32)
        return y + b.reshape(1, 1, 1, -1)

    h = x
    for p in params:
        t = jax.nn.relu(conv(h, p["cw1"], p["cb1"]))
        t = conv(t, p["cw2"], p["cb2"])
        pooled = jnp.mean(t, axis=(1, 2))                           # (N, C)
        a = jax.nn.relu(pooled @ p["aw1"] + p["ab1"].reshape(1, -1))
        a = jax.nn.sigmoid(a @ p["aw2"] + p["ab2"])
        h = h + t * a[:, None, None, :]
    return x + h


# --------------------------------------------------------------------------------------
# Deterministic parameter init + driver
# --------------------------------------------------------------------------------------

def init_params(key, num_blocks=6, num_feat=64, squeeze_factor=16, dtype=jnp.float32):
    cr = num_feat // squeeze_factor
    params = []
    for i in range(num_blocks):
        ks = jax.random.split(jax.random.fold_in(key, i), 8)
        params.append(dict(
            cw1=0.05 * jax.random.normal(ks[0], (3, 3, num_feat, num_feat), dtype),
            cb1=0.05 * jax.random.normal(ks[1], (1, num_feat), dtype),
            cw2=0.05 * jax.random.normal(ks[2], (3, 3, num_feat, num_feat), dtype),
            cb2=0.05 * jax.random.normal(ks[3], (1, num_feat), dtype),
            aw1=0.05 * jax.random.normal(ks[4], (num_feat, cr), dtype),
            ab1=0.05 * jax.random.normal(ks[5], (1, cr), dtype),
            aw2=0.05 * jax.random.normal(ks[6], (cr, num_feat), dtype),
            ab2=0.05 * jax.random.normal(ks[7], (1, num_feat), dtype),
        ))
    return params


if __name__ == "__main__":
    key = jax.random.PRNGKey(0)
    N, H, W, C = 2, 16, 16, 64          # NHWC (PyTorch NCHW equivalent: (2, 64, 16, 16))
    x = jax.random.normal(jax.random.fold_in(key, 100), (N, H, W, C), jnp.float32)
    params = init_params(key)

    fwd = jax.jit(basic_u_forward)
    out = jax.block_until_ready(fwd(x, params))

    assert out.shape == (N, H, W, C)
    assert bool(jnp.all(jnp.isfinite(out)))

    # Tight check vs. a reference that uses the same bf16 matmul operands (f32 accumulation).
    ref_bf16 = jax.block_until_ready(
        jax.jit(functools.partial(basic_u_reference, conv_dtype=jnp.bfloat16))(x, params))
    scale_b = float(jnp.max(jnp.abs(ref_bf16))) + 1e-6
    err_b = float(jnp.max(jnp.abs(out - ref_bf16))) / scale_b
    assert err_b < 1e-2, f"bf16-reference mismatch: rel err {err_b}"

    # Loose check vs. the full-f32 reference (bf16 MXU operands cost ~1% relative error).
    ref_f32 = jax.block_until_ready(jax.jit(basic_u_reference)(x, params))
    scale_f = float(jnp.max(jnp.abs(ref_f32))) + 1e-6
    err_f = float(jnp.max(jnp.abs(out - ref_f32))) / scale_f
    assert err_f < 5e-2, f"f32-reference mismatch: rel err {err_f}"

    print("KERNEL_OK")
</pallas_src>

<mosaic_0001>
module attributes {stable_mosaic.version = 11 : i64} {
  func.func @_basic_u_kernel(%arg0: i32, %arg1: memref<1x256x64xf32, #tpu.memory_space<vmem>>, %arg2: memref<18x192x64xbf16, #tpu.memory_space<vmem>>, %arg3: memref<6x1x64xf32, #tpu.memory_space<vmem>>, %arg4: memref<18x192x64xbf16, #tpu.memory_space<vmem>>, %arg5: memref<6x1x64xf32, #tpu.memory_space<vmem>>, %arg6: memref<6x4x64xf32, #tpu.memory_space<vmem>>, %arg7: memref<6x4x1xf32, #tpu.memory_space<vmem>>, %arg8: memref<6x4x64xf32, #tpu.memory_space<vmem>>, %arg9: memref<6x1x64xf32, #tpu.memory_space<vmem>>, %arg10: memref<1x256x64xf32, #tpu.memory_space<vmem>>, %arg11: memref<272x64xf32, #tpu.memory_space<vmem>>, %arg12: memref<288x192xbf16, #tpu.memory_space<vmem>>) attributes {dimension_semantics = [#tpu.dimension_semantics<parallel>], iteration_bounds = array<i64: 2>, scalar_prefetch = 0 : i64, scratch_operands = 2 : i64, tpu.core_type = #tpu.core_type<tc>, window_params = [{transform_indices = @transform_0, window_bounds = array<i64: 1, 256, 64>}, {pipeline_mode = #tpu.pipeline_mode<synchronous>, transform_indices = @transform_1, window_bounds = array<i64: 18, 192, 64>}, {pipeline_mode = #tpu.pipeline_mode<synchronous>, transform_indices = @transform_2, window_bounds = array<i64: 6, 1, 64>}, {pipeline_mode = #tpu.pipeline_mode<synchronous>, transform_indices = @transform_3, window_bounds = array<i64: 18, 192, 64>}, {pipeline_mode = #tpu.pipeline_mode<synchronous>, transform_indices = @transform_4, window_bounds = array<i64: 6, 1, 64>}, {pipeline_mode = #tpu.pipeline_mode<synchronous>, transform_indices = @transform_5, window_bounds = array<i64: 6, 4, 64>}, {pipeline_mode = #tpu.pipeline_mode<synchronous>, transform_indices = @transform_6, window_bounds = array<i64: 6, 4, 1>}, {pipeline_mode = #tpu.pipeline_mode<synchronous>, transform_indices = @transform_7, window_bounds = array<i64: 6, 4, 64>}, {pipeline_mode = #tpu.pipeline_mode<synchronous>, transform_indices = @transform_8, window_bounds = array<i64: 6, 1, 64>}, {transform_indices = @transform_9, window_bounds = array<i64: 1, 256, 64>}]} {
    %cst = arith.constant 0.000000e+00 : f32
    %0 = vector.broadcast %cst : f32 to vector<8x64xf32>
    %c0 = arith.constant 0 : index
    %c0_0 = arith.constant 0 : index
    %1 = vector.load %arg11[%c0, %c0_0] : memref<272x64xf32, #tpu.memory_space<vmem>>, vector<8x64xf32>
    tpu.vector_store %arg11[%c0, %c0_0], %0 {strides = array<i32>} : memref<272x64xf32, #tpu.memory_space<vmem>>, vector<8x64xf32>,
    %cst_1 = arith.constant 0.000000e+00 : f32
    %2 = vector.broadcast %cst_1 : f32 to vector<8x64xf32>
    %c264 = arith.constant 264 : index
    %c0_2 = arith.constant 0 : index
    %3 = vector.load %arg11[%c264, %c0_2] : memref<272x64xf32, #tpu.memory_space<vmem>>, vector<8x64xf32>
    tpu.vector_store %arg11[%c264, %c0_2], %2 {strides = array<i32>} : memref<272x64xf32, #tpu.memory_space<vmem>>, vector<8x64xf32>,
    %cst_3 = arith.constant 0.000000e+00 : bf16
    %4 = vector.broadcast %cst_3 : bf16 to vector<16x192xbf16>
    %c0_4 = arith.constant 0 : index
    %c0_5 = arith.constant 0 : index
    %5 = vector.load %arg12[%c0_4, %c0_5] : memref<288x192xbf16, #tpu.memory_space<vmem>>, vector<16x192xbf16>
    tpu.vector_store %arg12[%c0_4, %c0_5], %4 {strides = array<i32>} : memref<288x192xbf16, #tpu.memory_space<vmem>>, vector<16x192xbf16>,
    %cst_6 = arith.constant 0.000000e+00 : bf16
    %6 = vector.broadcast %cst_6 : bf16 to vector<16x192xbf16>
    %c272 = arith.constant 272 : index
    %c0_7 = arith.constant 0 : index
    %7 = vector.load %arg12[%c272, %c0_7] : memref<288x192xbf16, #tpu.memory_space<vmem>>, vector<16x192xbf16>
    tpu.vector_store %arg12[%c272, %c0_7], %6 {strides = array<i32>} : memref<288x192xbf16, #tpu.memory_space<vmem>>, vector<16x192xbf16>,
    %c0_8 = arith.constant 0 : index
    %c0_9 = arith.constant 0 : index
    %c0_10 = arith.constant 0 : index
    %8 = vector.load %arg1[%c0_8, %c0_9, %c0_10] : memref<1x256x64xf32, #tpu.memory_space<vmem>>, vector<1x256x64xf32>
    %9 = vector.shape_cast %8 : vector<1x256x64xf32> to vector<256x64xf32>
    %c0_i32 = arith.constant 0 : i32
    %c6_i32 = arith.constant 6 : i32
    %10 = arith.addi %c0_i32, %c6_i32 : i32
    %c1_i32 = arith.constant 1 : i32
    %11 = scf.for %arg13 = %c0_i32 to %10 step %c1_i32 iter_args(%arg14 = %9) -> (vector<256x64xf32>)  : i32 {
      %c8 = arith.constant 8 : index
      %c0_18 = arith.constant 0 : index
      %18 = vector.load %arg11[%c8, %c0_18] : memref<272x64xf32, #tpu.memory_space<vmem>>, vector<256x64xf32>
      tpu.vector_store %arg11[%c8, %c0_18], %arg14 {strides = array<i32>} : memref<272x64xf32, #tpu.memory_space<vmem>>, vector<256x64xf32>,
      %19 = tpu.iota {dimensions = array<i32: 0>} : vector<256x64xi32>
      %c16_i32 = arith.constant 16 : i32
      %c0_i32_19 = arith.constant 0 : i32
      %20 = arith.cmpi eq, %c16_i32, %c0_i32_19 : i32
      %c1_i32_20 = arith.constant 1 : i32
      %21 = arith.select %20, %c1_i32_20, %c16_i32 : i32
      %22 = vector.broadcast %21 : i32 to vector<256x64xi32>
      %23 = arith.remsi %19, %22 : vector<256x64xi32>
      %c0_i32_21 = arith.constant 0 : i32
      %24 = vector.broadcast %c0_i32_21 : i32 to vector<256x64xi32>
      %25 = arith.cmpi ne, %23, %24 : vector<256x64xi32>
      %c0_i32_22 = arith.constant 0 : i32
      %26 = vector.broadcast %c0_i32_22 : i32 to vector<256x64xi32>
      %27 = arith.cmpi slt, %23, %26 : vector<256x64xi32>
      %c0_i32_23 = arith.constant 0 : i32
      %28 = arith.cmpi slt, %21, %c0_i32_23 : i32
      %29 = vector.broadcast %28 : i1 to vector<256x64xi1>
      %30 = vector.broadcast %29 : vector<256x64xi1> to vector<256x64xi1>
      %31 = arith.xori %27, %30 : vector<256x64xi1>
      %32 = arith.andi %31, %25 : vector<256x64xi1>
      %33 = vector.broadcast %21 : i32 to vector<256x64xi32>
      %34 = arith.addi %23, %33 : vector<256x64xi32>
      %35 = arith.select %32, %34, %23 : vector<256x64xi1>, vector<256x64xi32>
      %36 = arith.truncf %arg14 : vector<256x64xf32> to vector<256x64xbf16>
      %c0_i32_24 = arith.constant 0 : i32
      %37 = vector.broadcast %c0_i32_24 : i32 to vector<256x64xi32>
      %38 = arith.cmpi ne, %35, %37 : vector<256x64xi32>
      %c7 = arith.constant 7 : index
      %c0_25 = arith.constant 0 : index
      %39 = vector.load %arg11[%c7, %c0_25] : memref<272x64xf32, #tpu.memory_space<vmem>>, vector<256x64xf32>
      %cst_26 = arith.constant 0.000000e+00 : f32
      %40 = vector.broadcast %cst_26 : f32 to vector<256x64xf32>
      %41 = arith.select %38, %39, %40 : vector<256x64xi1>, vector<256x64xf32>
      %42 = arith.truncf %41 : vector<256x64xf32> to vector<256x64xbf16>
      %c15_i32 = arith.constant 15 : i32
      %43 = vector.broadcast %c15_i32 : i32 to vector<256x64xi32>
      %44 = arith.cmpi ne, %35, %43 : vector<256x64xi32>
      %c9 = arith.constant 9 : index
      %c0_27 = arith.constant 0 : index
      %45 = vector.load %arg11[%c9, %c0_27] : memref<272x64xf32, #tpu.memory_space<vmem>>, vector<256x64xf32>
      %cst_28 = arith.constant 0.000000e+00 : f32
      %46 = vector.broadcast %cst_28 : f32 to vector<256x64xf32>
      %47 = arith.select %44, %45, %46 : vector<256x64xi1>, vector<256x64xf32>
      %48 = arith.truncf %47 : vector<256x64xf32> to vector<256x64xbf16>
      %49 = tpu.concatenate %42, %36 in 1 : vector<256x64xbf16>, vector<256x64xbf16> -> vector<256x128xbf16>
      %c16 = arith.constant 16 : index
      %c0_29 = arith.constant 0 : index
      %50 = vector.load %arg12[%c16, %c0_29] : memref<288x192xbf16, #tpu.memory_space<vmem>>, vector<256x128xbf16>
      tpu.vector_store %arg12[%c16, %c0_29], %49 {strides = array<i32>} : memref<288x192xbf16, #tpu.memory_space<vmem>>, vector<256x128xbf16>,
      %c16_30 = arith.constant 16 : index
      %c128 = arith.constant 128 : index
      %51 = vector.load %arg12[%c16_30, %c128] : memref<288x192xbf16, #tpu.memory_space<vmem>>, vector<256x64xbf16>
      tpu.vector_store %arg12[%c16_30, %c128], %48 {strides = array<i32>} : memref<288x192xbf16, #tpu.memory_space<vmem>>, vector<256x64xbf16>,
      %c0_31 = arith.constant 0 : index
      %c0_32 = arith.constant 0 : index
      %52 = vector.load %arg12[%c0_31, %c0_32] : memref<288x192xbf16, #tpu.memory_space<vmem>>, vector<256x192xbf16>
      %c3_i32 = arith.constant 3 : i32
      %53 = arith.muli %arg13, %c3_i32 : i32
      %c0_i32_33 = arith.constant 0 : i32
      %54 = arith.addi %53, %c0_i32_33 : i32
      %55 = arith.index_cast %54 : i32 to index
      %c0_34 = arith.constant 0 : index
      %c0_35 = arith.constant 0 : index
      %56 = vector.load %arg2[%55, %c0_34, %c0_35] : memref<18x192x64xbf16, #tpu.memory_space<vmem>>, vector<1x192x64xbf16>
      %57 = vector.shape_cast %56 : vector<1x192x64xbf16> to vector<192x64xbf16>
      %cst_36 = arith.constant dense<0.000000e+00> : vector<256x64xf32>
      %58 = tpu.matmul %52, %57, %cst_36 {dimension_numbers = #tpu.dot_dimension_numbers<[1], [0], [0], [1], [0, 0, 1, 1], [], []>} : vector<256x192xbf16>, vector<192x64xbf16>, vector<256x64xf32> -> vector<256x64xf32>
      %c16_37 = arith.constant 16 : index
      %c0_38 = arith.constant 0 : index
      %59 = vector.load %arg12[%c16_37, %c0_38] : memref<288x192xbf16, #tpu.memory_space<vmem>>, vector<256x192xbf16>
      %c3_i32_39 = arith.constant 3 : i32
      %60 = arith.muli %arg13, %c3_i32_39 : i32
      %c1_i32_40 = arith.constant 1 : i32
      %61 = arith.addi %60, %c1_i32_40 : i32
      %62 = arith.index_cast %61 : i32 to index
      %c0_41 = arith.constant 0 : index
      %c0_42 = arith.constant 0 : index
      %63 = vector.load %arg2[%62, %c0_41, %c0_42] : memref<18x192x64xbf16, #tpu.memory_space<vmem>>, vector<1x192x64xbf16>
      %64 = vector.shape_cast %63 : vector<1x192x64xbf16> to vector<192x64xbf16>
      %cst_43 = arith.constant dense<0.000000e+00> : vector<256x64xf32>
      %65 = tpu.matmul %59, %64, %cst_43 {dimension_numbers = #tpu.dot_dimension_numbers<[1], [0], [0], [1], [0, 0, 1, 1], [], []>} : vector<256x192xbf16>, vector<192x64xbf16>, vector<256x64xf32> -> vector<256x64xf32>
      %66 = arith.addf %58, %65 : vector<256x64xf32>
      %c32 = arith.constant 32 : index
      %c0_44 = arith.constant 0 : index
      %67 = vector.load %arg12[%c32, %c0_44] : memref<288x192xbf16, #tpu.memory_space<vmem>>, vector<256x192xbf16>
      %c3_i32_45 = arith.constant 3 : i32
      %68 = arith.muli %arg13, %c3_i32_45 : i32
      %c2_i32 = arith.constant 2 : i32
      %69 = arith.addi %68, %c2_i32 : i32
      %70 = arith.index_cast %69 : i32 to index
      %c0_46 = arith.constant 0 : index
      %c0_47 = arith.constant 0 : index
      %71 = vector.load %arg2[%70, %c0_46, %c0_47] : memref<18x192x64xbf16, #tpu.memory_space<vmem>>, vector<1x192x64xbf16>
      %72 = vector.shape_cast %71 : vector<1x192x64xbf16> to vector<192x64xbf16>
      %cst_48 = arith.constant dense<0.000000e+00> : vector<256x64xf32>
      %73 = tpu.matmul %67, %72, %cst_48 {dimension_numbers = #tpu.dot_dimension_numbers<[1], [0], [0], [1], [0, 0, 1, 1], [], []>} : vector<256x192xbf16>, vector<192x64xbf16>, vector<256x64xf32> -> vector<256x64xf32>
      %74 = arith.addf %66, %73 : vector<256x64xf32>
      %75 = arith.index_cast %arg13 : i32 to index
      %c0_49 = arith.constant 0 : index
      %c0_50 = arith.constant 0 : index
      %76 = vector.load %arg3[%75, %c0_49, %c0_50] : memref<6x1x64xf32, #tpu.memory_space<vmem>>, vector<1x1x64xf32>
      %77 = vector.shape_cast %76 : vector<1x1x64xf32> to vector<1x64xf32>
      %78 = vector.broadcast %77 : vector<1x64xf32> to vector<256x64xf32>
      %79 = arith.addf %74, %78 : vector<256x64xf32>
      %cst_51 = arith.constant 0.000000e+00 : f32
      %80 = vector.broadcast %cst_51 : f32 to vector<256x64xf32>
      %81 = arith.maximumf %79, %80 : vector<256x64xf32>
      %c8_52 = arith.constant 8 : index
      %c0_53 = arith.constant 0 : index
      %82 = vector.load %arg11[%c8_52, %c0_53] : memref<272x64xf32, #tpu.memory_space<vmem>>, vector<256x64xf32>
      tpu.vector_store %arg11[%c8_52, %c0_53], %81 {strides = array<i32>} : memref<272x64xf32, #tpu.memory_space<vmem>>, vector<256x64xf32>,
      %83 = tpu.iota {dimensions = array<i32: 0>} : vector<256x64xi32>
      %c16_i32_54 = arith.constant 16 : i32
      %c0_i32_55 = arith.constant 0 : i32
      %84 = arith.cmpi eq, %c16_i32_54, %c0_i32_55 : i32
      %c1_i32_56 = arith.constant 1 : i32
      %85 = arith.select %84, %c1_i32_56, %c16_i32_54 : i32
      %86 = vector.broadcast %85 : i32 to vector<256x64xi32>
      %87 = arith.remsi %83, %86 : vector<256x64xi32>
      %c0_i32_57 = arith.constant 0 : i32
      %88 = vector.broadcast %c0_i32_57 : i32 to vector<256x64xi32>
      %89 = arith.cmpi ne, %87, %88 : vector<256x64xi32>
      %c0_i32_58 = arith.constant 0 : i32
      %90 = vector.broadcast %c0_i32_58 : i32 to vector<256x64xi32>
      %91 = arith.cmpi slt, %87, %90 : vector<256x64xi32>
      %c0_i32_59 = arith.constant 0 : i32
      %92 = arith.cmpi slt, %85, %c0_i32_59 : i32
      %93 = vector.broadcast %92 : i1 to vector<256x64xi1>
      %94 = vector.broadcast %93 : vector<256x64xi1> to vector<256x64xi1>
      %95 = arith.xori %91, %94 : vector<256x64xi1>
      %96 = arith.andi %95, %89 : vector<256x64xi1>
      %97 = vector.broadcast %85 : i32 to vector<256x64xi32>
      %98 = arith.addi %87, %97 : vector<256x64xi32>
      %99 = arith.select %96, %98, %87 : vector<256x64xi1>, vector<256x64xi32>
      %100 = arith.truncf %81 : vector<256x64xf32> to vector<256x64xbf16>
      %c0_i32_60 = arith.constant 0 : i32
      %101 = vector.broadcast %c0_i32_60 : i32 to vector<256x64xi32>
      %102 = arith.cmpi ne, %99, %101 : vector<256x64xi32>
      %c7_61 = arith.constant 7 : index
      %c0_62 = arith.constant 0 : index
      %103 = vector.load %arg11[%c7_61, %c0_62] : memref<272x64xf32, #tpu.memory_space<vmem>>, vector<256x64xf32>
      %cst_63 = arith.constant 0.000000e+00 : f32
      %104 = vector.broadcast %cst_63 : f32 to vector<256x64xf32>
      %105 = arith.select %102, %103, %104 : vector<256x64xi1>, vector<256x64xf32>
      %106 = arith.truncf %105 : vector<256x64xf32> to vector<256x64xbf16>
      %c15_i32_64 = arith.constant 15 : i32
      %107 = vector.broadcast %c15_i32_64 : i32 to vector<256x64xi32>
      %108 = arith.cmpi ne, %99, %107 : vector<256x64xi32>
      %c9_65 = arith.constant 9 : index
      %c0_66 = arith.constant 0 : index
      %109 = vector.load %arg11[%c9_65, %c0_66] : memref<272x64xf32, #tpu.memory_space<vmem>>, vector<256x64xf32>
      %cst_67 = arith.constant 0.000000e+00 : f32
      %110 = vector.broadcast %cst_67 : f32 to vector<256x64xf32>
      %111 = arith.select %108, %109, %110 : vector<256x64xi1>, vector<256x64xf32>
      %112 = arith.truncf %111 : vector<256x64xf32> to vector<256x64xbf16>
      %113 = tpu.concatenate %106, %100 in 1 : vector<256x64xbf16>, vector<256x64xbf16> -> vector<256x128xbf16>
      %c16_68 = arith.constant 16 : index
      %c0_69 = arith.constant 0 : index
      %114 = vector.load %arg12[%c16_68, %c0_69] : memref<288x192xbf16, #tpu.memory_space<vmem>>, vector<256x128xbf16>
      tpu.vector_store %arg12[%c16_68, %c0_69], %113 {strides = array<i32>} : memref<288x192xbf16, #tpu.memory_space<vmem>>, vector<256x128xbf16>,
      %c16_70 = arith.constant 16 : index
      %c128_71 = arith.constant 128 : index
      %115 = vector.load %arg12[%c16_70, %c128_71] : memref<288x192xbf16, #tpu.memory_space<vmem>>, vector<256x64xbf16>
      tpu.vector_store %arg12[%c16_70, %c128_71], %112 {strides = array<i32>} : memref<288x192xbf16, #tpu.memory_space<vmem>>, vector<256x64xbf16>,
      %c0_72 = arith.constant 0 : index
      %c0_73 = arith.constant 0 : index
      %116 = vector.load %arg12[%c0_72, %c0_73] : memref<288x192xbf16, #tpu.memory_space<vmem>>, vector<256x192xbf16>
      %c3_i32_74 = arith.constant 3 : i32
      %117 = arith.muli %arg13, %c3_i32_74 : i32
      %c0_i32_75 = arith.constant 0 : i32
      %118 = arith.addi %117, %c0_i32_75 : i32
      %119 = arith.index_cast %118 : i32 to index
      %c0_76 = arith.constant 0 : index
      %c0_77 = arith.constant 0 : index
      %120 = vector.load %arg4[%119, %c0_76, %c0_77] : memref<18x192x64xbf16, #tpu.memory_space<vmem>>, vector<1x192x64xbf16>
      %121 = vector.shape_cast %120 : vector<1x192x64xbf16> to vector<192x64xbf16>
      %cst_78 = arith.constant dense<0.000000e+00> : vector<256x64xf32>
      %122 = tpu.matmul %116, %121, %cst_78 {dimension_numbers = #tpu.dot_dimension_numbers<[1], [0], [0], [1], [0, 0, 1, 1], [], []>} : vector<256x192xbf16>, vector<192x64xbf16>, vector<256x64xf32> -> vector<256x64xf32>
      %c16_79 = arith.constant 16 : index
      %c0_80 = arith.constant 0 : index
      %123 = vector.load %arg12[%c16_79, %c0_80] : memref<288x192xbf16, #tpu.memory_space<vmem>>, vector<256x192xbf16>
      %c3_i32_81 = arith.constant 3 : i32
      %124 = arith.muli %arg13, %c3_i32_81 : i32
      %c1_i32_82 = arith.constant 1 : i32
      %125 = arith.addi %124, %c1_i32_82 : i32
      %126 = arith.index_cast %125 : i32 to index
      %c0_83 = arith.constant 0 : index
      %c0_84 = arith.constant 0 : index
      %127 = vector.load %arg4[%126, %c0_83, %c0_84] : memref<18x192x64xbf16, #tpu.memory_space<vmem>>, vector<1x192x64xbf16>
      %128 = vector.shape_cast %127 : vector<1x192x64xbf16> to vector<192x64xbf16>
      %cst_85 = arith.constant dense<0.000000e+00> : vector<256x64xf32>
      %129 = tpu.matmul %123, %128, %cst_85 {dimension_numbers = #tpu.dot_dimension_numbers<[1], [0], [0], [1], [0, 0, 1, 1], [], []>} : vector<256x192xbf16>, vector<192x64xbf16>, vector<256x64xf32> -> vector<256x64xf32>
      %130 = arith.addf %122, %129 : vector<256x64xf32>
      %c32_86 = arith.constant 32 : index
      %c0_87 = arith.constant 0 : index
      %131 = vector.load %arg12[%c32_86, %c0_87] : memref<288x192xbf16, #tpu.memory_space<vmem>>, vector<256x192xbf16>
      %c3_i32_88 = arith.constant 3 : i32
      %132 = arith.muli %arg13, %c3_i32_88 : i32
      %c2_i32_89 = arith.constant 2 : i32
      %133 = arith.addi %132, %c2_i32_89 : i32
      %134 = arith.index_cast %133 : i32 to index
      %c0_90 = arith.constant 0 : index
      %c0_91 = arith.constant 0 : index
      %135 = vector.load %arg4[%134, %c0_90, %c0_91] : memref<18x192x64xbf16, #tpu.memory_space<vmem>>, vector<1x192x64xbf16>
      %136 = vector.shape_cast %135 : vector<1x192x64xbf16> to vector<192x64xbf16>
      %cst_92 = arith.constant dense<0.000000e+00> : vector<256x64xf32>
      %137 = tpu.matmul %131, %136, %cst_92 {dimension_numbers = #tpu.dot_dimension_numbers<[1], [0], [0], [1], [0, 0, 1, 1], [], []>} : vector<256x192xbf16>, vector<192x64xbf16>, vector<256x64xf32> -> vector<256x64xf32>
      %138 = arith.addf %130, %137 : vector<256x64xf32>
      %139 = arith.index_cast %arg13 : i32 to index
      %c0_93 = arith.constant 0 : index
      %c0_94 = arith.constant 0 : index
      %140 = vector.load %arg5[%139, %c0_93, %c0_94] : memref<6x1x64xf32, #tpu.memory_space<vmem>>, vector<1x1x64xf32>
      %141 = vector.shape_cast %140 : vector<1x1x64xf32> to vector<1x64xf32>
      %142 = vector.broadcast %141 : vector<1x64xf32> to vector<256x64xf32>
      %143 = arith.addf %138, %142 : vector<256x64xf32>
      %cst_95 = arith.constant dense<0.000000e+00> : vector<64xf32>
      %144 = vector.multi_reduction <add>, %143, %cst_95 [0] : vector<256x64xf32> to vector<64xf32>
      %145 = vector.shape_cast %144 : vector<64xf32> to vector<1x64xf32>
      %cst_96 = arith.constant 2.560000e+02 : f32
      %146 = vector.broadcast %cst_96 : f32 to vector<1x64xf32>
      %147 = arith.divf %145, %146 : vector<1x64xf32>
      %148 = arith.index_cast %arg13 : i32 to index
      %c0_97 = arith.constant 0 : index
      %c0_98 = arith.constant 0 : index
      %149 = vector.load %arg6[%148, %c0_97, %c0_98] : memref<6x4x64xf32, #tpu.memory_space<vmem>>, vector<1x4x64xf32>
      %150 = vector.shape_cast %149 : vector<1x4x64xf32> to vector<4x64xf32>
      %151 = vector.broadcast %147 : vector<1x64xf32> to vector<4x64xf32>
      %152 = arith.mulf %151, %150 : vector<4x64xf32>
      %cst_99 = arith.constant dense<0.000000e+00> : vector<4xf32>
      %153 = vector.multi_reduction <add>, %152, %cst_99 [1] : vector<4x64xf32> to vector<4xf32>
      %154 = vector.shape_cast %153 : vector<4xf32> to vector<4x1xf32>
      %155 = arith.index_cast %arg13 : i32 to index
      %c0_100 = arith.constant 0 : index
      %c0_101 = arith.constant 0 : index
      %156 = vector.load %arg7[%155, %c0_100, %c0_101] : memref<6x4x1xf32, #tpu.memory_space<vmem>>, vector<1x4x1xf32>
      %157 = vector.shape_cast %156 : vector<1x4x1xf32> to vector<4x1xf32>
      %158 = arith.addf %154, %157 : vector<4x1xf32>
      %cst_102 = arith.constant 0.000000e+00 : f32
      %159 = vector.broadcast %cst_102 : f32 to vector<4x1xf32>
      %160 = arith.maximumf %158, %159 : vector<4x1xf32>
      %161 = arith.index_cast %arg13 : i32 to index
      %c0_103 = arith.constant 0 : index
      %c0_104 = arith.constant 0 : index
      %162 = vector.load %arg8[%161, %c0_103, %c0_104] : memref<6x4x64xf32, #tpu.memory_space<vmem>>, vector<1x4x64xf32>
      %163 = vector.shape_cast %162 : vector<1x4x64xf32> to vector<4x64xf32>
      %164 = vector.broadcast %160 : vector<4x1xf32> to vector<4x64xf32>
      %165 = arith.mulf %164, %163 : vector<4x64xf32>
      %cst_105 = arith.constant dense<0.000000e+00> : vector<64xf32>
      %166 = vector.multi_reduction <add>, %165, %cst_105 [0] : vector<4x64xf32> to vector<64xf32>
      %167 = vector.shape_cast %166 : vector<64xf32> to vector<1x64xf32>
      %168 = arith.index_cast %arg13 : i32 to index
      %c0_106 = arith.constant 0 : index
      %c0_107 = arith.constant 0 : index
      %169 = vector.load %arg9[%168, %c0_106, %c0_107] : memref<6x1x64xf32, #tpu.memory_space<vmem>>, vector<1x1x64xf32>
      %170 = vector.shape_cast %169 : vector<1x1x64xf32> to vector<1x64xf32>
      %171 = arith.addf %167, %170 : vector<1x64xf32>
      %172 = arith.negf %171 : vector<1x64xf32>
      %173 = math.exp %172 : vector<1x64xf32>
      %cst_108 = arith.constant 1.000000e+00 : f32
      %174 = vector.broadcast %cst_108 : f32 to vector<1x64xf32>
      %175 = arith.addf %174, %173 : vector<1x64xf32>
      %176 = arith.divf %174, %175 : vector<1x64xf32>
      %177 = vector.broadcast %176 : vector<1x64xf32> to vector<256x64xf32>
      %178 = arith.mulf %143, %177 : vector<256x64xf32>
      %179 = arith.addf %arg14, %178 : vector<256x64xf32>
      scf.yield %179 : vector<256x64xf32>
    }
    %c6_i32_11 = arith.constant 6 : i32
    %c0_12 = arith.constant 0 : index
    %c0_13 = arith.constant 0 : index
    %c0_14 = arith.constant 0 : index
    %12 = vector.load %arg1[%c0_12, %c0_13, %c0_14] : memref<1x256x64xf32, #tpu.memory_space<vmem>>, vector<1x256x64xf32>
    %13 = vector.shape_cast %12 : vector<1x256x64xf32> to vector<256x64xf32>
    %14 = arith.addf %13, %11 : vector<256x64xf32>
    %c0_15 = arith.constant 0 : index
    %c0_16 = arith.constant 0 : index
    %c0_17 = arith.constant 0 : index
    %15 = vector.load %arg10[%c0_15, %c0_16, %c0_17] : memref<1x256x64xf32, #tpu.memory_space<vmem>>, vector<1x256x64xf32>
    %16 = vector.shape_cast %15 : vector<1x256x64xf32> to vector<256x64xf32>
    %17 = vector.shape_cast %14 : vector<256x64xf32> to vector<1x256x64xf32>
    tpu.vector_store %arg10[%c0_15, %c0_16, %c0_17], %17 {strides = array<i32>} : memref<1x256x64xf32, #tpu.memory_space<vmem>>, vector<1x256x64xf32>,
    return
  }
  func.func @transform_0(%arg0: i32) -> (i32, i32, i32) {
    %c0_i32 = arith.constant 0 : i32
    %c0_i32_0 = arith.constant 0 : i32
    %c0_i32_1 = arith.constant 0 : i32
    return %arg0, %c0_i32, %c0_i32_0 : i32, i32, i32
  }
  func.func @transform_1(%arg0: i32) -> (i32, i32, i32) {
    %c0_i32 = arith.constant 0 : i32
    %c0_i32_0 = arith.constant 0 : i32
    %c0_i32_1 = arith.constant 0 : i32
    %c0_i32_2 = arith.constant 0 : i32
    return %c0_i32, %c0_i32_0, %c0_i32_1 : i32, i32, i32
  }
  func.func @transform_2(%arg0: i32) -> (i32, i32, i32) {
    %c0_i32 = arith.constant 0 : i32
    %c0_i32_0 = arith.constant 0 : i32
    %c0_i32_1 = arith.constant 0 : i32
    %c0_i32_2 = arith.constant 0 : i32
    return %c0_i32, %c0_i32_0, %c0_i32_1 : i32, i32, i32
  }
  func.func @transform_3(%arg0: i32) -> (i32, i32, i32) {
    %c0_i32 = arith.constant 0 : i32
    %c0_i32_0 = arith.constant 0 : i32
    %c0_i32_1 = arith.constant 0 : i32
    %c0_i32_2 = arith.constant 0 : i32
    return %c0_i32, %c0_i32_0, %c0_i32_1 : i32, i32, i32
  }
  func.func @transform_4(%arg0: i32) -> (i32, i32, i32) {
    %c0_i32 = arith.constant 0 : i32
    %c0_i32_0 = arith.constant 0 : i32
    %c0_i32_1 = arith.constant 0 : i32
    %c0_i32_2 = arith.constant 0 : i32
    return %c0_i32, %c0_i32_0, %c0_i32_1 : i32, i32, i32
  }
  func.func @transform_5(%arg0: i32) -> (i32, i32, i32) {
    %c0_i32 = arith.constant 0 : i32
    %c0_i32_0 = arith.constant 0 : i32
    %c0_i32_1 = arith.constant 0 : i32
    %c0_i32_2 = arith.constant 0 : i32
    return %c0_i32, %c0_i32_0, %c0_i32_1 : i32, i32, i32
  }
  func.func @transform_6(%arg0: i32) -> (i32, i32, i32) {
    %c0_i32 = arith.constant 0 : i32
    %c0_i32_0 = arith.constant 0 : i32
    %c0_i32_1 = arith.constant 0 : i32
    %c0_i32_2 = arith.constant 0 : i32
    return %c0_i32, %c0_i32_0, %c0_i32_1 : i32, i32, i32
  }
  func.func @transform_7(%arg0: i32) -> (i32, i32, i32) {
    %c0_i32 = arith.constant 0 : i32
    %c0_i32_0 = arith.constant 0 : i32
    %c0_i32_1 = arith.constant 0 : i32
    %c0_i32_2 = arith.constant 0 : i32
    return %c0_i32, %c0_i32_0, %c0_i32_1 : i32, i32, i32
  }
  func.func @transform_8(%arg0: i32) -> (i32, i32, i32) {
    %c0_i32 = arith.constant 0 : i32
    %c0_i32_0 = arith.constant 0 : i32
    %c0_i32_1 = arith.constant 0 : i32
    %c0_i32_2 = arith.constant 0 : i32
    return %c0_i32, %c0_i32_0, %c0_i32_1 : i32, i32, i32
  }
  func.func @transform_9(%arg0: i32) -> (i32, i32, i32) {
    %c0_i32 = arith.constant 0 : i32
    %c0_i32_0 = arith.constant 0 : i32
    %c0_i32_1 = arith.constant 0 : i32
    return %arg0, %c0_i32, %c0_i32_0 : i32, i32, i32
  }
}

</mosaic_0001>

<llo_original>
// kernel: basic_u_forward.1
$region0: #{basic_u_forward.1}
  #allocation0 [shape = 'u32[]', space=smem, size = 0x4, offset = 0x4, fixed_abs, tag = 'smem constant byte address 0x4 - core index']
  #allocation1 [shape = 'u32[144,128]{1,0:T(1,128)}', space=vmem, size = 0x12000, scoped, tag = 'internal scratch']
  #allocation2 [shape = 'f32[272,64]{1,0:T(8,128)}', space=vmem, size = 0x22000, scoped, tag = 'scratch operand']
  #allocation3 [shape = 'bf16[288,192]{1,0:T(8,128)(2,1)}', space=vmem, size = 0x24000, scoped, tag = 'scratch operand']
  %s0 = inlined_call_operand.vmem [shape: f32[2,256,64], index: 0, kind: input, shape index: {}]
  %s1 = inlined_call_operand.vmem [shape: bf16[18,192,64], index: 1, kind: input, shape index: {}]
  %s2 = inlined_call_operand.vmem [shape: f32[6,1,64], index: 2, kind: input, shape index: {}]
  %s3 = inlined_call_operand.vmem [shape: bf16[18,192,64], index: 3, kind: input, shape index: {}]
  %s4 = inlined_call_operand.vmem [shape: f32[6,1,64], index: 4, kind: input, shape index: {}]
  %s5 = inlined_call_operand.vmem [shape: f32[6,4,64], index: 5, kind: input, shape index: {}]
  %s6 = inlined_call_operand.vmem [shape: f32[6,4,1], index: 6, kind: input, shape index: {}]
  %s7 = inlined_call_operand.vmem [shape: f32[6,4,64], index: 7, kind: input, shape index: {}]
  %s8 = inlined_call_operand.vmem [shape: f32[6,1,64], index: 8, kind: input, shape index: {}]
  %s9 = inlined_call_operand.hbm [shape: f32[2,256,64], index: 9, kind: output, shape index: {}]
  %s10 = sld [smem:[#allocation0]]
  $region76: #{basic_u_forward.1} parent=0
    _
  %s12 = ssub.s32 1, %s10
  %s13 = scalar_select 0, %s12, %s10
  $region1: #{basic_u_forward.1} parent=0
    #allocation4 [shape = 'u8[262144]{0}', space=vmem, size = 0x40000, scoped, tag = 'output window, operand 0']
    #allocation5 [shape = 's32[2]{0}', space=sflag, size = 0x8, scoped, tag = 'scoped memory for basic_u_forward.1']
    %14 = vsyncpa [#allocation5], 0
    %s15 = scalar_lea.sflag [#allocation5], 1
    %16 = vsyncpa %s15, 0
    loop: start=0, step=1, limit=4
    $region2: #{basic_u_forward.1} parent=1 // loop_pre_header
      _
    $region3: #{basic_u_forward.1} parent=1 // loop_header
      %s18 = sphi 0, %s22
      %p19 = scmp.ge.s32.totalorder %s18, 4
      %s28 = sphi 0, %s30
      %s31 = sphi 0, %s28
      %s32 = sphi 0, %s31
      %s48 = sphi 0, %s32
      %s52 = sphi 0, %s52
      %s54 = sphi 0, %s52
      %s55 = sphi 0, %s54
      %s69 = sphi 0, %s55
      %s73 = sphi 0, %s73
      %s75 = sphi 0, %s73
      %s76 = sphi 0, %s75
      %s90 = sphi 0, %s76
      %s94 = sphi 0, %s94
      %s96 = sphi 0, %s94
      %s97 = sphi 0, %s96
      %s111 = sphi 0, %s97
      %s115 = sphi 0, %s115
      %s117 = sphi 0, %s115
      %s118 = sphi 0, %s117
      %s132 = sphi 0, %s118
      %s136 = sphi 0, %s136
      %s138 = sphi 0, %s136
      %s139 = sphi 0, %s138
      %s153 = sphi 0, %s139
      %s157 = sphi 0, %s157
      %s159 = sphi 0, %s157
      %s160 = sphi 0, %s159
      %s174 = sphi 0, %s160
      %s178 = sphi 0, %s178
      %s180 = sphi 0, %s178
      %s181 = sphi 0, %s180
      %s195 = sphi 0, %s181
      %s199 = sphi 0, %s199
      %s201 = sphi 0, %s199
      %s202 = sphi 0, %s201
      %s216 = sphi 0, %s202
      %s222 = sphi 0, %s224
      %s225 = sphi 0, %s222
      %s226 = sphi 0, %s225
      %s242 = sphi 0, %s226
    $region4: #{basic_u_forward.1} parent=1 // loop_header_branch
      %21 = sbr.rel (%p19) target = $region8
    $region5: #{basic_u_forward.1} parent=1 // loop_body
      %s23 = ssub.s32 %s18, 1
      %s24 = ssub.s32 %s18, 2
      %s25 = sadd.s32 %s18, 1
      %s26 = ssub.s32 %s18, %s25
      %p27 = scmp.eq.s32.totalorder %s26, 0
      %s29 = sadd.s32 %s28, 1
      %s30 = scalar_select %p27, %s28, %s29
      %p33 = pneg %p27
      %p34 = scmp.eq.s32.totalorder %s18, 1
      %p35 = por %p33, %p34
      %p36 = scmp.ne.s32.totalorder %s28, %s31
      %p37 = scmp.eq.s32.totalorder %s18, 0
      %p38 = por %p36, %p37
      %p39 = scmp.ne.s32.totalorder %s28, %s31
      %p40 = scmp.eq.s32.totalorder %s23, 1
      %p41 = por %p39, %p40
      %p42 = scmp.ne.s32.totalorder %s31, %s32
      %p43 = scmp.eq.s32.totalorder %s23, 0
      %p44 = por %p42, %p43
      %p45 = scmp.ne.s32.totalorder %s31, %s32
      %p46 = scmp.eq.s32.totalorder %s24, 1
      %p47 = por %p45, %p46
      %p49 = scmp.ne.s32.totalorder %s32, %s48
      %p50 = scmp.eq.s32.totalorder %s24, 0
      %p51 = por %p49, %p50
      %s53 = sadd.s32 %s52, 1
      %p56 = scmp.eq.s32.totalorder %s18, 1
      %p57 = scmp.ne.s32.totalorder %s52, %s54
      %p58 = scmp.eq.s32.totalorder %s18, 0
      %p59 = por %p57, %p58
      %p60 = scmp.ne.s32.totalorder %s52, %s54
      %p61 = scmp.eq.s32.totalorder %s23, 1
      %p62 = por %p60, %p61
      %p63 = scmp.ne.s32.totalorder %s54, %s55
      %p64 = scmp.eq.s32.totalorder %s23, 0
      %p65 = por %p63, %p64
      %p66 = scmp.ne.s32.totalorder %s54, %s55
      %p67 = scmp.eq.s32.totalorder %s24, 1
      %p68 = por %p66, %p67
      %p70 = scmp.ne.s32.totalorder %s55, %s69
      %p71 = scmp.eq.s32.totalorder %s24, 0
      %p72 = por %p70, %p71
      %s74 = sadd.s32 %s73, 1
      %p77 = scmp.eq.s32.totalorder %s18, 1
      %p78 = scmp.ne.s32.totalorder %s73, %s75
      %p79 = scmp.eq.s32.totalorder %s18, 0
      %p80 = por %p78, %p79
      %p81 = scmp.ne.s32.totalorder %s73, %s75
      %p82 = scmp.eq.s32.totalorder %s23, 1
      %p83 = por %p81, %p82
      %p84 = scmp.ne.s32.totalorder %s75, %s76
      %p85 = scmp.eq.s32.totalorder %s23, 0
      %p86 = por %p84, %p85
      %p87 = scmp.ne.s32.totalorder %s75, %s76
      %p88 = scmp.eq.s32.totalorder %s24, 1
      %p89 = por %p87, %p88
      %p91 = scmp.ne.s32.totalorder %s76, %s90
      %p92 = scmp.eq.s32.totalorder %s24, 0
      %p93 = por %p91, %p92
      %s95 = sadd.s32 %s94, 1
      %p98 = scmp.eq.s32.totalorder %s18, 1
      %p99 = scmp.ne.s32.totalorder %s94, %s96
      %p100 = scmp.eq.s32.totalorder %s18, 0
      %p101 = por %p99, %p100
      %p102 = scmp.ne.s32.totalorder %s94, %s96
      %p103 = scmp.eq.s32.totalorder %s23, 1
      %p104 = por %p102, %p103
      %p105 = scmp.ne.s32.totalorder %s96, %s97
      %p106 = scmp.eq.s32.totalorder %s23, 0
      %p107 = por %p105, %p106
      %p108 = scmp.ne.s32.totalorder %s96, %s97
      %p109 = scmp.eq.s32.totalorder %s24, 1
      %p110 = por %p108, %p109
      %p112 = scmp.ne.s32.totalorder %s97, %s111
      %p113 = scmp.eq.s32.totalorder %s24, 0
      %p114 = por %p112, %p113
      %s116 = sadd.s32 %s115, 1
      %p119 = scmp.eq.s32.totalorder %s18, 1
      %p120 = scmp.ne.s32.totalorder %s115, %s117
      %p121 = scmp.eq.s32.totalorder %s18, 0
      %p122 = por %p120, %p121
      %p123 = scmp.ne.s32.totalorder %s115, %s117
      %p124 = scmp.eq.s32.totalorder %s23, 1
      %p125 = por %p123, %p124
      %p126 = scmp.ne.s32.totalorder %s117, %s118
      %p127 = scmp.eq.s32.totalorder %s23, 0
      %p128 = por %p126, %p127
      %p129 = scmp.ne.s32.totalorder %s117, %s118
      %p130 = scmp.eq.s32.totalorder %s24, 1
      %p131 = por %p129, %p130
      %p133 = scmp.ne.s32.totalorder %s118, %s132
      %p134 = scmp.eq.s32.totalorder %s24, 0
      %p135 = por %p133, %p134
      %s137 = sadd.s32 %s136, 1
      %p140 = scmp.eq.s32.totalorder %s18, 1
      %p141 = scmp.ne.s32.totalorder %s136, %s138
      %p142 = scmp.eq.s32.totalorder %s18, 0
      %p143 = por %p141, %p142
      %p144 = scmp.ne.s32.totalorder %s136, %s138
      %p145 = scmp.eq.s32.totalorder %s23, 1
      %p146 = por %p144, %p145
      %p147 = scmp.ne.s32.totalorder %s138, %s139
      %p148 = scmp.eq.s32.totalorder %s23, 0
      %p149 = por %p147, %p148
      %p150 = scmp.ne.s32.totalorder %s138, %s139
      %p151 = scmp.eq.s32.totalorder %s24, 1
      %p152 = por %p150, %p151
      %p154 = scmp.ne.s32.totalorder %s139, %s153
      %p155 = scmp.eq.s32.totalorder %s24, 0
      %p156 = por %p154, %p155
      %s158 = sadd.s32 %s157, 1
      %p161 = scmp.eq.s32.totalorder %s18, 1
      %p162 = scmp.ne.s32.totalorder %s157, %s159
      %p163 = scmp.eq.s32.totalorder %s18, 0
      %p164 = por %p162, %p163
      %p165 = scmp.ne.s32.totalorder %s157, %s159
      %p166 = scmp.eq.s32.totalorder %s23, 1
      %p167 = por %p165, %p166
      %p168 = scmp.ne.s32.totalorder %s159, %s160
      %p169 = scmp.eq.s32.totalorder %s23, 0
      %p170 = por %p168, %p169
      %p171 = scmp.ne.s32.totalorder %s159, %s160
      %p172 = scmp.eq.s32.totalorder %s24, 1
      %p173 = por %p171, %p172
      %p175 = scmp.ne.s32.totalorder %s160, %s174
      %p176 = scmp.eq.s32.totalorder %s24, 0
      %p177 = por %p175, %p176
      %s179 = sadd.s32 %s178, 1
      %p182 = scmp.eq.s32.totalorder %s18, 1
      %p183 = scmp.ne.s32.totalorder %s178, %s180
      %p184 = scmp.eq.s32.totalorder %s18, 0
      %p185 = por %p183, %p184
      %p186 = scmp.ne.s32.totalorder %s178, %s180
      %p187 = scmp.eq.s32.totalorder %s23, 1
      %p188 = por %p186, %p187
      %p189 = scmp.ne.s32.totalorder %s180, %s181
      %p190 = scmp.eq.s32.totalorder %s23, 0
      %p191 = por %p189, %p190
      %p192 = scmp.ne.s32.totalorder %s180, %s181
      %p193 = scmp.eq.s32.totalorder %s24, 1
      %p194 = por %p192, %p193
      %p196 = scmp.ne.s32.totalorder %s181, %s195
      %p197 = scmp.eq.s32.totalorder %s24, 0
      %p198 = por %p196, %p197
      %s200 = sadd.s32 %s199, 1
      %p203 = scmp.eq.s32.totalorder %s18, 1
      %p204 = scmp.ne.s32.totalorder %s199, %s201
      %p205 = scmp.eq.s32.totalorder %s18, 0
      %p206 = por %p204, %p205
      %p207 = scmp.ne.s32.totalorder %s199, %s201
      %p208 = scmp.eq.s32.totalorder %s23, 1
      %p209 = por %p207, %p208
      %p210 = scmp.ne.s32.totalorder %s201, %s202
      %p211 = scmp.eq.s32.totalorder %s23, 0
      %p212 = por %p210, %p211
      %p213 = scmp.ne.s32.totalorder %s201, %s202
      %p214 = scmp.eq.s32.totalorder %s24, 1
      %p215 = por %p213, %p214
      %p217 = scmp.ne.s32.totalorder %s202, %s216
      %p218 = scmp.eq.s32.totalorder %s24, 0
      %p219 = por %p217, %p218
      %s220 = ssub.s32 %s18, %s25
      %p221 = scmp.eq.s32.totalorder %s220, 0
      %s223 = sadd.s32 %s222, 1
      %s224 = scalar_select %p221, %s222, %s223
      %p227 = pneg %p221
      %p228 = scmp.eq.s32.totalorder %s18, 1
      %p229 = por %p227, %p228
      %p230 = scmp.ne.s32.totalorder %s222, %s225
      %p231 = scmp.eq.s32.totalorder %s18, 0
      %p232 = por %p230, %p231
      %p233 = scmp.ne.s32.totalorder %s222, %s225
      %p234 = scmp.eq.s32.totalorder %s23, 1
      %p235 = por %p233, %p234
      %p236 = scmp.ne.s32.totalorder %s225, %s226
      %p237 = scmp.eq.s32.totalorder %s23, 0
      %p238 = por %p236, %p237
      %p239 = scmp.ne.s32.totalorder %s225, %s226
      %p240 = scmp.eq.s32.totalorder %s24, 1
      %p241 = por %p239, %p240
      %p243 = scmp.ne.s32.totalorder %s226, %s242
      %p244 = scmp.eq.s32.totalorder %s24, 0
      %p245 = por %p243, %p244
      %p246 = scmp.le.s32.totalorder 1, %s18
      %p247 = scmp.lt.s32.totalorder %s18, 3
      %p248 = pnand %p246, %p247
      %p249 = pneg %p248
      // Predicated region
      $region9: #{basic_u_forward.1} parent=5 // pred_check
        _
      $region10: #{basic_u_forward.1} parent=5 // pred_check_branch
        %251 = sbr.rel (%p248) target = $region12
      $region11: #{basic_u_forward.1} parent=5 // pred_region
        %s252 = ssub.s32 %s18, 1
        // Predicated region
        $region13: #{basic_u_forward.1} parent=11 // pred_check
          %p253 = pneg %p65
        $region14: #{basic_u_forward.1} parent=11 // pred_check_branch
          %255 = sbr.rel (%p253) target = $region16
        $region15: #{basic_u_forward.1} parent=11 // pred_region
          _
        $region16: #{basic_u_forward.1} parent=11 // pred_fallthru
          _
        // Predicated region
        $region17: #{basic_u_forward.1} parent=11 // pred_check
          %p256 = pneg %p86
        $region18: #{basic_u_forward.1} parent=11 // pred_check_branch
          %258 = sbr.rel (%p256) target = $region20
        $region19: #{basic_u_forward.1} parent=11 // pred_region
          _
        $region20: #{basic_u_forward.1} parent=11 // pred_fallthru
          _
        // Predicated region
        $region21: #{basic_u_forward.1} parent=11 // pred_check
          %p259 = pneg %p107
        $region22: #{basic_u_forward.1} parent=11 // pred_check_branch
          %261 = sbr.rel (%p259) target = $region24
        $region23: #{basic_u_forward.1} parent=11 // pred_region
          _
        $region24: #{basic_u_forward.1} parent=11 // pred_fallthru
          _
        // Predicated region
        $region25: #{basic_u_forward.1} parent=11 // pred_check
          %p262 = pneg %p128
        $region26: #{basic_u_forward.1} parent=11 // pred_check_branch
          %264 = sbr.rel (%p262) target = $region28
        $region27: #{basic_u_forward.1} parent=11 // pred_region
          _
        $region28: #{basic_u_forward.1} parent=11 // pred_fallthru
          _
        // Predicated region
        $region29: #{basic_u_forward.1} parent=11 // pred_check
          %p265 = pneg %p149
        $region30: #{basic_u_forward.1} parent=11 // pred_check_branch
          %267 = sbr.rel (%p265) target = $region32
        $region31: #{basic_u_forward.1} parent=11 // pred_region
          _
        $region32: #{basic_u_forward.1} parent=11 // pred_fallthru
          _
        // Predicated region
        $region33: #{basic_u_forward.1} parent=11 // pred_check
          %p268 = pneg %p170
        $region34: #{basic_u_forward.1} parent=11 // pred_check_branch
          %270 = sbr.rel (%p268) target = $region36
        $region35: #{basic_u_forward.1} parent=11 // pred_region
          _
        $region36: #{basic_u_forward.1} parent=11 // pred_fallthru
          _
        // Predicated region
        $region37: #{basic_u_forward.1} parent=11 // pred_check
          %p271 = pneg %p191
        $region38: #{basic_u_forward.1} parent=11 // pred_check_branch
          %273 = sbr.rel (%p271) target = $region40
        $region39: #{basic_u_forward.1} parent=11 // pred_region
          _
        $region40: #{basic_u_forward.1} parent=11 // pred_fallthru
          _
        // Predicated region
        $region41: #{basic_u_forward.1} parent=11 // pred_check
          %p274 = pneg %p212
        $region42: #{basic_u_forward.1} parent=11 // pred_check_branch
          %276 = sbr.rel (%p274) target = $region44
        $region43: #{basic_u_forward.1} parent=11 // pred_region
          _
        $region44: #{basic_u_forward.1} parent=11 // pred_fallthru
          _
      $region12: #{basic_u_forward.1} parent=5 // pred_fallthru
        _
      %p277 = scmp.lt.s32.totalorder %s18, 2
      // Predicated region
      $region45: #{basic_u_forward.1} parent=5 // pred_check
        %p278 = pneg %p277
      $region46: #{basic_u_forward.1} parent=5 // pred_check_branch
        %280 = sbr.rel (%p278) target = $region48
      $region47: #{basic_u_forward.1} parent=5 // pred_region
        // Predicated region
        $region49: #{basic_u_forward.1} parent=47 // pred_check
          %p281 = pneg %p38
        $region50: #{basic_u_forward.1} parent=47 // pred_check_branch
          %283 = sbr.rel (%p281) target = $region52
        $region51: #{basic_u_forward.1} parent=47 // pred_region
          %p284 = scmp.lt.s32.totalorder %s18, 1
          %s285 = scalar_select %p284, %s18, 1
          %s286 = smul.addr %s285, 32
          %s287 = smul.addr %s286, 8
          %s288 = scalar_lea.vmem %s0, %s287
        $region52: #{basic_u_forward.1} parent=47 // pred_fallthru
          _
      $region48: #{basic_u_forward.1} parent=5 // pred_fallthru
        _
      %p289 = scmp.le.s32.totalorder 1, %s18
      %p290 = scmp.lt.s32.totalorder %s18, 3
      %p291 = pnand %p289, %p290
      %p292 = pneg %p291
      // Predicated region
      $region53: #{basic_u_forward.1} parent=5 // pred_check
        _
      $region54: #{basic_u_forward.1} parent=5 // pred_check_branch
        %294 = sbr.rel (%p291) target = $region56
      $region55: #{basic_u_forward.1} parent=5 // pred_region
        %s295 = ssub.s32 %s18, 1
        %p296 = scmp.lt.s32.totalorder %s23, 1
        %s297 = scalar_select %p296, %s23, 1
        %s298 = smul.addr %s297, 32
        %s299 = smul.addr %s298, 8
        %s300 = scalar_lea.vmem %s0, %s299
        %p301 = pneg %p44
        %p302 = pneg %p41
        %p303 = pneg %p65
        %p304 = pneg %p62
        %p305 = pneg %p86
        %p306 = pneg %p83
        %p307 = pneg %p107
        %p308 = pneg %p104
        %p309 = pneg %p128
        %p310 = pneg %p125
        %p311 = pneg %p149
        %p312 = pneg %p146
        %p313 = pneg %p170
        %p314 = pneg %p167
        %p315 = pneg %p191
        %p316 = pneg %p188
        %p317 = pneg %p212
        %p318 = pneg %p209
        %p319 = pneg %p238
        %p320 = pneg %p235
        %s321 = sand.u32 %s225, 1
        %s322 = scalar_lea.sflag [#allocation5], %s321
        %s323 = sand.u32 %s225, 1
        %s324 = smul.addr %s323, 256
        %s325 = scalar_lea.vmem [#allocation4], %s324
        %p326 = scmp.lt.s32.totalorder %s23, 1
        %s327 = scalar_select %p326, %s23, 1
        %s328 = smul.addr %s327, 32
        %s329 = smul.addr %s328, 8
        %s330 = scalar_lea.vmem %s0, %s329
        %vm332 = vcmask 523264
        %333 = vst.msk [vmem:[#allocation2] sm:$0xff] %vm332, 0.0
        %334 = vst.msk [vmem:[#allocation2 + $0x108] sm:$0xff] %vm332, 0.0
        %vm335 = vcmask 1043456
        %vm336 = vcmask 523268
        %vm337 = vmor %vm336, %vm335
        %338 = vst.msk [vmem:[#allocation3] sm:$0xff] %vm337, 0
        %339 = vst.msk [vmem:[#allocation3 + $0x8] sm:$0xff] %vm337, 0
        %340 = vst.msk [vmem:[#allocation3 + $0x110] sm:$0xff] %vm337, 0
        %341 = vst.msk [vmem:[#allocation3 + $0x118] sm:$0xff] %vm337, 0
        %v342 = vld [vmem:[%s330] sm:$0xff]
        %v343 = vld [vmem:[%s330 + $0x8] sm:$0xff]
        %v344 = vld [vmem:[%s330 + $0x10] sm:$0xff]
        %v345 = vld [vmem:[%s330 + $0x18] sm:$0xff]
        %v346 = vld [vmem:[%s330 + $0x20] sm:$0xff]
        %v347 = vld [vmem:[%s330 + $0x28] sm:$0xff]
        %v348 = vld [vmem:[%s330 + $0x30] sm:$0xff]
        %v349 = vld [vmem:[%s330 + $0x38] sm:$0xff]
        %v350 = vld [vmem:[%s330 + $0x40] sm:$0xff]
        %v351 = vld [vmem:[%s330 + $0x48] sm:$0xff]
        %v352 = vld [vmem:[%s330 + $0x50] sm:$0xff]
        %v353 = vld [vmem:[%s330 + $0x58] sm:$0xff]
        %v354 = vld [vmem:[%s330 + $0x60] sm:$0xff]
        %v355 = vld [vmem:[%s330 + $0x68] sm:$0xff]
        %v356 = vld [vmem:[%s330 + $0x70] sm:$0xff]
        %v357 = vld [vmem:[%s330 + $0x78] sm:$0xff]
        %v358 = vld [vmem:[%s330 + $0x80] sm:$0xff]
        %v359 = vld [vmem:[%s330 + $0x88] sm:$0xff]
        %v360 = vld [vmem:[%s330 + $0x90] sm:$0xff]
        %v361 = vld [vmem:[%s330 + $0x98] sm:$0xff]
        %v362 = vld [vmem:[%s330 + $0xa0] sm:$0xff]
        %v363 = vld [vmem:[%s330 + $0xa8] sm:$0xff]
        %v364 = vld [vmem:[%s330 + $0xb0] sm:$0xff]
        %v365 = vld [vmem:[%s330 + $0xb8] sm:$0xff]
        %v366 = vld [vmem:[%s330 + $0xc0] sm:$0xff]
        %v367 = vld [vmem:[%s330 + $0xc8] sm:$0xff]
        %v368 = vld [vmem:[%s330 + $0xd0] sm:$0xff]
        %v369 = vld [vmem:[%s330 + $0xd8] sm:$0xff]
        %v370 = vld [vmem:[%s330 + $0xe0] sm:$0xff]
        %v371 = vld [vmem:[%s330 + $0xe8] sm:$0xff]
        %v372 = vld [vmem:[%s330 + $0xf0] sm:$0xff]
        %v373 = vld [vmem:[%s330 + $0xf8] sm:$0xff]
        loop: start=0, step=1, limit=6
        $region57: #{basic_u_forward.1} parent=55 // loop_pre_header
          _
        $region58: #{basic_u_forward.1} parent=55 // loop_header
          %s375 = sphi 0, %s379
          %p376 = scmp.ge.s32.totalorder %s375, 6
          %v380 = vphi %v342, %v4880
          %v381 = vphi %v343, %v4881
          %v382 = vphi %v344, %v4882
          %v383 = vphi %v345, %v4883
          %v384 = vphi %v346, %v4884
          %v385 = vphi %v347, %v4885
          %v386 = vphi %v348, %v4886
          %v387 = vphi %v349, %v4887
          %v388 = vphi %v350, %v4888
          %v389 = vphi %v351, %v4889
          %v390 = vphi %v352, %v4890
          %v391 = vphi %v353, %v4891
          %v392 = vphi %v354, %v4892
          %v393 = vphi %v355, %v4893
          %v394 = vphi %v356, %v4894
          %v395 = vphi %v357, %v4895
          %v396 = vphi %v358, %v4896
          %v397 = vphi %v359, %v4897
          %v398 = vphi %v360, %v4898
          %v399 = vphi %v361, %v4899
          %v400 = vphi %v362, %v4900
          %v401 = vphi %v363, %v4901
          %v402 = vphi %v364, %v4902
          %v403 = vphi %v365, %v4903
          %v404 = vphi %v366, %v4904
          %v405 = vphi %v367, %v4905
          %v406 = vphi %v368, %v4906
          %v407 = vphi %v369, %v4907
          %v408 = vphi %v370, %v4908
          %v409 = vphi %v371, %v4909
          %v410 = vphi %v372, %v4910
          %v411 = vphi %v373, %v4911
        $region59: #{basic_u_forward.1} parent=55 // loop_header_branch
          %378 = sbr.rel (%p376) target = $region63
        $region60: #{basic_u_forward.1} parent=55 // loop_body
          %412 = vst.msk [vmem:[#allocation2 + $0x8] sm:$0xff] %vm332, %v380
          %413 = vst.msk [vmem:[#allocation2 + $0x10] sm:$0xff] %vm332, %v381
          %414 = vst.msk [vmem:[#allocation2 + $0x18] sm:$0xff] %vm332, %v382
          %415 = vst.msk [vmem:[#allocation2 + $0x20] sm:$0xff] %vm332, %v383
          %416 = vst.msk [vmem:[#allocation2 + $0x28] sm:$0xff] %vm332, %v384
          %417 = vst.msk [vmem:[#allocation2 + $0x30] sm:$0xff] %vm332, %v385
          %418 = vst.msk [vmem:[#allocation2 + $0x38] sm:$0xff] %vm332, %v386
          %419 = vst.msk [vmem:[#allocation2 + $0x40] sm:$0xff] %vm332, %v387
          %420 = vst.msk [vmem:[#allocation2 + $0x48] sm:$0xff] %vm332, %v388
          %421 = vst.msk [vmem:[#allocation2 + $0x50] sm:$0xff] %vm332, %v389
          %422 = vst.msk [vmem:[#allocation2 + $0x58] sm:$0xff] %vm332, %v390
          %423 = vst.msk [vmem:[#allocation2 + $0x60] sm:$0xff] %vm332, %v391
          %424 = vst.msk [vmem:[#allocation2 + $0x68] sm:$0xff] %vm332, %v392
          %425 = vst.msk [vmem:[#allocation2 + $0x70] sm:$0xff] %vm332, %v393
          %426 = vst.msk [vmem:[#allocation2 + $0x78] sm:$0xff] %vm332, %v394
          %427 = vst.msk [vmem:[#allocation2 + $0x80] sm:$0xff] %vm332, %v395
          %428 = vst.msk [vmem:[#allocation2 + $0x88] sm:$0xff] %vm332, %v396
          %429 = vst.msk [vmem:[#allocation2 + $0x90] sm:$0xff] %vm332, %v397
          %430 = vst.msk [vmem:[#allocation2 + $0x98] sm:$0xff] %vm332, %v398
          %431 = vst.msk [vmem:[#allocation2 + $0xa0] sm:$0xff] %vm332, %v399
          %432 = vst.msk [vmem:[#allocation2 + $0xa8] sm:$0xff] %vm332, %v400
          %433 = vst.msk [vmem:[#allocation2 + $0xb0] sm:$0xff] %vm332, %v401
          %434 = vst.msk [vmem:[#allocation2 + $0xb8] sm:$0xff] %vm332, %v402
          %435 = vst.msk [vmem:[#allocation2 + $0xc0] sm:$0xff] %vm332, %v403
          %436 = vst.msk [vmem:[#allocation2 + $0xc8] sm:$0xff] %vm332, %v404
          %437 = vst.msk [vmem:[#allocation2 + $0xd0] sm:$0xff] %vm332, %v405
          %438 = vst.msk [vmem:[#allocation2 + $0xd8] sm:$0xff] %vm332, %v406
          %439 = vst.msk [vmem:[#allocation2 + $0xe0] sm:$0xff] %vm332, %v407
          %440 = vst.msk [vmem:[#allocation2 + $0xe8] sm:$0xff] %vm332, %v408
          %441 = vst.msk [vmem:[#allocation2 + $0xf0] sm:$0xff] %vm332, %v409
          %442 = vst.msk [vmem:[#allocation2 + $0xf8] sm:$0xff] %vm332, %v410
          %443 = vst.msk [vmem:[#allocation2 + $0x100] sm:$0xff] %vm332, %v411
          %v444 = vlaneseq
          %v445 = vshrl.u32 %v444, 7
          %v446 = vadd.s32 %v445, 8
          %v447 = vadd.s32 %v445, 16
          %v448 = vadd.s32 %v445, 24
          %v449 = vadd.s32 %v445, 32
          %v450 = vadd.s32 %v445, 40
          %v451 = vadd.s32 %v445, 48
          %v452 = vadd.s32 %v445, 56
          %v453 = vadd.s32 %v445, 64
          %v454 = vadd.s32 %v445, 72
          %v455 = vadd.s32 %v445, 80
          %v456 = vadd.s32 %v445, 88
          %v457 = vadd.s32 %v445, 96
          %v458 = vadd.s32 %v445, 104
          %v459 = vadd.s32 %v445, 112
          %v460 = vadd.s32 %v445, 120
          %v461 = vadd.s32 %v445, 128
          %v462 = vadd.s32 %v445, 136
          %v463 = vadd.s32 %v445, 144
          %v464 = vadd.s32 %v445, 152
          %v465 = vadd.s32 %v445, 160
          %v466 = vadd.s32 %v445, 168
          %v467 = vadd.s32 %v445, 176
          %v468 = vadd.s32 %v445, 184
          %v469 = vadd.s32 %v445, 192
          %v470 = vadd.s32 %v445, 200
          %v471 = vadd.s32 %v445, 208
          %v472 = vadd.s32 %v445, 216
          %v473 = vadd.s32 %v445, 224
          %v474 = vadd.s32 %v445, 232
          %v475 = vadd.s32 %v445, 240
          %v476 = vadd.s32 %v445, 248
          %vm477 = vcmp.lt.s32.totalorder %v445, 0
          %v478 = vsub.s32 0, %v445
          %v479 = vsel %vm477, %v478, %v445
          %v480 = vshrl.u32 %v479, 4
          %v481 = vand.u32 %v479, 15
          %v482 = vsub.s32 0, %v481
          %v483 = vsel %vm477, %v482, %v481
          %vm484 = vcmp.lt.s32.totalorder %v446, 0
          %v485 = vsub.s32 0, %v446
          %v486 = vsel %vm484, %v485, %v446
          %v487 = vshrl.u32 %v486, 4
          %v488 = vand.u32 %v486, 15
          %v489 = vsub.s32 0, %v488
          %v490 = vsel %vm484, %v489, %v488
          %vm491 = vcmp.lt.s32.totalorder %v447, 0
          %v492 = vsub.s32 0, %v447
          %v493 = vsel %vm491, %v492, %v447
          %v494 = vshrl.u32 %v493, 4
          %v495 = vand.u32 %v493, 15
          %v496 = vsub.s32 0, %v495
          %v497 = vsel %vm491, %v496, %v495
          %vm498 = vcmp.lt.s32.totalorder %v448, 0
          %v499 = vsub.s32 0, %v448
          %v500 = vsel %vm498, %v499, %v448
          %v501 = vshrl.u32 %v500, 4
          %v502 = vand.u32 %v500, 15
          %v503 = vsub.s32 0, %v502
          %v504 = vsel %vm498, %v503, %v502
          %vm505 = vcmp.lt.s32.totalorder %v449, 0
          %v506 = vsub.s32 0, %v449
          %v507 = vsel %vm505, %v506, %v449
          %v508 = vshrl.u32 %v507, 4
          %v509 = vand.u32 %v507, 15
          %v510 = vsub.s32 0, %v509
          %v511 = vsel %vm505, %v510, %v509
          %vm512 = vcmp.lt.s32.totalorder %v450, 0
          %v513 = vsub.s32 0, %v450
          %v514 = vsel %vm512, %v513, %v450
          %v515 = vshrl.u32 %v514, 4
          %v516 = vand.u32 %v514, 15
          %v517 = vsub.s32 0, %v516
          %v518 = vsel %vm512, %v517, %v516
          %vm519 = vcmp.lt.s32.totalorder %v451, 0
          %v520 = vsub.s32 0, %v451
          %v521 = vsel %vm519, %v520, %v451
          %v522 = vshrl.u32 %v521, 4
          %v523 = vand.u32 %v521, 15
          %v524 = vsub.s32 0, %v523
          %v525 = vsel %vm519, %v524, %v523
          %vm526 = vcmp.lt.s32.totalorder %v452, 0
          %v527 = vsub.s32 0, %v452
          %v528 = vsel %vm526, %v527, %v452
          %v529 = vshrl.u32 %v528, 4
          %v530 = vand.u32 %v528, 15
          %v531 = vsub.s32 0, %v530
          %v532 = vsel %vm526, %v531, %v530
          %vm533 = vcmp.lt.s32.totalorder %v453, 0
          %v534 = vsub.s32 0, %v453
          %v535 = vsel %vm533, %v534, %v453
          %v536 = vshrl.u32 %v535, 4
          %v537 = vand.u32 %v535, 15
          %v538 = vsub.s32 0, %v537
          %v539 = vsel %vm533, %v538, %v537
          %vm540 = vcmp.lt.s32.totalorder %v454, 0
          %v541 = vsub.s32 0, %v454
          %v542 = vsel %vm540, %v541, %v454
          %v543 = vshrl.u32 %v542, 4
          %v544 = vand.u32 %v542, 15
          %v545 = vsub.s32 0, %v544
          %v546 = vsel %vm540, %v545, %v544
          %vm547 = vcmp.lt.s32.totalorder %v455, 0
          %v548 = vsub.s32 0, %v455
          %v549 = vsel %vm547, %v548, %v455
          %v550 = vshrl.u32 %v549, 4
          %v551 = vand.u32 %v549, 15
          %v552 = vsub.s32 0, %v551
          %v553 = vsel %vm547, %v552, %v551
          %vm554 = vcmp.lt.s32.totalorder %v456, 0
          %v555 = vsub.s32 0, %v456
          %v556 = vsel %vm554, %v555, %v456
          %v557 = vshrl.u32 %v556, 4
          %v558 = vand.u32 %v556, 15
          %v559 = vsub.s32 0, %v558
          %v560 = vsel %vm554, %v559, %v558
          %vm561 = vcmp.lt.s32.totalorder %v457, 0
          %v562 = vsub.s32 0, %v457
          %v563 = vsel %vm561, %v562, %v457
          %v564 = vshrl.u32 %v563, 4
          %v565 = vand.u32 %v563, 15
          %v566 = vsub.s32 0, %v565
          %v567 = vsel %vm561, %v566, %v565
          %vm568 = vcmp.lt.s32.totalorder %v458, 0
          %v569 = vsub.s32 0, %v458
          %v570 = vsel %vm568, %v569, %v458
          %v571 = vshrl.u32 %v570, 4
          %v572 = vand.u32 %v570, 15
          %v573 = vsub.s32 0, %v572
          %v574 = vsel %vm568, %v573, %v572
          %vm575 = vcmp.lt.s32.totalorder %v459, 0
          %v576 = vsub.s32 0, %v459
          %v577 = vsel %vm575, %v576, %v459
          %v578 = vshrl.u32 %v577, 4
          %v579 = vand.u32 %v577, 15
          %v580 = vsub.s32 0, %v579
          %v581 = vsel %vm575, %v580, %v579
          %vm582 = vcmp.lt.s32.totalorder %v460, 0
          %v583 = vsub.s32 0, %v460
          %v584 = vsel %vm582, %v583, %v460
          %v585 = vshrl.u32 %v584, 4
          %v586 = vand.u32 %v584, 15
          %v587 = vsub.s32 0, %v586
          %v588 = vsel %vm582, %v587, %v586
          %vm589 = vcmp.lt.s32.totalorder %v461, 0
          %v590 = vsub.s32 0, %v461
          %v591 = vsel %vm589, %v590, %v461
          %v592 = vshrl.u32 %v591, 4
          %v593 = vand.u32 %v591, 15
          %v594 = vsub.s32 0, %v593
          %v595 = vsel %vm589, %v594, %v593
          %vm596 = vcmp.lt.s32.totalorder %v462, 0
          %v597 = vsub.s32 0, %v462
          %v598 = vsel %vm596, %v597, %v462
          %v599 = vshrl.u32 %v598, 4
          %v600 = vand.u32 %v598, 15
          %v601 = vsub.s32 0, %v600
          %v602 = vsel %vm596, %v601, %v600
          %vm603 = vcmp.lt.s32.totalorder %v463, 0
          %v604 = vsub.s32 0, %v463
          %v605 = vsel %vm603, %v604, %v463
          %v606 = vshrl.u32 %v605, 4
          %v607 = vand.u32 %v605, 15
          %v608 = vsub.s32 0, %v607
          %v609 = vsel %vm603, %v608, %v607
          %vm610 = vcmp.lt.s32.totalorder %v464, 0
          %v611 = vsub.s32 0, %v464
          %v612 = vsel %vm610, %v611, %v464
          %v613 = vshrl.u32 %v612, 4
          %v614 = vand.u32 %v612, 15
          %v615 = vsub.s32 0, %v614
          %v616 = vsel %vm610, %v615, %v614
          %vm617 = vcmp.lt.s32.totalorder %v465, 0
          %v618 = vsub.s32 0, %v465
          %v619 = vsel %vm617, %v618, %v465
          %v620 = vshrl.u32 %v619, 4
          %v621 = vand.u32 %v619, 15
          %v622 = vsub.s32 0, %v621
          %v623 = vsel %vm617, %v622, %v621
          %vm624 = vcmp.lt.s32.totalorder %v466, 0
          %v625 = vsub.s32 0, %v466
          %v626 = vsel %vm624, %v625, %v466
          %v627 = vshrl.u32 %v626, 4
          %v628 = vand.u32 %v626, 15
          %v629 = vsub.s32 0, %v628
          %v630 = vsel %vm624, %v629, %v628
          %vm631 = vcmp.lt.s32.totalorder %v467, 0
          %v632 = vsub.s32 0, %v467
          %v633 = vsel %vm631, %v632, %v467
          %v634 = vshrl.u32 %v633, 4
          %v635 = vand.u32 %v633, 15
          %v636 = vsub.s32 0, %v635
          %v637 = vsel %vm631, %v636, %v635
          %vm638 = vcmp.lt.s32.totalorder %v468, 0
          %v639 = vsub.s32 0, %v468
          %v640 = vsel %vm638, %v639, %v468
          %v641 = vshrl.u32 %v640, 4
          %v642 = vand.u32 %v640, 15
          %v643 = vsub.s32 0, %v642
          %v644 = vsel %vm638, %v643, %v642
          %vm645 = vcmp.lt.s32.totalorder %v469, 0
          %v646 = vsub.s32 0, %v469
          %v647 = vsel %vm645, %v646, %v469
          %v648 = vshrl.u32 %v647, 4
          %v649 = vand.u32 %v647, 15
          %v650 = vsub.s32 0, %v649
          %v651 = vsel %vm645, %v650, %v649
          %vm652 = vcmp.lt.s32.totalorder %v470, 0
          %v653 = vsub.s32 0, %v470
          %v654 = vsel %vm652, %v653, %v470
          %v655 = vshrl.u32 %v654, 4
          %v656 = vand.u32 %v654, 15
          %v657 = vsub.s32 0, %v656
          %v658 = vsel %vm652, %v657, %v656
          %vm659 = vcmp.lt.s32.totalorder %v471, 0
          %v660 = vsub.s32 0, %v471
          %v661 = vsel %vm659, %v660, %v471
          %v662 = vshrl.u32 %v661, 4
          %v663 = vand.u32 %v661, 15
          %v664 = vsub.s32 0, %v663
          %v665 = vsel %vm659, %v664, %v663
          %vm666 = vcmp.lt.s32.totalorder %v472, 0
          %v667 = vsub.s32 0, %v472
          %v668 = vsel %vm666, %v667, %v472
          %v669 = vshrl.u32 %v668, 4
          %v670 = vand.u32 %v668, 15
          %v671 = vsub.s32 0, %v670
          %v672 = vsel %vm666, %v671, %v670
          %vm673 = vcmp.lt.s32.totalorder %v473, 0
          %v674 = vsub.s32 0, %v473
          %v675 = vsel %vm673, %v674, %v473
          %v676 = vshrl.u32 %v675, 4
          %v677 = vand.u32 %v675, 15
          %v678 = vsub.s32 0, %v677
          %v679 = vsel %vm673, %v678, %v677
          %vm680 = vcmp.lt.s32.totalorder %v474, 0
          %v681 = vsub.s32 0, %v474
          %v682 = vsel %vm680, %v681, %v474
          %v683 = vshrl.u32 %v682, 4
          %v684 = vand.u32 %v682, 15
          %v685 = vsub.s32 0, %v684
          %v686 = vsel %vm680, %v685, %v684
          %vm687 = vcmp.lt.s32.totalorder %v475, 0
          %v688 = vsub.s32 0, %v475
          %v689 = vsel %vm687, %v688, %v475
          %v690 = vshrl.u32 %v689, 4
          %v691 = vand.u32 %v689, 15
          %v692 = vsub.s32 0, %v691
          %v693 = vsel %vm687, %v692, %v691
          %vm694 = vcmp.lt.s32.totalorder %v476, 0
          %v695 = vsub.s32 0, %v476
          %v696 = vsel %vm694, %v695, %v476
          %v697 = vshrl.u32 %v696, 4
          %v698 = vand.u32 %v696, 15
          %v699 = vsub.s32 0, %v698
          %v700 = vsel %vm694, %v699, %v698
          %vm701 = vcmp.ne.s32.totalorder %v483, 0
          %vm702 = vcmp.ne.s32.totalorder %v490, 0
          %vm703 = vcmp.ne.s32.totalorder %v497, 0
          %vm704 = vcmp.ne.s32.totalorder %v504, 0
          %vm705 = vcmp.ne.s32.totalorder %v511, 0
          %vm706 = vcmp.ne.s32.totalorder %v518, 0
          %vm707 = vcmp.ne.s32.totalorder %v525, 0
          %vm708 = vcmp.ne.s32.totalorder %v532, 0
          %vm709 = vcmp.ne.s32.totalorder %v539, 0
          %vm710 = vcmp.ne.s32.totalorder %v546, 0
          %vm711 = vcmp.ne.s32.totalorder %v553, 0
          %vm712 = vcmp.ne.s32.totalorder %v560, 0
          %vm713 = vcmp.ne.s32.totalorder %v567, 0
          %vm714 = vcmp.ne.s32.totalorder %v574, 0
          %vm715 = vcmp.ne.s32.totalorder %v581, 0
          %vm716 = vcmp.ne.s32.totalorder %v588, 0
          %vm717 = vcmp.ne.s32.totalorder %v595, 0
          %vm718 = vcmp.ne.s32.totalorder %v602, 0
          %vm719 = vcmp.ne.s32.totalorder %v609, 0
          %vm720 = vcmp.ne.s32.totalorder %v616, 0
          %vm721 = vcmp.ne.s32.totalorder %v623, 0
          %vm722 = vcmp.ne.s32.totalorder %v630, 0
          %vm723 = vcmp.ne.s32.totalorder %v637, 0
          %vm724 = vcmp.ne.s32.totalorder %v644, 0
          %vm725 = vcmp.ne.s32.totalorder %v651, 0
          %vm726 = vcmp.ne.s32.totalorder %v658, 0
          %vm727 = vcmp.ne.s32.totalorder %v665, 0
          %vm728 = vcmp.ne.s32.totalorder %v672, 0
          %vm729 = vcmp.ne.s32.totalorder %v679, 0
          %vm730 = vcmp.ne.s32.totalorder %v686, 0
          %vm731 = vcmp.ne.s32.totalorder %v693, 0
          %vm732 = vcmp.ne.s32.totalorder %v700, 0
          %vm733 = vcmp.lt.s32.totalorder %v483, 0
          %vm734 = vcmp.lt.s32.totalorder %v490, 0
          %vm735 = vcmp.lt.s32.totalorder %v497, 0
          %vm736 = vcmp.lt.s32.totalorder %v504, 0
          %vm737 = vcmp.lt.s32.totalorder %v511, 0
          %vm738 = vcmp.lt.s32.totalorder %v518, 0
          %vm739 = vcmp.lt.s32.totalorder %v525, 0
          %vm740 = vcmp.lt.s32.totalorder %v532, 0
          %vm741 = vcmp.lt.s32.totalorder %v539, 0
          %vm742 = vcmp.lt.s32.totalorder %v546, 0
          %vm743 = vcmp.lt.s32.totalorder %v553, 0
          %vm744 = vcmp.lt.s32.totalorder %v560, 0
          %vm745 = vcmp.lt.s32.totalorder %v567, 0
          %vm746 = vcmp.lt.s32.totalorder %v574, 0
          %vm747 = vcmp.lt.s32.totalorder %v581, 0
          %vm748 = vcmp.lt.s32.totalorder %v588, 0
          %vm749 = vcmp.lt.s32.totalorder %v595, 0
          %vm750 = vcmp.lt.s32.totalorder %v602, 0
          %vm751 = vcmp.lt.s32.totalorder %v609, 0
          %vm752 = vcmp.lt.s32.totalorder %v616, 0
          %vm753 = vcmp.lt.s32.totalorder %v623, 0
          %vm754 = vcmp.lt.s32.totalorder %v630, 0
          %vm755 = vcmp.lt.s32.totalorder %v637, 0
          %vm756 = vcmp.lt.s32.totalorder %v644, 0
          %vm757 = vcmp.lt.s32.totalorder %v651, 0
          %vm758 = vcmp.lt.s32.totalorder %v658, 0
          %vm759 = vcmp.lt.s32.totalorder %v665, 0
          %vm760 = vcmp.lt.s32.totalorder %v672, 0
          %vm761 = vcmp.lt.s32.totalorder %v679, 0
          %vm762 = vcmp.lt.s32.totalorder %v686, 0
          %vm763 = vcmp.lt.s32.totalorder %v693, 0
          %vm764 = vcmp.lt.s32.totalorder %v700, 0
          %vm765 = vmand %vm733, %vm701
          %vm766 = vmand %vm734, %vm702
          %vm767 = vmand %vm735, %vm703
          %vm768 = vmand %vm736, %vm704
          %vm769 = vmand %vm737, %vm705
          %vm770 = vmand %vm738, %vm706
          %vm771 = vmand %vm739, %vm707
          %vm772 = vmand %vm740, %vm708
          %vm773 = vmand %vm741, %vm709
          %vm774 = vmand %vm742, %vm710
          %vm775 = vmand %vm743, %vm711
          %vm776 = vmand %vm744, %vm712
          %vm777 = vmand %vm745, %vm713
          %vm778 = vmand %vm746, %vm714
          %vm779 = vmand %vm747, %vm715
          %vm780 = vmand %vm748, %vm716
          %vm781 = vmand %vm749, %vm717
          %vm782 = vmand %vm750, %vm718
          %vm783 = vmand %vm751, %vm719
          %vm784 = vmand %vm752, %vm720
          %vm785 = vmand %vm753, %vm721
          %vm786 = vmand %vm754, %vm722
          %vm787 = vmand %vm755, %vm723
          %vm788 = vmand %vm756, %vm724
          %vm789 = vmand %vm757, %vm725
          %vm790 = vmand %vm758, %vm726
          %vm791 = vmand %vm759, %vm727
          %vm792 = vmand %vm760, %vm728
          %vm793 = vmand %vm761, %vm729
          %vm794 = vmand %vm762, %vm730
          %vm795 = vmand %vm763, %vm731
          %vm796 = vmand %vm764, %vm732
          %v797 = vadd.s32 %v483, 16
          %v798 = vadd.s32 %v490, 16
          %v799 = vadd.s32 %v497, 16
          %v800 = vadd.s32 %v504, 16
          %v801 = vadd.s32 %v511, 16
          %v802 = vadd.s32 %v518, 16
          %v803 = vadd.s32 %v525, 16
          %v804 = vadd.s32 %v532, 16
          %v805 = vadd.s32 %v539, 16
          %v806 = vadd.s32 %v546, 16
          %v807 = vadd.s32 %v553, 16
          %v808 = vadd.s32 %v560, 16
          %v809 = vadd.s32 %v567, 16
          %v810 = vadd.s32 %v574, 16
          %v811 = vadd.s32 %v581, 16
          %v812 = vadd.s32 %v588, 16
          %v813 = vadd.s32 %v595, 16
          %v814 = vadd.s32 %v602, 16
          %v815 = vadd.s32 %v609, 16
          %v816 = vadd.s32 %v616, 16
          %v817 = vadd.s32 %v623, 16
          %v818 = vadd.s32 %v630, 16
          %v819 = vadd.s32 %v637, 16
          %v820 = vadd.s32 %v644, 16
          %v821 = vadd.s32 %v651, 16
          %v822 = vadd.s32 %v658, 16
          %v823 = vadd.s32 %v665, 16
          %v824 = vadd.s32 %v672, 16
          %v825 = vadd.s32 %v679, 16
          %v826 = vadd.s32 %v686, 16
          %v827 = vadd.s32 %v693, 16
          %v828 = vadd.s32 %v700, 16
          %v829 = vsel %vm765, %v797, %v483
          %v830 = vsel %vm766, %v798, %v490
          %v831 = vsel %vm767, %v799, %v497
          %v832 = vsel %vm768, %v800, %v504
          %v833 = vsel %vm769, %v801, %v511
          %v834 = vsel %vm770, %v802, %v518
          %v835 = vsel %vm771, %v803, %v525
          %v836 = vsel %vm772, %v804, %v532
          %v837 = vsel %vm773, %v805, %v539
          %v838 = vsel %vm774, %v806, %v546
          %v839 = vsel %vm775, %v807, %v553
          %v840 = vsel %vm776, %v808, %v560
          %v841 = vsel %vm777, %v809, %v567
          %v842 = vsel %vm778, %v810, %v574
          %v843 = vsel %vm779, %v811, %v581
          %v844 = vsel %vm780, %v812, %v588
          %v845 = vsel %vm781, %v813, %v595
          %v846 = vsel %vm782, %v814, %v602
          %v847 = vsel %vm783, %v815, %v609
          %v848 = vsel %vm784, %v816, %v616
          %v849 = vsel %vm785, %v817, %v623
          %v850 = vsel %vm786, %v818, %v630
          %v851 = vsel %vm787, %v819, %v637
          %v852 = vsel %vm788, %v820, %v644
          %v853 = vsel %vm789, %v821, %v651
          %v854 = vsel %vm790, %v822, %v658
          %v855 = vsel %vm791, %v823, %v665
          %v856 = vsel %vm792, %v824, %v672
          %v857 = vsel %vm793, %v825, %v679
          %v858 = vsel %vm794, %v826, %v686
          %v859 = vsel %vm795, %v827, %v693
          %v860 = vsel %vm796, %v828, %v700
          %v861 = vpack.c.bf16 %v381, %v380
          %v862 = vpack.c.bf16 %v383, %v382
          %v863 = vpack.c.bf16 %v385, %v384
          %v864 = vpack.c.bf16 %v387, %v386
          %v865 = vpack.c.bf16 %v389, %v388
          %v866 = vpack.c.bf16 %v391, %v390
          %v867 = vpack.c.bf16 %v393, %v392
          %v868 = vpack.c.bf16 %v395, %v394
          %v869 = vpack.c.bf16 %v397, %v396
          %v870 = vpack.c.bf16 %v399, %v398
          %v871 = vpack.c.bf16 %v401, %v400
          %v872 = vpack.c.bf16 %v403, %v402
          %v873 = vpack.c.bf16 %v405, %v404
          %v874 = vpack.c.bf16 %v407, %v406
          %v875 = vpack.c.bf16 %v409, %v408
          %v876 = vpack.c.bf16 %v411, %v410
          %vm877 = vcmp.ne.s32.totalorder %v829, 0
          %vm878 = vcmp.ne.s32.totalorder %v830, 0
          %vm879 = vcmp.ne.s32.totalorder %v831, 0
          %vm880 = vcmp.ne.s32.totalorder %v832, 0
          %vm881 = vcmp.ne.s32.totalorder %v833, 0
          %vm882 = vcmp.ne.s32.totalorder %v834, 0
          %vm883 = vcmp.ne.s32.totalorder %v835, 0
          %vm884 = vcmp.ne.s32.totalorder %v836, 0
          %vm885 = vcmp.ne.s32.totalorder %v837, 0
          %vm886 = vcmp.ne.s32.totalorder %v838, 0
          %vm887 = vcmp.ne.s32.totalorder %v839, 0
          %vm888 = vcmp.ne.s32.totalorder %v840, 0
          %vm889 = vcmp.ne.s32.totalorder %v841, 0
          %vm890 = vcmp.ne.s32.totalorder %v842, 0
          %vm891 = vcmp.ne.s32.totalorder %v843, 0
          %vm892 = vcmp.ne.s32.totalorder %v844, 0
          %vm893 = vcmp.ne.s32.totalorder %v845, 0
          %vm894 = vcmp.ne.s32.totalorder %v846, 0
          %vm895 = vcmp.ne.s32.totalorder %v847, 0
          %vm896 = vcmp.ne.s32.totalorder %v848, 0
          %vm897 = vcmp.ne.s32.totalorder %v849, 0
          %vm898 = vcmp.ne.s32.totalorder %v850, 0
          %vm899 = vcmp.ne.s32.totalorder %v851, 0
          %vm900 = vcmp.ne.s32.totalorder %v852, 0
          %vm901 = vcmp.ne.s32.totalorder %v853, 0
          %vm902 = vcmp.ne.s32.totalorder %v854, 0
          %vm903 = vcmp.ne.s32.totalorder %v855, 0
          %vm904 = vcmp.ne.s32.totalorder %v856, 0
          %vm905 = vcmp.ne.s32.totalorder %v857, 0
          %vm906 = vcmp.ne.s32.totalorder %v858, 0
          %vm907 = vcmp.ne.s32.totalorder %v859, 0
          %vm908 = vcmp.ne.s32.totalorder %v860, 0
          %v909 = vld [vmem:[#allocation2 + $0x7] sm:$0xff]
          %v910 = vld [vmem:[#allocation2 + $0xf] sm:$0xff]
          %v911 = vld [vmem:[#allocation2 + $0x17] sm:$0xff]
          %v912 = vld [vmem:[#allocation2 + $0x1f] sm:$0xff]
          %v913 = vld [vmem:[#allocation2 + $0x27] sm:$0xff]
          %v914 = vld [vmem:[#allocation2 + $0x2f] sm:$0xff]
          %v915 = vld [vmem:[#allocation2 + $0x37] sm:$0xff]
          %v916 = vld [vmem:[#allocation2 + $0x3f] sm:$0xff]
          %v917 = vld [vmem:[#allocation2 + $0x47] sm:$0xff]
          %v918 = vld [vmem:[#allocation2 + $0x4f] sm:$0xff]
          %v919 = vld [vmem:[#allocation2 + $0x57] sm:$0xff]
          %v920 = vld [vmem:[#allocation2 + $0x5f] sm:$0xff]
          %v921 = vld [vmem:[#allocation2 + $0x67] sm:$0xff]
          %v922 = vld [vmem:[#allocation2 + $0x6f] sm:$0xff]
          %v923 = vld [vmem:[#allocation2 + $0x77] sm:$0xff]
          %v924 = vld [vmem:[#allocation2 + $0x7f] sm:$0xff]
          %v925 = vld [vmem:[#allocation2 + $0x87] sm:$0xff]
          %v926 = vld [vmem:[#allocation2 + $0x8f] sm:$0xff]
          %v927 = vld [vmem:[#allocation2 + $0x97] sm:$0xff]
          %v928 = vld [vmem:[#allocation2 + $0x9f] sm:$0xff]
          %v929 = vld [vmem:[#allocation2 + $0xa7] sm:$0xff]
          %v930 = vld [vmem:[#allocation2 + $0xaf] sm:$0xff]
          %v931 = vld [vmem:[#allocation2 + $0xb7] sm:$0xff]
          %v932 = vld [vmem:[#allocation2 + $0xbf] sm:$0xff]
          %v933 = vld [vmem:[#allocation2 + $0xc7] sm:$0xff]
          %v934 = vld [vmem:[#allocation2 + $0xcf] sm:$0xff]
          %v935 = vld [vmem:[#allocation2 + $0xd7] sm:$0xff]
          %v936 = vld [vmem:[#allocation2 + $0xdf] sm:$0xff]
          %v937 = vld [vmem:[#allocation2 + $0xe7] sm:$0xff]
          %v938 = vld [vmem:[#allocation2 + $0xef] sm:$0xff]
          %v939 = vld [vmem:[#allocation2 + $0xf7] sm:$0xff]
          %v940 = vld [vmem:[#allocation2 + $0xff] sm:$0xff]
          %v941 = vsel %vm877, %v909, 0.0
          %v942 = vsel %vm878, %v910, 0.0
          %v943 = vsel %vm879, %v911, 0.0
          %v944 = vsel %vm880, %v912, 0.0
          %v945 = vsel %vm881, %v913, 0.0
          %v946 = vsel %vm882, %v914, 0.0
          %v947 = vsel %vm883, %v915, 0.0
          %v948 = vsel %vm884, %v916, 0.0
          %v949 = vsel %vm885, %v917, 0.0
          %v950 = vsel %vm886, %v918, 0.0
          %v951 = vsel %vm887, %v919, 0.0
          %v952 = vsel %vm888, %v920, 0.0
          %v953 = vsel %vm889, %v921, 0.0
          %v954 = vsel %vm890, %v922, 0.0
          %v955 = vsel %vm891, %v923, 0.0
          %v956 = vsel %vm892, %v924, 0.0
          %v957 = vsel %vm893, %v925, 0.0
          %v958 = vsel %vm894, %v926, 0.0
          %v959 = vsel %vm895, %v927, 0.0
          %v960 = vsel %vm896, %v928, 0.0
          %v961 = vsel %vm897, %v929, 0.0
          %v962 = vsel %vm898, %v930, 0.0
          %v963 = vsel %vm899, %v931, 0.0
          %v964 = vsel %vm900, %v932, 0.0
          %v965 = vsel %vm901, %v933, 0.0
          %v966 = vsel %vm902, %v934, 0.0
          %v967 = vsel %vm903, %v935, 0.0
          %v968 = vsel %vm904, %v936, 0.0
          %v969 = vsel %vm905, %v937, 0.0
          %v970 = vsel %vm906, %v938, 0.0
          %v971 = vsel %vm907, %v939, 0.0
          %v972 = vsel %vm908, %v940, 0.0
          %v973 = vpack.c.bf16 %v942, %v941
          %v974 = vpack.c.bf16 %v944, %v943
          %v975 = vpack.c.bf16 %v946, %v945
          %v976 = vpack.c.bf16 %v948, %v947
          %v977 = vpack.c.bf16 %v950, %v949
          %v978 = vpack.c.bf16 %v952, %v951
          %v979 = vpack.c.bf16 %v954, %v953
          %v980 = vpack.c.bf16 %v956, %v955
          %v981 = vpack.c.bf16 %v958, %v957
          %v982 = vpack.c.bf16 %v960, %v959
          %v983 = vpack.c.bf16 %v962, %v961
          %v984 = vpack.c.bf16 %v964, %v963
          %v985 = vpack.c.bf16 %v966, %v965
          %v986 = vpack.c.bf16 %v968, %v967
          %v987 = vpack.c.bf16 %v970, %v969
          %v988 = vpack.c.bf16 %v972, %v971
          %vm989 = vcmp.ne.s32.totalorder %v829, 15
          %vm990 = vcmp.ne.s32.totalorder %v830, 15
          %vm991 = vcmp.ne.s32.totalorder %v831, 15
          %vm992 = vcmp.ne.s32.totalorder %v832, 15
          %vm993 = vcmp.ne.s32.totalorder %v833, 15
          %vm994 = vcmp.ne.s32.totalorder %v834, 15
          %vm995 = vcmp.ne.s32.totalorder %v835, 15
          %vm996 = vcmp.ne.s32.totalorder %v836, 15
          %vm997 = vcmp.ne.s32.totalorder %v837, 15
          %vm998 = vcmp.ne.s32.totalorder %v838, 15
          %vm999 = vcmp.ne.s32.totalorder %v839, 15
          %vm1000 = vcmp.ne.s32.totalorder %v840, 15
          %vm1001 = vcmp.ne.s32.totalorder %v841, 15
          %vm1002 = vcmp.ne.s32.totalorder %v842, 15
          %vm1003 = vcmp.ne.s32.totalorder %v843, 15
          %vm1004 = vcmp.ne.s32.totalorder %v844, 15
          %vm1005 = vcmp.ne.s32.totalorder %v845, 15
          %vm1006 = vcmp.ne.s32.totalorder %v846, 15
          %vm1007 = vcmp.ne.s32.totalorder %v847, 15
          %vm1008 = vcmp.ne.s32.totalorder %v848, 15
          %vm1009 = vcmp.ne.s32.totalorder %v849, 15
          %vm1010 = vcmp.ne.s32.totalorder %v850, 15
          %vm1011 = vcmp.ne.s32.totalorder %v851, 15
          %vm1012 = vcmp.ne.s32.totalorder %v852, 15
          %vm1013 = vcmp.ne.s32.totalorder %v853, 15
          %vm1014 = vcmp.ne.s32.totalorder %v854, 15
          %vm1015 = vcmp.ne.s32.totalorder %v855, 15
          %vm1016 = vcmp.ne.s32.totalorder %v856, 15
          %vm1017 = vcmp.ne.s32.totalorder %v857, 15
          %vm1018 = vcmp.ne.s32.totalorder %v858, 15
          %vm1019 = vcmp.ne.s32.totalorder %v859, 15
          %vm1020 = vcmp.ne.s32.totalorder %v860, 15
          %v1021 = vld [vmem:[#allocation2 + $0x9] sm:$0xff]
          %v1022 = vld [vmem:[#allocation2 + $0x11] sm:$0xff]
          %v1023 = vld [vmem:[#allocation2 + $0x19] sm:$0xff]
          %v1024 = vld [vmem:[#allocation2 + $0x21] sm:$0xff]
          %v1025 = vld [vmem:[#allocation2 + $0x29] sm:$0xff]
          %v1026 = vld [vmem:[#allocation2 + $0x31] sm:$0xff]
          %v1027 = vld [vmem:[#allocation2 + $0x39] sm:$0xff]
          %v1028 = vld [vmem:[#allocation2 + $0x41] sm:$0xff]
          %v1029 = vld [vmem:[#allocation2 + $0x49] sm:$0xff]
          %v1030 = vld [vmem:[#allocation2 + $0x51] sm:$0xff]
          %v1031 = vld [vmem:[#allocation2 + $0x59] sm:$0xff]
          %v1032 = vld [vmem:[#allocation2 + $0x61] sm:$0xff]
          %v1033 = vld [vmem:[#allocation2 + $0x69] sm:$0xff]
          %v1034 = vld [vmem:[#allocation2 + $0x71] sm:$0xff]
          %v1035 = vld [vmem:[#allocation2 + $0x79] sm:$0xff]
          %v1036 = vld [vmem:[#allocation2 + $0x81] sm:$0xff]
          %v1037 = vld [vmem:[#allocation2 + $0x89] sm:$0xff]
          %v1038 = vld [vmem:[#allocation2 + $0x91] sm:$0xff]
          %v1039 = vld [vmem:[#allocation2 + $0x99] sm:$0xff]
          %v1040 = vld [vmem:[#allocation2 + $0xa1] sm:$0xff]
          %v1041 = vld [vmem:[#allocation2 + $0xa9] sm:$0xff]
          %v1042 = vld [vmem:[#allocation2 + $0xb1] sm:$0xff]
          %v1043 = vld [vmem:[#allocation2 + $0xb9] sm:$0xff]
          %v1044 = vld [vmem:[#allocation2 + $0xc1] sm:$0xff]
          %v1045 = vld [vmem:[#allocation2 + $0xc9] sm:$0xff]
          %v1046 = vld [vmem:[#allocation2 + $0xd1] sm:$0xff]
          %v1047 = vld [vmem:[#allocation2 + $0xd9] sm:$0xff]
          %v1048 = vld [vmem:[#allocation2 + $0xe1] sm:$0xff]
          %v1049 = vld [vmem:[#allocation2 + $0xe9] sm:$0xff]
          %v1050 = vld [vmem:[#allocation2 + $0xf1] sm:$0xff]
          %v1051 = vld [vmem:[#allocation2 + $0xf9] sm:$0xff]
          %v1052 = vld [vmem:[#allocation2 + $0x101] sm:$0xff]
          %v1053 = vsel %vm989, %v1021, 0.0
          %v1054 = vsel %vm990, %v1022, 0.0
          %v1055 = vsel %vm991, %v1023, 0.0
          %v1056 = vsel %vm992, %v1024, 0.0
          %v1057 = vsel %vm993, %v1025, 0.0
          %v1058 = vsel %vm994, %v1026, 0.0
          %v1059 = vsel %vm995, %v1027, 0.0
          %v1060 = vsel %vm996, %v1028, 0.0
          %v1061 = vsel %vm997, %v1029, 0.0
          %v1062 = vsel %vm998, %v1030, 0.0
          %v1063 = vsel %vm999, %v1031, 0.0
          %v1064 = vsel %vm1000, %v1032, 0.0
          %v1065 = vsel %vm1001, %v1033, 0.0
          %v1066 = vsel %vm1002, %v1034, 0.0
          %v1067 = vsel %vm1003, %v1035, 0.0
          %v1068 = vsel %vm1004, %v1036, 0.0
          %v1069 = vsel %vm1005, %v1037, 0.0
          %v1070 = vsel %vm1006, %v1038, 0.0
          %v1071 = vsel %vm1007, %v1039, 0.0
          %v1072 = vsel %vm1008, %v1040, 0.0
          %v1073 = vsel %vm1009, %v1041, 0.0
          %v1074 = vsel %vm1010, %v1042, 0.0
          %v1075 = vsel %vm1011, %v1043, 0.0
          %v1076 = vsel %vm1012, %v1044, 0.0
          %v1077 = vsel %vm1013, %v1045, 0.0
          %v1078 = vsel %vm1014, %v1046, 0.0
          %v1079 = vsel %vm1015, %v1047, 0.0
          %v1080 = vsel %vm1016, %v1048, 0.0
          %v1081 = vsel %vm1017, %v1049, 0.0
          %v1082 = vsel %vm1018, %v1050, 0.0
          %v1083 = vsel %vm1019, %v1051, 0.0
          %v1084 = vsel %vm1020, %v1052, 0.0
          %v1085 = vpack.c.bf16 %v1054, %v1053
          %v1086 = vpack.c.bf16 %v1056, %v1055
          %v1087 = vpack.c.bf16 %v1058, %v1057
          %v1088 = vpack.c.bf16 %v1060, %v1059
          %v1089 = vpack.c.bf16 %v1062, %v1061
          %v1090 = vpack.c.bf16 %v1064, %v1063
          %v1091 = vpack.c.bf16 %v1066, %v1065
          %v1092 = vpack.c.bf16 %v1068, %v1067
          %v1093 = vpack.c.bf16 %v1070, %v1069
          %v1094 = vpack.c.bf16 %v1072, %v1071
          %v1095 = vpack.c.bf16 %v1074, %v1073
          %v1096 = vpack.c.bf16 %v1076, %v1075
          %v1097 = vpack.c.bf16 %v1078, %v1077
          %v1098 = vpack.c.bf16 %v1080, %v1079
          %v1099 = vpack.c.bf16 %v1082, %v1081
          %v1100 = vpack.c.bf16 %v1084, %v1083
          %1117 = vrot.lane.b32.xlu0 %v861, 64
          %v1118 = vpop.permute.xlu0 %1117
          %1119 = vrot.lane.b32.xlu0 %v862, 64
          %v1120 = vpop.permute.xlu0 %1119
          %1121 = vrot.lane.b32.xlu0 %v863, 64
          %v1122 = vpop.permute.xlu0 %1121
          %1123 = vrot.lane.b32.xlu0 %v864, 64
          %v1124 = vpop.permute.xlu0 %1123
          %1125 = vrot.lane.b32.xlu0 %v865, 64
          %v1126 = vpop.permute.xlu0 %1125
          %1127 = vrot.lane.b32.xlu0 %v866, 64
          %v1128 = vpop.permute.xlu0 %1127
          %1129 = vrot.lane.b32.xlu0 %v867, 64
          %v1130 = vpop.permute.xlu0 %1129
          %1131 = vrot.lane.b32.xlu0 %v868, 64
          %v1132 = vpop.permute.xlu0 %1131
          %1133 = vrot.lane.b32.xlu0 %v869, 64
          %v1134 = vpop.permute.xlu0 %1133
          %1135 = vrot.lane.b32.xlu0 %v870, 64
          %v1136 = vpop.permute.xlu0 %1135
          %1137 = vrot.lane.b32.xlu0 %v871, 64
          %v1138 = vpop.permute.xlu0 %1137
          %1139 = vrot.lane.b32.xlu0 %v872, 64
          %v1140 = vpop.permute.xlu0 %1139
          %1141 = vrot.lane.b32.xlu0 %v873, 64
          %v1142 = vpop.permute.xlu0 %1141
          %1143 = vrot.lane.b32.xlu0 %v874, 64
          %v1144 = vpop.permute.xlu0 %1143
          %1145 = vrot.lane.b32.xlu0 %v875, 64
          %v1146 = vpop.permute.xlu0 %1145
          %1147 = vrot.lane.b32.xlu0 %v876, 64
          %v1148 = vpop.permute.xlu0 %1147
          %v1151 = vsel %vm332, %v973, %v1118
          %v1154 = vsel %vm332, %v974, %v1120
          %v1157 = vsel %vm332, %v975, %v1122
          %v1160 = vsel %vm332, %v976, %v1124
          %v1163 = vsel %vm332, %v977, %v1126
          %v1166 = vsel %vm332, %v978, %v1128
          %v1169 = vsel %vm332, %v979, %v1130
          %v1172 = vsel %vm332, %v980, %v1132
          %v1175 = vsel %vm332, %v981, %v1134
          %v1178 = vsel %vm332, %v982, %v1136
          %v1181 = vsel %vm332, %v983, %v1138
          %v1184 = vsel %vm332, %v984, %v1140
          %v1187 = vsel %vm332, %v985, %v1142
          %v1190 = vsel %vm332, %v986, %v1144
          %v1193 = vsel %vm332, %v987, %v1146
          %v1196 = vsel %vm332, %v988, %v1148
          %v1213 = vunpack.c.l.b16 %v1151
          %v1214 = vunpack.c.h.b16 %v1151
          %v1215 = vunpack.c.l.b16 %v1154
          %v1216 = vunpack.c.h.b16 %v1154
          %v1217 = vunpack.c.l.b16 %v1157
          %v1218 = vunpack.c.h.b16 %v1157
          %v1219 = vunpack.c.l.b16 %v1160
          %v1220 = vunpack.c.h.b16 %v1160
          %v1221 = vunpack.c.l.b16 %v1163
          %v1222 = vunpack.c.h.b16 %v1163
          %v1223 = vunpack.c.l.b16 %v1166
          %v1224 = vunpack.c.h.b16 %v1166
          %v1225 = vunpack.c.l.b16 %v1169
          %v1226 = vunpack.c.h.b16 %v1169
          %v1227 = vunpack.c.l.b16 %v1172
          %v1228 = vunpack.c.h.b16 %v1172
          %v1229 = vunpack.c.l.b16 %v1175
          %v1230 = vunpack.c.h.b16 %v1175
          %v1231 = vunpack.c.l.b16 %v1178
          %v1232 = vunpack.c.h.b16 %v1178
          %v1233 = vunpack.c.l.b16 %v1181
          %v1234 = vunpack.c.h.b16 %v1181
          %v1235 = vunpack.c.l.b16 %v1184
          %v1236 = vunpack.c.h.b16 %v1184
          %v1237 = vunpack.c.l.b16 %v1187
          %v1238 = vunpack.c.h.b16 %v1187
          %v1239 = vunpack.c.l.b16 %v1190
          %v1240 = vunpack.c.h.b16 %v1190
          %v1241 = vunpack.c.l.b16 %v1193
          %v1242 = vunpack.c.h.b16 %v1193
          %v1243 = vunpack.c.l.b16 %v1196
          %v1244 = vunpack.c.h.b16 %v1196
          %v1245 = vpack.c.b16 %v1213, %v1213
          %v1246 = vpack.c.b16 %v1214, %v1214
          %v1247 = vpack.c.b16 %v1215, %v1215
          %v1248 = vpack.c.b16 %v1216, %v1216
          %v1249 = vpack.c.b16 %v1217, %v1217
          %v1250 = vpack.c.b16 %v1218, %v1218
          %v1251 = vpack.c.b16 %v1219, %v1219
          %v1252 = vpack.c.b16 %v1220, %v1220
          %v1253 = vpack.c.b16 %v1221, %v1221
          %v1254 = vpack.c.b16 %v1222, %v1222
          %v1255 = vpack.c.b16 %v1223, %v1223
          %v1256 = vpack.c.b16 %v1224, %v1224
          %v1257 = vpack.c.b16 %v1225, %v1225
          %v1258 = vpack.c.b16 %v1226, %v1226
          %v1259 = vpack.c.b16 %v1227, %v1227
          %v1260 = vpack.c.b16 %v1228, %v1228
          %v1261 = vpack.c.b16 %v1229, %v1229
          %v1262 = vpack.c.b16 %v1230, %v1230
          %v1263 = vpack.c.b16 %v1231, %v1231
          %v1264 = vpack.c.b16 %v1232, %v1232
          %v1265 = vpack.c.b16 %v1233, %v1233
          %v1266 = vpack.c.b16 %v1234, %v1234
          %v1267 = vpack.c.b16 %v1235, %v1235
          %v1268 = vpack.c.b16 %v1236, %v1236
          %v1269 = vpack.c.b16 %v1237, %v1237
          %v1270 = vpack.c.b16 %v1238, %v1238
          %v1271 = vpack.c.b16 %v1239, %v1239
          %v1272 = vpack.c.b16 %v1240, %v1240
          %v1273 = vpack.c.b16 %v1241, %v1241
          %v1274 = vpack.c.b16 %v1242, %v1242
          %v1275 = vpack.c.b16 %v1243, %v1243
          %v1276 = vpack.c.b16 %v1244, %v1244
          %1309 = vst [vmem:[#allocation3 + $0x10] sm:$0xf] %v1245
          %1310 = vst [vmem:[#allocation3 + $0x18] sm:$0xf] %v1246
          %1311 = vst [vmem:[#allocation3 + $0x20] sm:$0xf] %v1247
          %1312 = vst [vmem:[#allocation3 + $0x28] sm:$0xf] %v1248
          %1313 = vst [vmem:[#allocation3 + $0x30] sm:$0xf] %v1249
          %1314 = vst [vmem:[#allocation3 + $0x38] sm:$0xf] %v1250
          %1315 = vst [vmem:[#allocation3 + $0x40] sm:$0xf] %v1251
          %1316 = vst [vmem:[#allocation3 + $0x48] sm:$0xf] %v1252
          %1317 = vst [vmem:[#allocation3 + $0x50] sm:$0xf] %v1253
          %1318 = vst [vmem:[#allocation3 + $0x58] sm:$0xf] %v1254
          %1319 = vst [vmem:[#allocation3 + $0x60] sm:$0xf] %v1255
          %1320 = vst [vmem:[#allocation3 + $0x68] sm:$0xf] %v1256
          %1321 = vst [vmem:[#allocation3 + $0x70] sm:$0xf] %v1257
          %1322 = vst [vmem:[#allocation3 + $0x78] sm:$0xf] %v1258
          %1323 = vst [vmem:[#allocation3 + $0x80] sm:$0xf] %v1259
          %1324 = vst [vmem:[#allocation3 + $0x88] sm:$0xf] %v1260
          %1325 = vst [vmem:[#allocation3 + $0x90] sm:$0xf] %v1261
          %1326 = vst [vmem:[#allocation3 + $0x98] sm:$0xf] %v1262
          %1327 = vst [vmem:[#allocation3 + $0xa0] sm:$0xf] %v1263
          %1328 = vst [vmem:[#allocation3 + $0xa8] sm:$0xf] %v1264
          %1329 = vst [vmem:[#allocation3 + $0xb0] sm:$0xf] %v1265
          %1330 = vst [vmem:[#allocation3 + $0xb8] sm:$0xf] %v1266
          %1331 = vst [vmem:[#allocation3 + $0xc0] sm:$0xf] %v1267
          %1332 = vst [vmem:[#allocation3 + $0xc8] sm:$0xf] %v1268
          %1333 = vst [vmem:[#allocation3 + $0xd0] sm:$0xf] %v1269
          %1334 = vst [vmem:[#allocation3 + $0xd8] sm:$0xf] %v1270
          %1335 = vst [vmem:[#allocation3 + $0xe0] sm:$0xf] %v1271
          %1336 = vst [vmem:[#allocation3 + $0xe8] sm:$0xf] %v1272
          %1337 = vst [vmem:[#allocation3 + $0xf0] sm:$0xf] %v1273
          %1338 = vst [vmem:[#allocation3 + $0xf8] sm:$0xf] %v1274
          %1339 = vst [vmem:[#allocation3 + $0x100] sm:$0xf] %v1275
          %1340 = vst [vmem:[#allocation3 + $0x108] sm:$0xf] %v1276
          %v1357 = vunpack.c.l.b16 %v1085
          %v1358 = vunpack.c.h.b16 %v1085
          %v1359 = vunpack.c.l.b16 %v1086
          %v1360 = vunpack.c.h.b16 %v1086
          %v1361 = vunpack.c.l.b16 %v1087
          %v1362 = vunpack.c.h.b16 %v1087
          %v1363 = vunpack.c.l.b16 %v1088
          %v1364 = vunpack.c.h.b16 %v1088
          %v1365 = vunpack.c.l.b16 %v1089
          %v1366 = vunpack.c.h.b16 %v1089
          %v1367 = vunpack.c.l.b16 %v1090
          %v1368 = vunpack.c.h.b16 %v1090
          %v1369 = vunpack.c.l.b16 %v1091
          %v1370 = vunpack.c.h.b16 %v1091
          %v1371 = vunpack.c.l.b16 %v1092
          %v1372 = vunpack.c.h.b16 %v1092
          %v1373 = vunpack.c.l.b16 %v1093
          %v1374 = vunpack.c.h.b16 %v1093
          %v1375 = vunpack.c.l.b16 %v1094
          %v1376 = vunpack.c.h.b16 %v1094
          %v1377 = vunpack.c.l.b16 %v1095
          %v1378 = vunpack.c.h.b16 %v1095
          %v1379 = vunpack.c.l.b16 %v1096
          %v1380 = vunpack.c.h.b16 %v1096
          %v1381 = vunpack.c.l.b16 %v1097
          %v1382 = vunpack.c.h.b16 %v1097
          %v1383 = vunpack.c.l.b16 %v1098
          %v1384 = vunpack.c.h.b16 %v1098
          %v1385 = vunpack.c.l.b16 %v1099
          %v1386 = vunpack.c.h.b16 %v1099
          %v1387 = vunpack.c.l.b16 %v1100
          %v1388 = vunpack.c.h.b16 %v1100
          %v1389 = vpack.c.b16 %v1357, %v1357
          %v1390 = vpack.c.b16 %v1358, %v1358
          %v1391 = vpack.c.b16 %v1359, %v1359
          %v1392 = vpack.c.b16 %v1360, %v1360
          %v1393 = vpack.c.b16 %v1361, %v1361
          %v1394 = vpack.c.b16 %v1362, %v1362
          %v1395 = vpack.c.b16 %v1363, %v1363
          %v1396 = vpack.c.b16 %v1364, %v1364
          %v1397 = vpack.c.b16 %v1365, %v1365
          %v1398 = vpack.c.b16 %v1366, %v1366
          %v1399 = vpack.c.b16 %v1367, %v1367
          %v1400 = vpack.c.b16 %v1368, %v1368
          %v1401 = vpack.c.b16 %v1369, %v1369
          %v1402 = vpack.c.b16 %v1370, %v1370
          %v1403 = vpack.c.b16 %v1371, %v1371
          %v1404 = vpack.c.b16 %v1372, %v1372
          %v1405 = vpack.c.b16 %v1373, %v1373
          %v1406 = vpack.c.b16 %v1374, %v1374
          %v1407 = vpack.c.b16 %v1375, %v1375
          %v1408 = vpack.c.b16 %v1376, %v1376
          %v1409 = vpack.c.b16 %v1377, %v1377
          %v1410 = vpack.c.b16 %v1378, %v1378
          %v1411 = vpack.c.b16 %v1379, %v1379
          %v1412 = vpack.c.b16 %v1380, %v1380
          %v1413 = vpack.c.b16 %v1381, %v1381
          %v1414 = vpack.c.b16 %v1382, %v1382
          %v1415 = vpack.c.b16 %v1383, %v1383
          %v1416 = vpack.c.b16 %v1384, %v1384
          %v1417 = vpack.c.b16 %v1385, %v1385
          %v1418 = vpack.c.b16 %v1386, %v1386
          %v1419 = vpack.c.b16 %v1387, %v1387
          %v1420 = vpack.c.b16 %v1388, %v1388
          %vm1453 = vcmask 519168
          %1454 = vst.msk [vmem:[#allocation3 + $0x14] sm:$0xf] %vm1453, %v1389
          %1455 = vst.msk [vmem:[#allocation3 + $0x1c] sm:$0xf] %vm1453, %v1390
          %1456 = vst.msk [vmem:[#allocation3 + $0x24] sm:$0xf] %vm1453, %v1391
          %1457 = vst.msk [vmem:[#allocation3 + $0x2c] sm:$0xf] %vm1453, %v1392
          %1458 = vst.msk [vmem:[#allocation3 + $0x34] sm:$0xf] %vm1453, %v1393
          %1459 = vst.msk [vmem:[#allocation3 + $0x3c] sm:$0xf] %vm1453, %v1394
          %1460 = vst.msk [vmem:[#allocation3 + $0x44] sm:$0xf] %vm1453, %v1395
          %1461 = vst.msk [vmem:[#allocation3 + $0x4c] sm:$0xf] %vm1453, %v1396
          %1462 = vst.msk [vmem:[#allocation3 + $0x54] sm:$0xf] %vm1453, %v1397
          %1463 = vst.msk [vmem:[#allocation3 + $0x5c] sm:$0xf] %vm1453, %v1398
          %1464 = vst.msk [vmem:[#allocation3 + $0x64] sm:$0xf] %vm1453, %v1399
          %1465 = vst.msk [vmem:[#allocation3 + $0x6c] sm:$0xf] %vm1453, %v1400
          %1466 = vst.msk [vmem:[#allocation3 + $0x74] sm:$0xf] %vm1453, %v1401
          %1467 = vst.msk [vmem:[#allocation3 + $0x7c] sm:$0xf] %vm1453, %v1402
          %1468 = vst.msk [vmem:[#allocation3 + $0x84] sm:$0xf] %vm1453, %v1403
          %1469 = vst.msk [vmem:[#allocation3 + $0x8c] sm:$0xf] %vm1453, %v1404
          %1470 = vst.msk [vmem:[#allocation3 + $0x94] sm:$0xf] %vm1453, %v1405
          %1471 = vst.msk [vmem:[#allocation3 + $0x9c] sm:$0xf] %vm1453, %v1406
          %1472 = vst.msk [vmem:[#allocation3 + $0xa4] sm:$0xf] %vm1453, %v1407
          %1473 = vst.msk [vmem:[#allocation3 + $0xac] sm:$0xf] %vm1453, %v1408
          %1474 = vst.msk [vmem:[#allocation3 + $0xb4] sm:$0xf] %vm1453, %v1409
          %1475 = vst.msk [vmem:[#allocation3 + $0xbc] sm:$0xf] %vm1453, %v1410
          %1476 = vst.msk [vmem:[#allocation3 + $0xc4] sm:$0xf] %vm1453, %v1411
          %1477 = vst.msk [vmem:[#allocation3 + $0xcc] sm:$0xf] %vm1453, %v1412
          %1478 = vst.msk [vmem:[#allocation3 + $0xd4] sm:$0xf] %vm1453, %v1413
          %1479 = vst.msk [vmem:[#allocation3 + $0xdc] sm:$0xf] %vm1453, %v1414
          %1480 = vst.msk [vmem:[#allocation3 + $0xe4] sm:$0xf] %vm1453, %v1415
          %1481 = vst.msk [vmem:[#allocation3 + $0xec] sm:$0xf] %vm1453, %v1416
          %1482 = vst.msk [vmem:[#allocation3 + $0xf4] sm:$0xf] %vm1453, %v1417
          %1483 = vst.msk [vmem:[#allocation3 + $0xfc] sm:$0xf] %vm1453, %v1418
          %1484 = vst.msk [vmem:[#allocation3 + $0x104] sm:$0xf] %vm1453, %v1419
          %1485 = vst.msk [vmem:[#allocation3 + $0x10c] sm:$0xf] %vm1453, %v1420
          %v1486 = vld [vmem:[#allocation3] sm:$0xff]
          %v1487 = vld [vmem:[#allocation3 + $0x8] sm:$0xff]
          %v1488 = vld [vmem:[#allocation3 + $0x10] sm:$0xff]
          %v1489 = vld [vmem:[#allocation3 + $0x18] sm:$0xff]
          %v1490 = vld [vmem:[#allocation3 + $0x20] sm:$0xff]
          %v1491 = vld [vmem:[#allocation3 + $0x28] sm:$0xff]
          %v1492 = vld [vmem:[#allocation3 + $0x30] sm:$0xff]
          %v1493 = vld [vmem:[#allocation3 + $0x38] sm:$0xff]
          %v1494 = vld [vmem:[#allocation3 + $0x40] sm:$0xff]
          %v1495 = vld [vmem:[#allocation3 + $0x48] sm:$0xff]
          %v1496 = vld [vmem:[#allocation3 + $0x50] sm:$0xff]
          %v1497 = vld [vmem:[#allocation3 + $0x58] sm:$0xff]
          %v1498 = vld [vmem:[#allocation3 + $0x60] sm:$0xff]
          %v1499 = vld [vmem:[#allocation3 + $0x68] sm:$0xff]
          %v1500 = vld [vmem:[#allocation3 + $0x70] sm:$0xff]
          %v1501 = vld [vmem:[#allocation3 + $0x78] sm:$0xff]
          %v1502 = vld [vmem:[#allocation3 + $0x80] sm:$0xff]
          %v1503 = vld [vmem:[#allocation3 + $0x88] sm:$0xff]
          %v1504 = vld [vmem:[#allocation3 + $0x90] sm:$0xff]
          %v1505 = vld [vmem:[#allocation3 + $0x98] sm:$0xff]
          %v1506 = vld [vmem:[#allocation3 + $0xa0] sm:$0xff]
          %v1507 = vld [vmem:[#allocation3 + $0xa8] sm:$0xff]
          %v1508 = vld [vmem:[#allocation3 + $0xb0] sm:$0xff]
          %v1509 = vld [vmem:[#allocation3 + $0xb8] sm:$0xff]
          %v1510 = vld [vmem:[#allocation3 + $0xc0] sm:$0xff]
          %v1511 = vld [vmem:[#allocation3 + $0xc8] sm:$0xff]
          %v1512 = vld [vmem:[#allocation3 + $0xd0] sm:$0xff]
          %v1513 = vld [vmem:[#allocation3 + $0xd8] sm:$0xff]
          %v1514 = vld [vmem:[#allocation3 + $0xe0] sm:$0xff]
          %v1515 = vld [vmem:[#allocation3 + $0xe8] sm:$0xff]
          %v1516 = vld [vmem:[#allocation3 + $0xf0] sm:$0xff]
          %v1517 = vld [vmem:[#allocation3 + $0xf8] sm:$0xff]
          %s1518 = smul.u32 %s375, 3
          %s1519 = smul.u32 %s1518, 24
          %s1520 = smul.addr %s1519, 4
          %s1521 = scalar_lea.vmem %s1, %s1520
          %v1522 = vld [vmem:[%s1521] sm:$0xf]
          %v1523 = vld [vmem:[%s1521 + $0x4] sm:$0xf]
          %v1524 = vld [vmem:[%s1521 + $0x8] sm:$0xf]
          %v1525 = vld [vmem:[%s1521 + $0xc] sm:$0xf]
          %v1526 = vld [vmem:[%s1521 + $0x10] sm:$0xf]
          %v1527 = vld [vmem:[%s1521 + $0x14] sm:$0xf]
          %v1528 = vld [vmem:[%s1521 + $0x18] sm:$0xf]
          %v1529 = vld [vmem:[%s1521 + $0x1c] sm:$0xf]
          %v1530 = vld [vmem:[%s1521 + $0x20] sm:$0xf]
          %v1531 = vld [vmem:[%s1521 + $0x24] sm:$0xf]
          %v1532 = vld [vmem:[%s1521 + $0x28] sm:$0xf]
          %v1533 = vld [vmem:[%s1521 + $0x2c] sm:$0xf]
          %v1534 = vld [vmem:[%s1521 + $0x30] sm:$0xf]
          %v1535 = vld [vmem:[%s1521 + $0x34] sm:$0xf]
          %v1536 = vld [vmem:[%s1521 + $0x38] sm:$0xf]
          %v1537 = vld [vmem:[%s1521 + $0x3c] sm:$0xf]
          %v1538 = vld [vmem:[%s1521 + $0x40] sm:$0xf]
          %v1539 = vld [vmem:[%s1521 + $0x44] sm:$0xf]
          %v1540 = vld [vmem:[%s1521 + $0x48] sm:$0xf]
          %v1541 = vld [vmem:[%s1521 + $0x4c] sm:$0xf]
          %v1542 = vld [vmem:[%s1521 + $0x50] sm:$0xf]
          %v1543 = vld [vmem:[%s1521 + $0x54] sm:$0xf]
          %v1544 = vld [vmem:[%s1521 + $0x58] sm:$0xf]
          %v1545 = vld [vmem:[%s1521 + $0x5c] sm:$0xf]
          %v1546 = vld [vmem:[#allocation3 + $0x100] sm:$0xff]
          %v1547 = vld [vmem:[#allocation3 + $0x108] sm:$0xff]
          %s1548 = sadd.s32 %s1518, 1
          %s1549 = smul.u32 %s1548, 24
          %s1550 = smul.addr %s1549, 4
          %s1551 = scalar_lea.vmem %s1, %s1550
          %v1552 = vld [vmem:[%s1551] sm:$0xf]
          %v1553 = vld [vmem:[%s1551 + $0x4] sm:$0xf]
          %v1554 = vld [vmem:[%s1551 + $0x8] sm:$0xf]
          %v1555 = vld [vmem:[%s1551 + $0xc] sm:$0xf]
          %v1556 = vld [vmem:[%s1551 + $0x10] sm:$0xf]
          %v1557 = vld [vmem:[%s1551 + $0x14] sm:$0xf]
          %v1558 = vld [vmem:[%s1551 + $0x18] sm:$0xf]
          %v1559 = vld [vmem:[%s1551 + $0x1c] sm:$0xf]
          %v1560 = vld [vmem:[%s1551 + $0x20] sm:$0xf]
          %v1561 = vld [vmem:[%s1551 + $0x24] sm:$0xf]
          %v1562 = vld [vmem:[%s1551 + $0x28] sm:$0xf]
          %v1563 = vld [vmem:[%s1551 + $0x2c] sm:$0xf]
          %v1564 = vld [vmem:[%s1551 + $0x30] sm:$0xf]
          %v1565 = vld [vmem:[%s1551 + $0x34] sm:$0xf]
          %v1566 = vld [vmem:[%s1551 + $0x38] sm:$0xf]
          %v1567 = vld [vmem:[%s1551 + $0x3c] sm:$0xf]
          %v1568 = vld [vmem:[%s1551 + $0x40] sm:$0xf]
          %v1569 = vld [vmem:[%s1551 + $0x44] sm:$0xf]
          %v1570 = vld [vmem:[%s1551 + $0x48] sm:$0xf]
          %v1571 = vld [vmem:[%s1551 + $0x4c] sm:$0xf]
          %v1572 = vld [vmem:[%s1551 + $0x50] sm:$0xf]
          %v1573 = vld [vmem:[%s1551 + $0x54] sm:$0xf]
          %v1574 = vld [vmem:[%s1551 + $0x58] sm:$0xf]
          %v1575 = vld [vmem:[%s1551 + $0x5c] sm:$0xf]
          %v1608 = vunpack.c.l.b16 %v1488
          %v1609 = vunpack.c.h.b16 %v1488
          %v1610 = vunpack.c.l.b16 %v1489
          %v1611 = vunpack.c.h.b16 %v1489
          %v1612 = vunpack.c.l.b16 %v1490
          %v1613 = vunpack.c.h.b16 %v1490
          %v1614 = vunpack.c.l.b16 %v1491
          %v1615 = vunpack.c.h.b16 %v1491
          %v1616 = vunpack.c.l.b16 %v1492
          %v1617 = vunpack.c.h.b16 %v1492
          %v1618 = vunpack.c.l.b16 %v1493
          %v1619 = vunpack.c.h.b16 %v1493
          %v1620 = vunpack.c.l.b16 %v1494
          %v1621 = vunpack.c.h.b16 %v1494
          %v1622 = vunpack.c.l.b16 %v1495
          %v1623 = vunpack.c.h.b16 %v1495
          %v1624 = vunpack.c.l.b16 %v1496
          %v1625 = vunpack.c.h.b16 %v1496
          %v1626 = vunpack.c.l.b16 %v1497
          %v1627 = vunpack.c.h.b16 %v1497
          %v1628 = vunpack.c.l.b16 %v1498
          %v1629 = vunpack.c.h.b16 %v1498
          %v1630 = vunpack.c.l.b16 %v1499
          %v1631 = vunpack.c.h.b16 %v1499
          %v1632 = vunpack.c.l.b16 %v1500
          %v1633 = vunpack.c.h.b16 %v1500
          %v1634 = vunpack.c.l.b16 %v1501
          %v1635 = vunpack.c.h.b16 %v1501
          %v1636 = vunpack.c.l.b16 %v1502
          %v1637 = vunpack.c.h.b16 %v1502
          %v1638 = vunpack.c.l.b16 %v1503
          %v1639 = vunpack.c.h.b16 %v1503
          %v1640 = vunpack.c.l.b16 %v1504
          %v1641 = vunpack.c.h.b16 %v1504
          %v1642 = vunpack.c.l.b16 %v1505
          %v1643 = vunpack.c.h.b16 %v1505
          %v1644 = vunpack.c.l.b16 %v1506
          %v1645 = vunpack.c.h.b16 %v1506
          %v1646 = vunpack.c.l.b16 %v1507
          %v1647 = vunpack.c.h.b16 %v1507
          %v1648 = vunpack.c.l.b16 %v1508
          %v1649 = vunpack.c.h.b16 %v1508
          %v1650 = vunpack.c.l.b16 %v1509
          %v1651 = vunpack.c.h.b16 %v1509
          %v1652 = vunpack.c.l.b16 %v1510
          %v1653 = vunpack.c.h.b16 %v1510
          %v1654 = vunpack.c.l.b16 %v1511
          %v1655 = vunpack.c.h.b16 %v1511
          %v1656 = vunpack.c.l.b16 %v1512
          %v1657 = vunpack.c.h.b16 %v1512
          %v1658 = vunpack.c.l.b16 %v1513
          %v1659 = vunpack.c.h.b16 %v1513
          %v1660 = vunpack.c.l.b16 %v1514
          %v1661 = vunpack.c.h.b16 %v1514
          %v1662 = vunpack.c.l.b16 %v1515
          %v1663 = vunpack.c.h.b16 %v1515
          %v1664 = vunpack.c.l.b16 %v1516
          %v1665 = vunpack.c.h.b16 %v1516
          %v1666 = vunpack.c.l.b16 %v1517
          %v1667 = vunpack.c.h.b16 %v1517
          %v1668 = vunpack.c.l.b16 %v1546
          %v1669 = vunpack.c.h.b16 %v1546
          %v1670 = vunpack.c.l.b16 %v1547
          %v1671 = vunpack.c.h.b16 %v1547
          %v1672 = vpack.c.b16 %v1610, %v1608
          %v1673 = vpack.c.b16 %v1611, %v1609
          %v1674 = vpack.c.b16 %v1614, %v1612
          %v1675 = vpack.c.b16 %v1615, %v1613
          %v1676 = vpack.c.b16 %v1618, %v1616
          %v1677 = vpack.c.b16 %v1619, %v1617
          %v1678 = vpack.c.b16 %v1622, %v1620
          %v1679 = vpack.c.b16 %v1623, %v1621
          %v1680 = vpack.c.b16 %v1626, %v1624
          %v1681 = vpack.c.b16 %v1627, %v1625
          %v1682 = vpack.c.b16 %v1630, %v1628
          %v1683 = vpack.c.b16 %v1631, %v1629
          %v1684 = vpack.c.b16 %v1634, %v1632
          %v1685 = vpack.c.b16 %v1635, %v1633
          %v1686 = vpack.c.b16 %v1638, %v1636
          %v1687 = vpack.c.b16 %v1639, %v1637
          %v1688 = vpack.c.b16 %v1642, %v1640
          %v1689 = vpack.c.b16 %v1643, %v1641
          %v1690 = vpack.c.b16 %v1646, %v1644
          %v1691 = vpack.c.b16 %v1647, %v1645
          %v1692 = vpack.c.b16 %v1650, %v1648
          %v1693 = vpack.c.b16 %v1651, %v1649
          %v1694 = vpack.c.b16 %v1654, %v1652
          %v1695 = vpack.c.b16 %v1655, %v1653
          %v1696 = vpack.c.b16 %v1658, %v1656
          %v1697 = vpack.c.b16 %v1659, %v1657
          %v1698 = vpack.c.b16 %v1662, %v1660
          %v1699 = vpack.c.b16 %v1663, %v1661
          %v1700 = vpack.c.b16 %v1666, %v1664
          %v1701 = vpack.c.b16 %v1667, %v1665
          %v1702 = vpack.c.b16 %v1670, %v1668
          %v1703 = vpack.c.b16 %v1671, %v1669
          %v1744 = vunpack.c.l.b16 %v1552
          %v1745 = vunpack.c.l.b16 %v1553
          %v1746 = vunpack.c.l.b16 %v1554
          %v1747 = vunpack.c.l.b16 %v1555
          %v1748 = vunpack.c.l.b16 %v1556
          %v1749 = vunpack.c.l.b16 %v1557
          %v1750 = vunpack.c.l.b16 %v1558
          %v1751 = vunpack.c.l.b16 %v1559
          %v1752 = vunpack.c.l.b16 %v1560
          %v1753 = vunpack.c.l.b16 %v1561
          %v1754 = vunpack.c.l.b16 %v1562
          %v1755 = vunpack.c.l.b16 %v1563
          %v1756 = vunpack.c.l.b16 %v1564
          %v1757 = vunpack.c.l.b16 %v1565
          %v1758 = vunpack.c.l.b16 %v1566
          %v1759 = vunpack.c.l.b16 %v1567
          %v1760 = vunpack.c.l.b16 %v1568
          %v1761 = vunpack.c.l.b16 %v1569
          %v1762 = vunpack.c.l.b16 %v1570
          %v1763 = vunpack.c.l.b16 %v1571
          %v1764 = vunpack.c.l.b16 %v1572
          %v1765 = vunpack.c.l.b16 %v1573
          %v1766 = vunpack.c.l.b16 %v1574
          %v1767 = vunpack.c.l.b16 %v1575
          %v1768 = vpack.c.b16 %v1745, %v1744
          %v1769 = vpack.c.b16 %v1747, %v1746
          %v1770 = vpack.c.b16 %v1749, %v1748
          %v1771 = vpack.c.b16 %v1751, %v1750
          %v1772 = vpack.c.b16 %v1753, %v1752
          %v1773 = vpack.c.b16 %v1755, %v1754
          %v1774 = vpack.c.b16 %v1757, %v1756
          %v1775 = vpack.c.b16 %v1759, %v1758
          %v1776 = vpack.c.b16 %v1761, %v1760
          %v1777 = vpack.c.b16 %v1763, %v1762
          %v1778 = vpack.c.b16 %v1765, %v1764
          %v1779 = vpack.c.b16 %v1767, %v1766
          %v1793 = vsel %vm332, %v1673, 0
          %v1796 = vsel %vm332, %v1675, 0
          %v1799 = vsel %vm332, %v1677, 0
          %v1802 = vsel %vm332, %v1679, 0
          %v1805 = vsel %vm332, %v1681, 0
          %v1808 = vsel %vm332, %v1683, 0
          %v1811 = vsel %vm332, %v1685, 0
          %v1814 = vsel %vm332, %v1687, 0
          %v1817 = vsel %vm332, %v1689, 0
          %v1820 = vsel %vm332, %v1691, 0
          %v1823 = vsel %vm332, %v1693, 0
          %v1826 = vsel %vm332, %v1695, 0
          %v1829 = vsel %vm332, %v1697, 0
          %v1832 = vsel %vm332, %v1699, 0
          %v1835 = vsel %vm332, %v1701, 0
          %v1838 = vsel %vm332, %v1703, 0
          %1840 = vmatprep.subr.bf16.mxu0 0
          %1841 = vmatpush1.bf16.msra.mxu0 %v1775
          %1842 = vmatprep.subr.bf16.mxu0 0
          %1843 = vmatpush1.bf16.msra.mxu0 %v1774
          %1844 = vmatprep.subr.bf16.mxu0 0
          %1845 = vmatpush1.bf16.msra.mxu0 %v1773
          %1846 = vmatprep.subr.bf16.mxu0 0
          %1847 = vmatpush1.bf16.msra.mxu0 %v1772
          %1848 = vmatprep.subr.bf16.mxu0 0
          %1849 = vmatpush1.bf16.msra.mxu0 %v1771
          %1850 = vmatprep.subr.bf16.mxu0 0
          %1851 = vmatpush1.bf16.msra.mxu0 %v1770
          %1852 = vmatprep.subr.bf16.mxu0 0
          %1853 = vmatpush1.bf16.msra.mxu0 %v1769
          %1854 = vmatprep.subr.bf16.mxu0 0
          %1855 = vmatpush1.bf16.msra.mxu0 %v1768
          %1856 = vmatprep.subr.bf16.mxu0 0
          %1857 = vmatpush2.bf16.msra.mxu0 0
          %1858 = vmatprep.subr.bf16.mxu0 0
          %1859 = vmatpush2.bf16.msra.mxu0 0
          %1860 = vmatprep.subr.bf16.mxu0 0
          %1861 = vmatpush2.bf16.msra.mxu0 0
          %1862 = vmatprep.subr.bf16.mxu0 0
          %1863 = vmatpush2.bf16.msra.mxu0 0
          %1864 = vmatprep.subr.bf16.mxu0 0
          %1865 = vmatpush2.bf16.msra.mxu0 %v1779
          %1866 = vmatprep.subr.bf16.mxu0 0
          %1867 = vmatpush2.bf16.msra.mxu0 %v1778
          %1868 = vmatprep.subr.bf16.mxu0 0
          %1869 = vmatpush2.bf16.msra.mxu0 %v1777
          %1870 = vmatprep.subr.bf16.mxu0 0
          %1871 = vmatpush2.bf16.msra.mxu0 %v1776
          %1872 = vmatprep.mubr.bf16.mxu0 %v1793
          %1873 = vmatmul.mubr.bf16.gmra.mxu0 %v1672
          %v1874 = vpop.f32.mrf.mxu0
          %v1875 = vadd.f32 0.0, %v1874
          %v1876 = vpop.f32.mrf.mxu0
          %v1877 = vpop.f32.mrf.mxu0
          %v1878 = vadd.f32 0.0, %v1877
          %v1879 = vpop.f32.mrf.mxu0
          %1880 = vmatprep.mubr.bf16.mxu0 %v1796
          %1881 = vmatmul.mubr.bf16.gmra.mxu0 %v1674
          %v1882 = vpop.f32.mrf.mxu0
          %v1883 = vadd.f32 0.0, %v1882
          %v1884 = vpop.f32.mrf.mxu0
          %v1885 = vpop.f32.mrf.mxu0
          %v1886 = vadd.f32 0.0, %v1885
          %v1887 = vpop.f32.mrf.mxu0
          %1888 = vmatprep.mubr.bf16.mxu0 %v1799
          %1889 = vmatmul.mubr.bf16.gmra.mxu0 %v1676
          %v1890 = vpop.f32.mrf.mxu0
          %v1891 = vadd.f32 0.0, %v1890
          %v1892 = vpop.f32.mrf.mxu0
          %v1893 = vpop.f32.mrf.mxu0
          %v1894 = vadd.f32 0.0, %v1893
          %v1895 = vpop.f32.mrf.mxu0
          %1896 = vmatprep.mubr.bf16.mxu0 %v1802
          %1897 = vmatmul.mubr.bf16.gmra.mxu0 %v1678
          %v1898 = vpop.f32.mrf.mxu0
          %v1899 = vadd.f32 0.0, %v1898
          %v1900 = vpop.f32.mrf.mxu0
          %v1901 = vpop.f32.mrf.mxu0
          %v1902 = vadd.f32 0.0, %v1901
          %v1903 = vpop.f32.mrf.mxu0
          %1904 = vmatprep.mubr.bf16.mxu0 %v1805
          %1905 = vmatmul.mubr.bf16.gmra.mxu0 %v1680
          %v1906 = vpop.f32.mrf.mxu0
          %v1907 = vadd.f32 0.0, %v1906
          %v1908 = vpop.f32.mrf.mxu0
          %v1909 = vpop.f32.mrf.mxu0
          %v1910 = vadd.f32 0.0, %v1909
          %v1911 = vpop.f32.mrf.mxu0
          %1912 = vmatprep.mubr.bf16.mxu0 %v1808
          %1913 = vmatmul.mubr.bf16.gmra.mxu0 %v1682
          %v1914 = vpop.f32.mrf.mxu0
          %v1915 = vadd.f32 0.0, %v1914
          %v1916 = vpop.f32.mrf.mxu0
          %v1917 = vpop.f32.mrf.mxu0
          %v1918 = vadd.f32 0.0, %v1917
          %v1919 = vpop.f32.mrf.mxu0
          %1920 = vmatprep.mubr.bf16.mxu0 %v1811
          %1921 = vmatmul.mubr.bf16.gmra.mxu0 %v1684
          %v1922 = vpop.f32.mrf.mxu0
          %v1923 = vadd.f32 0.0, %v1922
          %v1924 = vpop.f32.mrf.mxu0
          %v1925 = vpop.f32.mrf.mxu0
          %v1926 = vadd.f32 0.0, %v1925
          %v1927 = vpop.f32.mrf.mxu0
          %1928 = vmatprep.mubr.bf16.mxu0 %v1814
          %1929 = vmatmul.mubr.bf16.gmra.mxu0 %v1686
          %v1930 = vpop.f32.mrf.mxu0
          %v1931 = vadd.f32 0.0, %v1930
          %v1932 = vpop.f32.mrf.mxu0
          %v1933 = vpop.f32.mrf.mxu0
          %v1934 = vadd.f32 0.0, %v1933
          %v1935 = vpop.f32.mrf.mxu0
          %1936 = vmatprep.mubr.bf16.mxu0 %v1817
          %1937 = vmatmul.mubr.bf16.gmra.mxu0 %v1688
          %v1938 = vpop.f32.mrf.mxu0
          %v1939 = vadd.f32 0.0, %v1938
          %v1940 = vpop.f32.mrf.mxu0
          %v1941 = vpop.f32.mrf.mxu0
          %v1942 = vadd.f32 0.0, %v1941
          %v1943 = vpop.f32.mrf.mxu0
          %1944 = vmatprep.mubr.bf16.mxu0 %v1820
          %1945 = vmatmul.mubr.bf16.gmra.mxu0 %v1690
          %v1946 = vpop.f32.mrf.mxu0
          %v1947 = vadd.f32 0.0, %v1946
          %v1948 = vpop.f32.mrf.mxu0
          %v1949 = vpop.f32.mrf.mxu0
          %v1950 = vadd.f32 0.0, %v1949
          %v1951 = vpop.f32.mrf.mxu0
          %1952 = vmatprep.mubr.bf16.mxu0 %v1823
          %1953 = vmatmul.mubr.bf16.gmra.mxu0 %v1692
          %v1954 = vpop.f32.mrf.mxu0
          %v1955 = vadd.f32 0.0, %v1954
          %v1956 = vpop.f32.mrf.mxu0
          %v1957 = vpop.f32.mrf.mxu0
          %v1958 = vadd.f32 0.0, %v1957
          %v1959 = vpop.f32.mrf.mxu0
          %1960 = vmatprep.mubr.bf16.mxu0 %v1826
          %1961 = vmatmul.mubr.bf16.gmra.mxu0 %v1694
          %v1962 = vpop.f32.mrf.mxu0
          %v1963 = vadd.f32 0.0, %v1962
          %v1964 = vpop.f32.mrf.mxu0
          %v1965 = vpop.f32.mrf.mxu0
          %v1966 = vadd.f32 0.0, %v1965
          %v1967 = vpop.f32.mrf.mxu0
          %1968 = vmatprep.mubr.bf16.mxu0 %v1829
          %1969 = vmatmul.mubr.bf16.gmra.mxu0 %v1696
          %v1970 = vpop.f32.mrf.mxu0
          %v1971 = vadd.f32 0.0, %v1970
          %v1972 = vpop.f32.mrf.mxu0
          %v1973 = vpop.f32.mrf.mxu0
          %v1974 = vadd.f32 0.0, %v1973
          %v1975 = vpop.f32.mrf.mxu0
          %1976 = vmatprep.mubr.bf16.mxu0 %v1832
          %1977 = vmatmul.mubr.bf16.gmra.mxu0 %v1698
          %v1978 = vpop.f32.mrf.mxu0
          %v1979 = vadd.f32 0.0, %v1978
          %v1980 = vpop.f32.mrf.mxu0
          %v1981 = vpop.f32.mrf.mxu0
          %v1982 = vadd.f32 0.0, %v1981
          %v1983 = vpop.f32.mrf.mxu0
          %1984 = vmatprep.mubr.bf16.mxu0 %v1835
          %1985 = vmatmul.mubr.bf16.gmra.mxu0 %v1700
          %v1986 = vpop.f32.mrf.mxu0
          %v1987 = vadd.f32 0.0, %v1986
          %v1988 = vpop.f32.mrf.mxu0
          %v1989 = vpop.f32.mrf.mxu0
          %v1990 = vadd.f32 0.0, %v1989
          %v1991 = vpop.f32.mrf.mxu0
          %1992 = vmatprep.mubr.bf16.mxu0 %v1838
          %1993 = vmatmul.mubr.bf16.gmra.mxu0 %v1702
          %v1994 = vpop.f32.mrf.mxu0
          %v1995 = vadd.f32 0.0, %v1994
          %v1996 = vpop.f32.mrf.mxu0
          %v1997 = vpop.f32.mrf.mxu0
          %v1998 = vadd.f32 0.0, %v1997
          %v1999 = vpop.f32.mrf.mxu0
          %2000 = vdwg.mxu0
          %v2003 = vunpack.c.l.b16 %v1486
          %v2004 = vunpack.c.h.b16 %v1486
          %v2005 = vunpack.c.l.b16 %v1487
          %v2006 = vunpack.c.h.b16 %v1487
          %v2007 = vpack.c.b16 %v2005, %v2003
          %v2008 = vpack.c.b16 %v2006, %v2004
          %v2034 = vunpack.c.l.b16 %v1522
          %v2035 = vunpack.c.l.b16 %v1523
          %v2036 = vunpack.c.l.b16 %v1524
          %v2037 = vunpack.c.l.b16 %v1525
          %v2038 = vunpack.c.l.b16 %v1526
          %v2039 = vunpack.c.l.b16 %v1527
          %v2040 = vunpack.c.l.b16 %v1528
          %v2041 = vunpack.c.l.b16 %v1529
          %v2042 = vunpack.c.l.b16 %v1530
          %v2043 = vunpack.c.l.b16 %v1531
          %v2044 = vunpack.c.l.b16 %v1532
          %v2045 = vunpack.c.l.b16 %v1533
          %v2046 = vunpack.c.l.b16 %v1534
          %v2047 = vunpack.c.l.b16 %v1535
          %v2048 = vunpack.c.l.b16 %v1536
          %v2049 = vunpack.c.l.b16 %v1537
          %v2050 = vunpack.c.l.b16 %v1538
          %v2051 = vunpack.c.l.b16 %v1539
          %v2052 = vunpack.c.l.b16 %v1540
          %v2053 = vunpack.c.l.b16 %v1541
          %v2054 = vunpack.c.l.b16 %v1542
          %v2055 = vunpack.c.l.b16 %v1543
          %v2056 = vunpack.c.l.b16 %v1544
          %v2057 = vunpack.c.l.b16 %v1545
          %v2058 = vpack.c.b16 %v2035, %v2034
          %v2059 = vpack.c.b16 %v2037, %v2036
          %v2060 = vpack.c.b16 %v2039, %v2038
          %v2061 = vpack.c.b16 %v2041, %v2040
          %v2062 = vpack.c.b16 %v2043, %v2042
          %v2063 = vpack.c.b16 %v2045, %v2044
          %v2064 = vpack.c.b16 %v2047, %v2046
          %v2065 = vpack.c.b16 %v2049, %v2048
          %v2066 = vpack.c.b16 %v2051, %v2050
          %v2067 = vpack.c.b16 %v2053, %v2052
          %v2068 = vpack.c.b16 %v2055, %v2054
          %v2069 = vpack.c.b16 %v2057, %v2056
          %v2083 = vsel %vm332, %v2008, 0
          %2085 = vmatprep.subr.bf16.mxu0 0
          %2086 = vmatpush1.bf16.msra.mxu0 %v2065
          %2087 = vmatprep.subr.bf16.mxu0 0
          %2088 = vmatpush1.bf16.msra.mxu0 %v2064
          %2089 = vmatprep.subr.bf16.mxu0 0
          %2090 = vmatpush1.bf16.msra.mxu0 %v2063
          %2091 = vmatprep.subr.bf16.mxu0 0
          %2092 = vmatpush1.bf16.msra.mxu0 %v2062
          %2093 = vmatprep.subr.bf16.mxu0 0
          %2094 = vmatpush1.bf16.msra.mxu0 %v2061
          %2095 = vmatprep.subr.bf16.mxu0 0
          %2096 = vmatpush1.bf16.msra.mxu0 %v2060
          %2097 = vmatprep.subr.bf16.mxu0 0
          %2098 = vmatpush1.bf16.msra.mxu0 %v2059
          %2099 = vmatprep.subr.bf16.mxu0 0
          %2100 = vmatpush1.bf16.msra.mxu0 %v2058
          %2101 = vmatprep.subr.bf16.mxu0 0
          %2102 = vmatpush2.bf16.msra.mxu0 0
          %2103 = vmatprep.subr.bf16.mxu0 0
          %2104 = vmatpush2.bf16.msra.mxu0 0
          %2105 = vmatprep.subr.bf16.mxu0 0
          %2106 = vmatpush2.bf16.msra.mxu0 0
          %2107 = vmatprep.subr.bf16.mxu0 0
          %2108 = vmatpush2.bf16.msra.mxu0 0
          %2109 = vmatprep.subr.bf16.mxu0 0
          %2110 = vmatpush2.bf16.msra.mxu0 %v2069
          %2111 = vmatprep.subr.bf16.mxu0 0
          %2112 = vmatpush2.bf16.msra.mxu0 %v2068
          %2113 = vmatprep.subr.bf16.mxu0 0
          %2114 = vmatpush2.bf16.msra.mxu0 %v2067
          %2115 = vmatprep.subr.bf16.mxu0 0
          %2116 = vmatpush2.bf16.msra.mxu0 %v2066
          %2117 = vmatprep.mubr.bf16.mxu0 %v2083
          %2118 = vmatmul.mubr.bf16.gmra.mxu0 %v2007
          %v2119 = vpop.f32.mrf.mxu0
          %v2120 = vadd.f32 %v1875, %v2119
          %v2121 = vpop.f32.mrf.mxu0
          %v2122 = vpop.f32.mrf.mxu0
          %v2123 = vadd.f32 %v1878, %v2122
          %v2124 = vpop.f32.mrf.mxu0
          %2125 = vmatprep.mubr.bf16.mxu0 %v1793
          %2126 = vmatmul.mubr.bf16.gmra.mxu0 %v1672
          %v2127 = vpop.f32.mrf.mxu0
          %v2128 = vadd.f32 %v1883, %v2127
          %v2129 = vpop.f32.mrf.mxu0
          %v2130 = vpop.f32.mrf.mxu0
          %v2131 = vadd.f32 %v1886, %v2130
          %v2132 = vpop.f32.mrf.mxu0
          %2133 = vmatprep.mubr.bf16.mxu0 %v1796
          %2134 = vmatmul.mubr.bf16.gmra.mxu0 %v1674
          %v2135 = vpop.f32.mrf.mxu0
          %v2136 = vadd.f32 %v1891, %v2135
          %v2137 = vpop.f32.mrf.mxu0
          %v2138 = vpop.f32.mrf.mxu0
          %v2139 = vadd.f32 %v1894, %v2138
          %v2140 = vpop.f32.mrf.mxu0
          %2141 = vmatprep.mubr.bf16.mxu0 %v1799
          %2142 = vmatmul.mubr.bf16.gmra.mxu0 %v1676
          %v2143 = vpop.f32.mrf.mxu0
          %v2144 = vadd.f32 %v1899, %v2143
          %v2145 = vpop.f32.mrf.mxu0
          %v2146 = vpop.f32.mrf.mxu0
          %v2147 = vadd.f32 %v1902, %v2146
          %v2148 = vpop.f32.mrf.mxu0
          %2149 = vmatprep.mubr.bf16.mxu0 %v1802
          %2150 = vmatmul.mubr.bf16.gmra.mxu0 %v1678
          %v2151 = vpop.f32.mrf.mxu0
          %v2152 = vadd.f32 %v1907, %v2151
          %v2153 = vpop.f32.mrf.mxu0
          %v2154 = vpop.f32.mrf.mxu0
          %v2155 = vadd.f32 %v1910, %v2154
          %v2156 = vpop.f32.mrf.mxu0
          %2157 = vmatprep.mubr.bf16.mxu0 %v1805
          %2158 = vmatmul.mubr.bf16.gmra.mxu0 %v1680
          %v2159 = vpop.f32.mrf.mxu0
          %v2160 = vadd.f32 %v1915, %v2159
          %v2161 = vpop.f32.mrf.mxu0
          %v2162 = vpop.f32.mrf.mxu0
          %v2163 = vadd.f32 %v1918, %v2162
          %v2164 = vpop.f32.mrf.mxu0
          %2165 = vmatprep.mubr.bf16.mxu0 %v1808
          %2166 = vmatmul.mubr.bf16.gmra.mxu0 %v1682
          %v2167 = vpop.f32.mrf.mxu0
          %v2168 = vadd.f32 %v1923, %v2167
          %v2169 = vpop.f32.mrf.mxu0
          %v2170 = vpop.f32.mrf.mxu0
          %v2171 = vadd.f32 %v1926, %v2170
          %v2172 = vpop.f32.mrf.mxu0
          %2173 = vmatprep.mubr.bf16.mxu0 %v1811
          %2174 = vmatmul.mubr.bf16.gmra.mxu0 %v1684
          %v2175 = vpop.f32.mrf.mxu0
          %v2176 = vadd.f32 %v1931, %v2175
          %v2177 = vpop.f32.mrf.mxu0
          %v2178 = vpop.f32.mrf.mxu0
          %v2179 = vadd.f32 %v1934, %v2178
          %v2180 = vpop.f32.mrf.mxu0
          %2181 = vmatprep.mubr.bf16.mxu0 %v1814
          %2182 = vmatmul.mubr.bf16.gmra.mxu0 %v1686
          %v2183 = vpop.f32.mrf.mxu0
          %v2184 = vadd.f32 %v1939, %v2183
          %v2185 = vpop.f32.mrf.mxu0
          %v2186 = vpop.f32.mrf.mxu0
          %v2187 = vadd.f32 %v1942, %v2186
          %v2188 = vpop.f32.mrf.mxu0
          %2189 = vmatprep.mubr.bf16.mxu0 %v1817
          %2190 = vmatmul.mubr.bf16.gmra.mxu0 %v1688
          %v2191 = vpop.f32.mrf.mxu0
          %v2192 = vadd.f32 %v1947, %v2191
          %v2193 = vpop.f32.mrf.mxu0
          %v2194 = vpop.f32.mrf.mxu0
          %v2195 = vadd.f32 %v1950, %v2194
          %v2196 = vpop.f32.mrf.mxu0
          %2197 = vmatprep.mubr.bf16.mxu0 %v1820
          %2198 = vmatmul.mubr.bf16.gmra.mxu0 %v1690
          %v2199 = vpop.f32.mrf.mxu0
          %v2200 = vadd.f32 %v1955, %v2199
          %v2201 = vpop.f32.mrf.mxu0
          %v2202 = vpop.f32.mrf.mxu0
          %v2203 = vadd.f32 %v1958, %v2202
          %v2204 = vpop.f32.mrf.mxu0
          %2205 = vmatprep.mubr.bf16.mxu0 %v1823
          %2206 = vmatmul.mubr.bf16.gmra.mxu0 %v1692
          %v2207 = vpop.f32.mrf.mxu0
          %v2208 = vadd.f32 %v1963, %v2207
          %v2209 = vpop.f32.mrf.mxu0
          %v2210 = vpop.f32.mrf.mxu0
          %v2211 = vadd.f32 %v1966, %v2210
          %v2212 = vpop.f32.mrf.mxu0
          %2213 = vmatprep.mubr.bf16.mxu0 %v1826
          %2214 = vmatmul.mubr.bf16.gmra.mxu0 %v1694
          %v2215 = vpop.f32.mrf.mxu0
          %v2216 = vadd.f32 %v1971, %v2215
          %v2217 = vpop.f32.mrf.mxu0
          %v2218 = vpop.f32.mrf.mxu0
          %v2219 = vadd.f32 %v1974, %v2218
          %v2220 = vpop.f32.mrf.mxu0
          %2221 = vmatprep.mubr.bf16.mxu0 %v1829
          %2222 = vmatmul.mubr.bf16.gmra.mxu0 %v1696
          %v2223 = vpop.f32.mrf.mxu0
          %v2224 = vadd.f32 %v1979, %v2223
          %v2225 = vpop.f32.mrf.mxu0
          %v2226 = vpop.f32.mrf.mxu0
          %v2227 = vadd.f32 %v1982, %v2226
          %v2228 = vpop.f32.mrf.mxu0
          %2229 = vmatprep.mubr.bf16.mxu0 %v1832
          %2230 = vmatmul.mubr.bf16.gmra.mxu0 %v1698
          %v2231 = vpop.f32.mrf.mxu0
          %v2232 = vadd.f32 %v1987, %v2231
          %v2233 = vpop.f32.mrf.mxu0
          %v2234 = vpop.f32.mrf.mxu0
          %v2235 = vadd.f32 %v1990, %v2234
          %v2236 = vpop.f32.mrf.mxu0
          %2237 = vmatprep.mubr.bf16.mxu0 %v1835
          %2238 = vmatmul.mubr.bf16.gmra.mxu0 %v1700
          %v2239 = vpop.f32.mrf.mxu0
          %v2240 = vadd.f32 %v1995, %v2239
          %v2241 = vpop.f32.mrf.mxu0
          %v2242 = vpop.f32.mrf.mxu0
          %v2243 = vadd.f32 %v1998, %v2242
          %v2244 = vpop.f32.mrf.mxu0
          %2245 = vdwg.mxu0
          %v2246 = vld [vmem:[#allocation3 + $0x20] sm:$0xff]
          %v2247 = vld [vmem:[#allocation3 + $0x28] sm:$0xff]
          %v2248 = vld [vmem:[#allocation3 + $0x30] sm:$0xff]
          %v2249 = vld [vmem:[#allocation3 + $0x38] sm:$0xff]
          %v2250 = vld [vmem:[#allocation3 + $0x40] sm:$0xff]
          %v2251 = vld [vmem:[#allocation3 + $0x48] sm:$0xff]
          %v2252 = vld [vmem:[#allocation3 + $0x50] sm:$0xff]
          %v2253 = vld [vmem:[#allocation3 + $0x58] sm:$0xff]
          %v2254 = vld [vmem:[#allocation3 + $0x60] sm:$0xff]
          %v2255 = vld [vmem:[#allocation3 + $0x68] sm:$0xff]
          %v2256 = vld [vmem:[#allocation3 + $0x70] sm:$0xff]
          %v2257 = vld [vmem:[#allocation3 + $0x78] sm:$0xff]
          %v2258 = vld [vmem:[#allocation3 + $0x80] sm:$0xff]
          %v2259 = vld [vmem:[#allocation3 + $0x88] sm:$0xff]
          %v2260 = vld [vmem:[#allocation3 + $0x90] sm:$0xff]
          %v2261 = vld [vmem:[#allocation3 + $0x98] sm:$0xff]
          %v2262 = vld [vmem:[#allocation3 + $0xa0] sm:$0xff]
          %v2263 = vld [vmem:[#allocation3 + $0xa8] sm:$0xff]
          %v2264 = vld [vmem:[#allocation3 + $0xb0] sm:$0xff]
          %v2265 = vld [vmem:[#allocation3 + $0xb8] sm:$0xff]
          %v2266 = vld [vmem:[#allocation3 + $0xc0] sm:$0xff]
          %v2267 = vld [vmem:[#allocation3 + $0xc8] sm:$0xff]
          %v2268 = vld [vmem:[#allocation3 + $0xd0] sm:$0xff]
          %v2269 = vld [vmem:[#allocation3 + $0xd8] sm:$0xff]
          %v2270 = vld [vmem:[#allocation3 + $0xe0] sm:$0xff]
          %v2271 = vld [vmem:[#allocation3 + $0xe8] sm:$0xff]
          %v2272 = vld [vmem:[#allocation3 + $0xf0] sm:$0xff]
          %v2273 = vld [vmem:[#allocation3 + $0xf8] sm:$0xff]
          %v2274 = vld [vmem:[#allocation3 + $0x100] sm:$0xff]
          %v2275 = vld [vmem:[#allocation3 + $0x108] sm:$0xff]
          %v2276 = vld [vmem:[#allocation3 + $0x110] sm:$0xff]
          %v2277 = vld [vmem:[#allocation3 + $0x118] sm:$0xff]
          %s2278 = sadd.s32 %s1518, 2
          %s2279 = smul.u32 %s2278, 24
          %s2280 = smul.addr %s2279, 4
          %s2281 = scalar_lea.vmem %s1, %s2280
          %v2282 = vld [vmem:[%s2281] sm:$0xf]
          %v2283 = vld [vmem:[%s2281 + $0x4] sm:$0xf]
          %v2284 = vld [vmem:[%s2281 + $0x8] sm:$0xf]
          %v2285 = vld [vmem:[%s2281 + $0xc] sm:$0xf]
          %v2286 = vld [vmem:[%s2281 + $0x10] sm:$0xf]
          %v2287 = vld [vmem:[%s2281 + $0x14] sm:$0xf]
          %v2288 = vld [vmem:[%s2281 + $0x18] sm:$0xf]
          %v2289 = vld [vmem:[%s2281 + $0x1c] sm:$0xf]
          %v2290 = vld [vmem:[%s2281 + $0x20] sm:$0xf]
          %v2291 = vld [vmem:[%s2281 + $0x24] sm:$0xf]
          %v2292 = vld [vmem:[%s2281 + $0x28] sm:$0xf]
          %v2293 = vld [vmem:[%s2281 + $0x2c] sm:$0xf]
          %v2294 = vld [vmem:[%s2281 + $0x30] sm:$0xf]
          %v2295 = vld [vmem:[%s2281 + $0x34] sm:$0xf]
          %v2296 = vld [vmem:[%s2281 + $0x38] sm:$0xf]
          %v2297 = vld [vmem:[%s2281 + $0x3c] sm:$0xf]
          %v2298 = vld [vmem:[%s2281 + $0x40] sm:$0xf]
          %v2299 = vld [vmem:[%s2281 + $0x44] sm:$0xf]
          %v2300 = vld [vmem:[%s2281 + $0x48] sm:$0xf]
          %v2301 = vld [vmem:[%s2281 + $0x4c] sm:$0xf]
          %v2302 = vld [vmem:[%s2281 + $0x50] sm:$0xf]
          %v2303 = vld [vmem:[%s2281 + $0x54] sm:$0xf]
          %v2304 = vld [vmem:[%s2281 + $0x58] sm:$0xf]
          %v2305 = vld [vmem:[%s2281 + $0x5c] sm:$0xf]
          %v2338 = vunpack.c.l.b16 %v2246
          %v2339 = vunpack.c.h.b16 %v2246
          %v2340 = vunpack.c.l.b16 %v2247
          %v2341 = vunpack.c.h.b16 %v2247
          %v2342 = vunpack.c.l.b16 %v2248
          %v2343 = vunpack.c.h.b16 %v2248
          %v2344 = vunpack.c.l.b16 %v2249
          %v2345 = vunpack.c.h.b16 %v2249
          %v2346 = vunpack.c.l.b16 %v2250
          %v2347 = vunpack.c.h.b16 %v2250
          %v2348 = vunpack.c.l.b16 %v2251
          %v2349 = vunpack.c.h.b16 %v2251
          %v2350 = vunpack.c.l.b16 %v2252
          %v2351 = vunpack.c.h.b16 %v2252
          %v2352 = vunpack.c.l.b16 %v2253
          %v2353 = vunpack.c.h.b16 %v2253
          %v2354 = vunpack.c.l.b16 %v2254
          %v2355 = vunpack.c.h.b16 %v2254
          %v2356 = vunpack.c.l.b16 %v2255
          %v2357 = vunpack.c.h.b16 %v2255
          %v2358 = vunpack.c.l.b16 %v2256
          %v2359 = vunpack.c.h.b16 %v2256
          %v2360 = vunpack.c.l.b16 %v2257
          %v2361 = vunpack.c.h.b16 %v2257
          %v2362 = vunpack.c.l.b16 %v2258
          %v2363 = vunpack.c.h.b16 %v2258
          %v2364 = vunpack.c.l.b16 %v2259
          %v2365 = vunpack.c.h.b16 %v2259
          %v2366 = vunpack.c.l.b16 %v2260
          %v2367 = vunpack.c.h.b16 %v2260
          %v2368 = vunpack.c.l.b16 %v2261
          %v2369 = vunpack.c.h.b16 %v2261
          %v2370 = vunpack.c.l.b16 %v2262
          %v2371 = vunpack.c.h.b16 %v2262
          %v2372 = vunpack.c.l.b16 %v2263
          %v2373 = vunpack.c.h.b16 %v2263
          %v2374 = vunpack.c.l.b16 %v2264
          %v2375 = vunpack.c.h.b16 %v2264
          %v2376 = vunpack.c.l.b16 %v2265
          %v2377 = vunpack.c.h.b16 %v2265
          %v2378 = vunpack.c.l.b16 %v2266
          %v2379 = vunpack.c.h.b16 %v2266
          %v2380 = vunpack.c.l.b16 %v2267
          %v2381 = vunpack.c.h.b16 %v2267
          %v2382 = vunpack.c.l.b16 %v2268
          %v2383 = vunpack.c.h.b16 %v2268
          %v2384 = vunpack.c.l.b16 %v2269
          %v2385 = vunpack.c.h.b16 %v2269
          %v2386 = vunpack.c.l.b16 %v2270
          %v2387 = vunpack.c.h.b16 %v2270
          %v2388 = vunpack.c.l.b16 %v2271
          %v2389 = vunpack.c.h.b16 %v2271
          %v2390 = vunpack.c.l.b16 %v2272
          %v2391 = vunpack.c.h.b16 %v2272
          %v2392 = vunpack.c.l.b16 %v2273
          %v2393 = vunpack.c.h.b16 %v2273
          %v2394 = vunpack.c.l.b16 %v2274
          %v2395 = vunpack.c.h.b16 %v2274
          %v2396 = vunpack.c.l.b16 %v2275
          %v2397 = vunpack.c.h.b16 %v2275
          %v2398 = vunpack.c.l.b16 %v2276
          %v2399 = vunpack.c.h.b16 %v2276
          %v2400 = vunpack.c.l.b16 %v2277
          %v2401 = vunpack.c.h.b16 %v2277
          %v2402 = vpack.c.b16 %v2340, %v2338
          %v2403 = vpack.c.b16 %v2341, %v2339
          %v2404 = vpack.c.b16 %v2344, %v2342
          %v2405 = vpack.c.b16 %v2345, %v2343
          %v2406 = vpack.c.b16 %v2348, %v2346
          %v2407 = vpack.c.b16 %v2349, %v2347
          %v2408 = vpack.c.b16 %v2352, %v2350
          %v2409 = vpack.c.b16 %v2353, %v2351
          %v2410 = vpack.c.b16 %v2356, %v2354
          %v2411 = vpack.c.b16 %v2357, %v2355
          %v2412 = vpack.c.b16 %v2360, %v2358
          %v2413 = vpack.c.b16 %v2361, %v2359
          %v2414 = vpack.c.b16 %v2364, %v2362
          %v2415 = vpack.c.b16 %v2365, %v2363
          %v2416 = vpack.c.b16 %v2368, %v2366
          %v2417 = vpack.c.b16 %v2369, %v2367
          %v2418 = vpack.c.b16 %v2372, %v2370
          %v2419 = vpack.c.b16 %v2373, %v2371
          %v2420 = vpack.c.b16 %v2376, %v2374
          %v2421 = vpack.c.b16 %v2377, %v2375
          %v2422 = vpack.c.b16 %v2380, %v2378
          %v2423 = vpack.c.b16 %v2381, %v2379
          %v2424 = vpack.c.b16 %v2384, %v2382
          %v2425 = vpack.c.b16 %v2385, %v2383
          %v2426 = vpack.c.b16 %v2388, %v2386
          %v2427 = vpack.c.b16 %v2389, %v2387
          %v2428 = vpack.c.b16 %v2392, %v2390
          %v2429 = vpack.c.b16 %v2393, %v2391
          %v2430 = vpack.c.b16 %v2396, %v2394
          %v2431 = vpack.c.b16 %v2397, %v2395
          %v2432 = vpack.c.b16 %v2400, %v2398
          %v2433 = vpack.c.b16 %v2401, %v2399
          %v2474 = vunpack.c.l.b16 %v2282
          %v2475 = vunpack.c.l.b16 %v2283
          %v2476 = vunpack.c.l.b16 %v2284
          %v2477 = vunpack.c.l.b16 %v2285
          %v2478 = vunpack.c.l.b16 %v2286
          %v2479 = vunpack.c.l.b16 %v2287
          %v2480 = vunpack.c.l.b16 %v2288
          %v2481 = vunpack.c.l.b16 %v2289
          %v2482 = vunpack.c.l.b16 %v2290
          %v2483 = vunpack.c.l.b16 %v2291
          %v2484 = vunpack.c.l.b16 %v2292
          %v2485 = vunpack.c.l.b16 %v2293
          %v2486 = vunpack.c.l.b16 %v2294
          %v2487 = vunpack.c.l.b16 %v2295
          %v2488 = vunpack.c.l.b16 %v2296
          %v2489 = vunpack.c.l.b16 %v2297
          %v2490 = vunpack.c.l.b16 %v2298
          %v2491 = vunpack.c.l.b16 %v2299
          %v2492 = vunpack.c.l.b16 %v2300
          %v2493 = vunpack.c.l.b16 %v2301
          %v2494 = vunpack.c.l.b16 %v2302
          %v2495 = vunpack.c.l.b16 %v2303
          %v2496 = vunpack.c.l.b16 %v2304
          %v2497 = vunpack.c.l.b16 %v2305
          %v2498 = vpack.c.b16 %v2475, %v2474
          %v2499 = vpack.c.b16 %v2477, %v2476
          %v2500 = vpack.c.b16 %v2479, %v2478
          %v2501 = vpack.c.b16 %v2481, %v2480
          %v2502 = vpack.c.b16 %v2483, %v2482
          %v2503 = vpack.c.b16 %v2485, %v2484
          %v2504 = vpack.c.b16 %v2487, %v2486
          %v2505 = vpack.c.b16 %v2489, %v2488
          %v2506 = vpack.c.b16 %v2491, %v2490
          %v2507 = vpack.c.b16 %v2493, %v2492
          %v2508 = vpack.c.b16 %v2495, %v2494
          %v2509 = vpack.c.b16 %v2497, %v2496
          %v2523 = vsel %vm332, %v2403, 0
          %v2526 = vsel %vm332, %v2405, 0
          %v2529 = vsel %vm332, %v2407, 0
          %v2532 = vsel %vm332, %v2409, 0
          %v2535 = vsel %vm332, %v2411, 0
          %v2538 = vsel %vm332, %v2413, 0
          %v2541 = vsel %vm332, %v2415, 0
          %v2544 = vsel %vm332, %v2417, 0
          %v2547 = vsel %vm332, %v2419, 0
          %v2550 = vsel %vm332, %v2421, 0
          %v2553 = vsel %vm332, %v2423, 0
          %v2556 = vsel %vm332, %v2425, 0
          %v2559 = vsel %vm332, %v2427, 0
          %v2562 = vsel %vm332, %v2429, 0
          %v2565 = vsel %vm332, %v2431, 0
          %v2568 = vsel %vm332, %v2433, 0
          %2570 = vmatprep.subr.bf16.mxu0 0
          %2571 = vmatpush1.bf16.msra.mxu0 %v2505
          %2572 = vmatprep.subr.bf16.mxu0 0
          %2573 = vmatpush1.bf16.msra.mxu0 %v2504
          %2574 = vmatprep.subr.bf16.mxu0 0
          %2575 = vmatpush1.bf16.msra.mxu0 %v2503
          %2576 = vmatprep.subr.bf16.mxu0 0
          %2577 = vmatpush1.bf16.msra.mxu0 %v2502
          %2578 = vmatprep.subr.bf16.mxu0 0
          %2579 = vmatpush1.bf16.msra.mxu0 %v2501
          %2580 = vmatprep.subr.bf16.mxu0 0
          %2581 = vmatpush1.bf16.msra.mxu0 %v2500
          %2582 = vmatprep.subr.bf16.mxu0 0
          %2583 = vmatpush1.bf16.msra.mxu0 %v2499
          %2584 = vmatprep.subr.bf16.mxu0 0
          %2585 = vmatpush1.bf16.msra.mxu0 %v2498
          %2586 = vmatprep.subr.bf16.mxu0 0
          %2587 = vmatpush2.bf16.msra.mxu0 0
          %2588 = vmatprep.subr.bf16.mxu0 0
          %2589 = vmatpush2.bf16.msra.mxu0 0
          %2590 = vmatprep.subr.bf16.mxu0 0
          %2591 = vmatpush2.bf16.msra.mxu0 0
          %2592 = vmatprep.subr.bf16.mxu0 0
          %2593 = vmatpush2.bf16.msra.mxu0 0
          %2594 = vmatprep.subr.bf16.mxu0 0
          %2595 = vmatpush2.bf16.msra.mxu0 %v2509
          %2596 = vmatprep.subr.bf16.mxu0 0
          %2597 = vmatpush2.bf16.msra.mxu0 %v2508
          %2598 = vmatprep.subr.bf16.mxu0 0
          %2599 = vmatpush2.bf16.msra.mxu0 %v2507
          %2600 = vmatprep.subr.bf16.mxu0 0
          %2601 = vmatpush2.bf16.msra.mxu0 %v2506
          %2602 = vmatprep.mubr.bf16.mxu0 %v2523
          %2603 = vmatmul.mubr.bf16.gmra.mxu0 %v2402
          %v2604 = vpop.f32.mrf.mxu0
          %v2605 = vadd.f32 0.0, %v2604
          %v2606 = vpop.f32.mrf.mxu0
          %v2607 = vpop.f32.mrf.mxu0
          %v2608 = vadd.f32 0.0, %v2607
          %v2609 = vpop.f32.mrf.mxu0
          %2610 = vmatprep.mubr.bf16.mxu0 %v2526
          %2611 = vmatmul.mubr.bf16.gmra.mxu0 %v2404
          %v2612 = vpop.f32.mrf.mxu0
          %v2613 = vadd.f32 0.0, %v2612
          %v2614 = vpop.f32.mrf.mxu0
          %v2615 = vpop.f32.mrf.mxu0
          %v2616 = vadd.f32 0.0, %v2615
          %v2617 = vpop.f32.mrf.mxu0
          %2618 = vmatprep.mubr.bf16.mxu0 %v2529
          %2619 = vmatmul.mubr.bf16.gmra.mxu0 %v2406
          %v2620 = vpop.f32.mrf.mxu0
          %v2621 = vadd.f32 0.0, %v2620
          %v2622 = vpop.f32.mrf.mxu0
          %v2623 = vpop.f32.mrf.mxu0
          %v2624 = vadd.f32 0.0, %v2623
          %v2625 = vpop.f32.mrf.mxu0
          %2626 = vmatprep.mubr.bf16.mxu0 %v2532
          %2627 = vmatmul.mubr.bf16.gmra.mxu0 %v2408
          %v2628 = vpop.f32.mrf.mxu0
          %v2629 = vadd.f32 0.0, %v2628
          %v2630 = vpop.f32.mrf.mxu0
          %v2631 = vpop.f32.mrf.mxu0
          %v2632 = vadd.f32 0.0, %v2631
          %v2633 = vpop.f32.mrf.mxu0
          %2634 = vmatprep.mubr.bf16.mxu0 %v2535
          %2635 = vmatmul.mubr.bf16.gmra.mxu0 %v2410
          %v2636 = vpop.f32.mrf.mxu0
          %v2637 = vadd.f32 0.0, %v2636
          %v2638 = vpop.f32.mrf.mxu0
          %v2639 = vpop.f32.mrf.mxu0
          %v2640 = vadd.f32 0.0, %v2639
          %v2641 = vpop.f32.mrf.mxu0
          %2642 = vmatprep.mubr.bf16.mxu0 %v2538
          %2643 = vmatmul.mubr.bf16.gmra.mxu0 %v2412
          %v2644 = vpop.f32.mrf.mxu0
          %v2645 = vadd.f32 0.0, %v2644
          %v2646 = vpop.f32.mrf.mxu0
          %v2647 = vpop.f32.mrf.mxu0
          %v2648 = vadd.f32 0.0, %v2647
          %v2649 = vpop.f32.mrf.mxu0
          %2650 = vmatprep.mubr.bf16.mxu0 %v2541
          %2651 = vmatmul.mubr.bf16.gmra.mxu0 %v2414
          %v2652 = vpop.f32.mrf.mxu0
          %v2653 = vadd.f32 0.0, %v2652
          %v2654 = vpop.f32.mrf.mxu0
          %v2655 = vpop.f32.mrf.mxu0
          %v2656 = vadd.f32 0.0, %v2655
          %v2657 = vpop.f32.mrf.mxu0
          %2658 = vmatprep.mubr.bf16.mxu0 %v2544
          %2659 = vmatmul.mubr.bf16.gmra.mxu0 %v2416
          %v2660 = vpop.f32.mrf.mxu0
          %v2661 = vadd.f32 0.0, %v2660
          %v2662 = vpop.f32.mrf.mxu0
          %v2663 = vpop.f32.mrf.mxu0
          %v2664 = vadd.f32 0.0, %v2663
          %v2665 = vpop.f32.mrf.mxu0
          %2666 = vmatprep.mubr.bf16.mxu0 %v2547
          %2667 = vmatmul.mubr.bf16.gmra.mxu0 %v2418
          %v2668 = vpop.f32.mrf.mxu0
          %v2669 = vadd.f32 0.0, %v2668
          %v2670 = vpop.f32.mrf.mxu0
          %v2671 = vpop.f32.mrf.mxu0
          %v2672 = vadd.f32 0.0, %v2671
          %v2673 = vpop.f32.mrf.mxu0
          %2674 = vmatprep.mubr.bf16.mxu0 %v2550
          %2675 = vmatmul.mubr.bf16.gmra.mxu0 %v2420
          %v2676 = vpop.f32.mrf.mxu0
          %v2677 = vadd.f32 0.0, %v2676
          %v2678 = vpop.f32.mrf.mxu0
          %v2679 = vpop.f32.mrf.mxu0
          %v2680 = vadd.f32 0.0, %v2679
          %v2681 = vpop.f32.mrf.mxu0
          %2682 = vmatprep.mubr.bf16.mxu0 %v2553
          %2683 = vmatmul.mubr.bf16.gmra.mxu0 %v2422
          %v2684 = vpop.f32.mrf.mxu0
          %v2685 = vadd.f32 0.0, %v2684
          %v2686 = vpop.f32.mrf.mxu0
          %v2687 = vpop.f32.mrf.mxu0
          %v2688 = vadd.f32 0.0, %v2687
          %v2689 = vpop.f32.mrf.mxu0
          %2690 = vmatprep.mubr.bf16.mxu0 %v2556
          %2691 = vmatmul.mubr.bf16.gmra.mxu0 %v2424
          %v2692 = vpop.f32.mrf.mxu0
          %v2693 = vadd.f32 0.0, %v2692
          %v2694 = vpop.f32.mrf.mxu0
          %v2695 = vpop.f32.mrf.mxu0
          %v2696 = vadd.f32 0.0, %v2695
          %v2697 = vpop.f32.mrf.mxu0
          %2698 = vmatprep.mubr.bf16.mxu0 %v2559
          %2699 = vmatmul.mubr.bf16.gmra.mxu0 %v2426
          %v2700 = vpop.f32.mrf.mxu0
          %v2701 = vadd.f32 0.0, %v2700
          %v2702 = vpop.f32.mrf.mxu0
          %v2703 = vpop.f32.mrf.mxu0
          %v2704 = vadd.f32 0.0, %v2703
          %v2705 = vpop.f32.mrf.mxu0
          %2706 = vmatprep.mubr.bf16.mxu0 %v2562
          %2707 = vmatmul.mubr.bf16.gmra.mxu0 %v2428
          %v2708 = vpop.f32.mrf.mxu0
          %v2709 = vadd.f32 0.0, %v2708
          %v2710 = vpop.f32.mrf.mxu0
          %v2711 = vpop.f32.mrf.mxu0
          %v2712 = vadd.f32 0.0, %v2711
          %v2713 = vpop.f32.mrf.mxu0
          %2714 = vmatprep.mubr.bf16.mxu0 %v2565
          %2715 = vmatmul.mubr.bf16.gmra.mxu0 %v2430
          %v2716 = vpop.f32.mrf.mxu0
          %v2717 = vadd.f32 0.0, %v2716
          %v2718 = vpop.f32.mrf.mxu0
          %v2719 = vpop.f32.mrf.mxu0
          %v2720 = vadd.f32 0.0, %v2719
          %v2721 = vpop.f32.mrf.mxu0
          %2722 = vmatprep.mubr.bf16.mxu0 %v2568
          %2723 = vmatmul.mubr.bf16.gmra.mxu0 %v2432
          %v2724 = vpop.f32.mrf.mxu0
          %v2725 = vadd.f32 0.0, %v2724
          %v2726 = vpop.f32.mrf.mxu0
          %v2727 = vpop.f32.mrf.mxu0
          %v2728 = vadd.f32 0.0, %v2727
          %v2729 = vpop.f32.mrf.mxu0
          %2730 = vdwg.mxu0
          %v2731 = vadd.f32 %v2120, %v2605
          %v2732 = vadd.f32 %v2123, %v2608
          %v2733 = vadd.f32 %v2128, %v2613
          %v2734 = vadd.f32 %v2131, %v2616
          %v2735 = vadd.f32 %v2136, %v2621
          %v2736 = vadd.f32 %v2139, %v2624
          %v2737 = vadd.f32 %v2144, %v2629
          %v2738 = vadd.f32 %v2147, %v2632
          %v2739 = vadd.f32 %v2152, %v2637
          %v2740 = vadd.f32 %v2155, %v2640
          %v2741 = vadd.f32 %v2160, %v2645
          %v2742 = vadd.f32 %v2163, %v2648
          %v2743 = vadd.f32 %v2168, %v2653
          %v2744 = vadd.f32 %v2171, %v2656
          %v2745 = vadd.f32 %v2176, %v2661
          %v2746 = vadd.f32 %v2179, %v2664
          %v2747 = vadd.f32 %v2184, %v2669
          %v2748 = vadd.f32 %v2187, %v2672
          %v2749 = vadd.f32 %v2192, %v2677
          %v2750 = vadd.f32 %v2195, %v2680
          %v2751 = vadd.f32 %v2200, %v2685
          %v2752 = vadd.f32 %v2203, %v2688
          %v2753 = vadd.f32 %v2208, %v2693
          %v2754 = vadd.f32 %v2211, %v2696
          %v2755 = vadd.f32 %v2216, %v2701
          %v2756 = vadd.f32 %v2219, %v2704
          %v2757 = vadd.f32 %v2224, %v2709
          %v2758 = vadd.f32 %v2227, %v2712
          %v2759 = vadd.f32 %v2232, %v2717
          %v2760 = vadd.f32 %v2235, %v2720
          %v2761 = vadd.f32 %v2240, %v2725
          %v2762 = vadd.f32 %v2243, %v2728
          %s2763 = scalar_lea.vmem %s2, %s375
          %v2764 = vld [vmem:[%s2763] sm:$0x1]
          %v2766 = vlaneseq
          %v2767 = vshrl.u32 %v2766, 7
          %v2768 = vsub.s32 0, %v2767
          %v2769 = vrot.slane %v2764, %v2768
          %v2771 = vadd.f32 %v2731, %v2769
          %v2772 = vadd.f32 %v2732, %v2769
          %v2773 = vadd.f32 %v2733, %v2769
          %v2774 = vadd.f32 %v2734, %v2769
          %v2775 = vadd.f32 %v2735, %v2769
          %v2776 = vadd.f32 %v2736, %v2769
          %v2777 = vadd.f32 %v2737, %v2769
          %v2778 = vadd.f32 %v2738, %v2769
          %v2779 = vadd.f32 %v2739, %v2769
          %v2780 = vadd.f32 %v2740, %v2769
          %v2781 = vadd.f32 %v2741, %v2769
          %v2782 = vadd.f32 %v2742, %v2769
          %v2783 = vadd.f32 %v2743, %v2769
          %v2784 = vadd.f32 %v2744, %v2769
          %v2785 = vadd.f32 %v2745, %v2769
          %v2786 = vadd.f32 %v2746, %v2769
          %v2787 = vadd.f32 %v2747, %v2769
          %v2788 = vadd.f32 %v2748, %v2769
          %v2789 = vadd.f32 %v2749, %v2769
          %v2790 = vadd.f32 %v2750, %v2769
          %v2791 = vadd.f32 %v2751, %v2769
          %v2792 = vadd.f32 %v2752, %v2769
          %v2793 = vadd.f32 %v2753, %v2769
          %v2794 = vadd.f32 %v2754, %v2769
          %v2795 = vadd.f32 %v2755, %v2769
          %v2796 = vadd.f32 %v2756, %v2769
          %v2797 = vadd.f32 %v2757, %v2769
          %v2798 = vadd.f32 %v2758, %v2769
          %v2799 = vadd.f32 %v2759, %v2769
          %v2800 = vadd.f32 %v2760, %v2769
          %v2801 = vadd.f32 %v2761, %v2769
          %v2802 = vadd.f32 %v2762, %v2769
          %v2803 = vmax.f32 %v2771, 0.0
          %v2804 = vmax.f32 %v2772, 0.0
          %v2805 = vmax.f32 %v2773, 0.0
          %v2806 = vmax.f32 %v2774, 0.0
          %v2807 = vmax.f32 %v2775, 0.0
          %v2808 = vmax.f32 %v2776, 0.0
          %v2809 = vmax.f32 %v2777, 0.0
          %v2810 = vmax.f32 %v2778, 0.0
          %v2811 = vmax.f32 %v2779, 0.0
          %v2812 = vmax.f32 %v2780, 0.0
          %v2813 = vmax.f32 %v2781, 0.0
          %v2814 = vmax.f32 %v2782, 0.0
          %v2815 = vmax.f32 %v2783, 0.0
          %v2816 = vmax.f32 %v2784, 0.0
          %v2817 = vmax.f32 %v2785, 0.0
          %v2818 = vmax.f32 %v2786, 0.0
          %v2819 = vmax.f32 %v2787, 0.0
          %v2820 = vmax.f32 %v2788, 0.0
          %v2821 = vmax.f32 %v2789, 0.0
          %v2822 = vmax.f32 %v2790, 0.0
          %v2823 = vmax.f32 %v2791, 0.0
          %v2824 = vmax.f32 %v2792, 0.0
          %v2825 = vmax.f32 %v2793, 0.0
          %v2826 = vmax.f32 %v2794, 0.0
          %v2827 = vmax.f32 %v2795, 0.0
          %v2828 = vmax.f32 %v2796, 0.0
          %v2829 = vmax.f32 %v2797, 0.0
          %v2830 = vmax.f32 %v2798, 0.0
          %v2831 = vmax.f32 %v2799, 0.0
          %v2832 = vmax.f32 %v2800, 0.0
          %v2833 = vmax.f32 %v2801, 0.0
          %v2834 = vmax.f32 %v2802, 0.0
          %2835 = vst.msk [vmem:[#allocation2 + $0x8] sm:$0xff] %vm332, %v2803
          %2836 = vst.msk [vmem:[#allocation2 + $0x10] sm:$0xff] %vm332, %v2804
          %2837 = vst.msk [vmem:[#allocation2 + $0x18] sm:$0xff] %vm332, %v2805
          %2838 = vst.msk [vmem:[#allocation2 + $0x20] sm:$0xff] %vm332, %v2806
          %2839 = vst.msk [vmem:[#allocation2 + $0x28] sm:$0xff] %vm332, %v2807
          %2840 = vst.msk [vmem:[#allocation2 + $0x30] sm:$0xff] %vm332, %v2808
          %2841 = vst.msk [vmem:[#allocation2 + $0x38] sm:$0xff] %vm332, %v2809
          %2842 = vst.msk [vmem:[#allocation2 + $0x40] sm:$0xff] %vm332, %v2810
          %2843 = vst.msk [vmem:[#allocation2 + $0x48] sm:$0xff] %vm332, %v2811
          %2844 = vst.msk [vmem:[#allocation2 + $0x50] sm:$0xff] %vm332, %v2812
          %2845 = vst.msk [vmem:[#allocation2 + $0x58] sm:$0xff] %vm332, %v2813
          %2846 = vst.msk [vmem:[#allocation2 + $0x60] sm:$0xff] %vm332, %v2814
          %2847 = vst.msk [vmem:[#allocation2 + $0x68] sm:$0xff] %vm332, %v2815
          %2848 = vst.msk [vmem:[#allocation2 + $0x70] sm:$0xff] %vm332, %v2816
          %2849 = vst.msk [vmem:[#allocation2 + $0x78] sm:$0xff] %vm332, %v2817
          %2850 = vst.msk [vmem:[#allocation2 + $0x80] sm:$0xff] %vm332, %v2818
          %2851 = vst.msk [vmem:[#allocation2 + $0x88] sm:$0xff] %vm332, %v2819
          %2852 = vst.msk [vmem:[#allocation2 + $0x90] sm:$0xff] %vm332, %v2820
          %2853 = vst.msk [vmem:[#allocation2 + $0x98] sm:$0xff] %vm332, %v2821
          %2854 = vst.msk [vmem:[#allocation2 + $0xa0] sm:$0xff] %vm332, %v2822
          %2855 = vst.msk [vmem:[#allocation2 + $0xa8] sm:$0xff] %vm332, %v2823
          %2856 = vst.msk [vmem:[#allocation2 + $0xb0] sm:$0xff] %vm332, %v2824
          %2857 = vst.msk [vmem:[#allocation2 + $0xb8] sm:$0xff] %vm332, %v2825
          %2858 = vst.msk [vmem:[#allocation2 + $0xc0] sm:$0xff] %vm332, %v2826
          %2859 = vst.msk [vmem:[#allocation2 + $0xc8] sm:$0xff] %vm332, %v2827
          %2860 = vst.msk [vmem:[#allocation2 + $0xd0] sm:$0xff] %vm332, %v2828
          %2861 = vst.msk [vmem:[#allocation2 + $0xd8] sm:$0xff] %vm332, %v2829
          %2862 = vst.msk [vmem:[#allocation2 + $0xe0] sm:$0xff] %vm332, %v2830
          %2863 = vst.msk [vmem:[#allocation2 + $0xe8] sm:$0xff] %vm332, %v2831
          %2864 = vst.msk [vmem:[#allocation2 + $0xf0] sm:$0xff] %vm332, %v2832
          %2865 = vst.msk [vmem:[#allocation2 + $0xf8] sm:$0xff] %vm332, %v2833
          %2866 = vst.msk [vmem:[#allocation2 + $0x100] sm:$0xff] %vm332, %v2834
          %v2867 = vpack.c.bf16 %v2804, %v2803
          %v2868 = vpack.c.bf16 %v2806, %v2805
          %v2869 = vpack.c.bf16 %v2808, %v2807
          %v2870 = vpack.c.bf16 %v2810, %v2809
          %v2871 = vpack.c.bf16 %v2812, %v2811
          %v2872 = vpack.c.bf16 %v2814, %v2813
          %v2873 = vpack.c.bf16 %v2816, %v2815
          %v2874 = vpack.c.bf16 %v2818, %v2817
          %v2875 = vpack.c.bf16 %v2820, %v2819
          %v2876 = vpack.c.bf16 %v2822, %v2821
          %v2877 = vpack.c.bf16 %v2824, %v2823
          %v2878 = vpack.c.bf16 %v2826, %v2825
          %v2879 = vpack.c.bf16 %v2828, %v2827
          %v2880 = vpack.c.bf16 %v2830, %v2829
          %v2881 = vpack.c.bf16 %v2832, %v2831
          %v2882 = vpack.c.bf16 %v2834, %v2833
          %v2883 = vld [vmem:[#allocation2 + $0x7] sm:$0xff]
          %v2884 = vld [vmem:[#allocation2 + $0xf] sm:$0xff]
          %v2885 = vld [vmem:[#allocation2 + $0x17] sm:$0xff]
          %v2886 = vld [vmem:[#allocation2 + $0x1f] sm:$0xff]
          %v2887 = vld [vmem:[#allocation2 + $0x27] sm:$0xff]
          %v2888 = vld [vmem:[#allocation2 + $0x2f] sm:$0xff]
          %v2889 = vld [vmem:[#allocation2 + $0x37] sm:$0xff]
          %v2890 = vld [vmem:[#allocation2 + $0x3f] sm:$0xff]
          %v2891 = vld [vmem:[#allocation2 + $0x47] sm:$0xff]
          %v2892 = vld [vmem:[#allocation2 + $0x4f] sm:$0xff]
          %v2893 = vld [vmem:[#allocation2 + $0x57] sm:$0xff]
          %v2894 = vld [vmem:[#allocation2 + $0x5f] sm:$0xff]
          %v2895 = vld [vmem:[#allocation2 + $0x67] sm:$0xff]
          %v2896 = vld [vmem:[#allocation2 + $0x6f] sm:$0xff]
          %v2897 = vld [vmem:[#allocation2 + $0x77] sm:$0xff]
          %v2898 = vld [vmem:[#allocation2 + $0x7f] sm:$0xff]
          %v2899 = vld [vmem:[#allocation2 + $0x87] sm:$0xff]
          %v2900 = vld [vmem:[#allocation2 + $0x8f] sm:$0xff]
          %v2901 = vld [vmem:[#allocation2 + $0x97] sm:$0xff]
          %v2902 = vld [vmem:[#allocation2 + $0x9f] sm:$0xff]
          %v2903 = vld [vmem:[#allocation2 + $0xa7] sm:$0xff]
          %v2904 = vld [vmem:[#allocation2 + $0xaf] sm:$0xff]
          %v2905 = vld [vmem:[#allocation2 + $0xb7] sm:$0xff]
          %v2906 = vld [vmem:[#allocation2 + $0xbf] sm:$0xff]
          %v2907 = vld [vmem:[#allocation2 + $0xc7] sm:$0xff]
          %v2908 = vld [vmem:[#allocation2 + $0xcf] sm:$0xff]
          %v2909 = vld [vmem:[#allocation2 + $0xd7] sm:$0xff]
          %v2910 = vld [vmem:[#allocation2 + $0xdf] sm:$0xff]
          %v2911 = vld [vmem:[#allocation2 + $0xe7] sm:$0xff]
          %v2912 = vld [vmem:[#allocation2 + $0xef] sm:$0xff]
          %v2913 = vld [vmem:[#allocation2 + $0xf7] sm:$0xff]
          %v2914 = vld [vmem:[#allocation2 + $0xff] sm:$0xff]
          %v2915 = vsel %vm877, %v2883, 0.0
          %v2916 = vsel %vm878, %v2884, 0.0
          %v2917 = vsel %vm879, %v2885, 0.0
          %v2918 = vsel %vm880, %v2886, 0.0
          %v2919 = vsel %vm881, %v2887, 0.0
          %v2920 = vsel %vm882, %v2888, 0.0
          %v2921 = vsel %vm883, %v2889, 0.0
          %v2922 = vsel %vm884, %v2890, 0.0
          %v2923 = vsel %vm885, %v2891, 0.0
          %v2924 = vsel %vm886, %v2892, 0.0
          %v2925 = vsel %vm887, %v2893, 0.0
          %v2926 = vsel %vm888, %v2894, 0.0
          %v2927 = vsel %vm889, %v2895, 0.0
          %v2928 = vsel %vm890, %v2896, 0.0
          %v2929 = vsel %vm891, %v2897, 0.0
          %v2930 = vsel %vm892, %v2898, 0.0
          %v2931 = vsel %vm893, %v2899, 0.0
          %v2932 = vsel %vm894, %v2900, 0.0
          %v2933 = vsel %vm895, %v2901, 0.0
          %v2934 = vsel %vm896, %v2902, 0.0
          %v2935 = vsel %vm897, %v2903, 0.0
          %v2936 = vsel %vm898, %v2904, 0.0
          %v2937 = vsel %vm899, %v2905, 0.0
          %v2938 = vsel %vm900, %v2906, 0.0
          %v2939 = vsel %vm901, %v2907, 0.0
          %v2940 = vsel %vm902, %v2908, 0.0
          %v2941 = vsel %vm903, %v2909, 0.0
          %v2942 = vsel %vm904, %v2910, 0.0
          %v2943 = vsel %vm905, %v2911, 0.0
          %v2944 = vsel %vm906, %v2912, 0.0
          %v2945 = vsel %vm907, %v2913, 0.0
          %v2946 = vsel %vm908, %v2914, 0.0
          %v2947 = vpack.c.bf16 %v2916, %v2915
          %v2948 = vpack.c.bf16 %v2918, %v2917
          %v2949 = vpack.c.bf16 %v2920, %v2919
          %v2950 = vpack.c.bf16 %v2922, %v2921
          %v2951 = vpack.c.bf16 %v2924, %v2923
          %v2952 = vpack.c.bf16 %v2926, %v2925
          %v2953 = vpack.c.bf16 %v2928, %v2927
          %v2954 = vpack.c.bf16 %v2930, %v2929
          %v2955 = vpack.c.bf16 %v2932, %v2931
          %v2956 = vpack.c.bf16 %v2934, %v2933
          %v2957 = vpack.c.bf16 %v2936, %v2935
          %v2958 = vpack.c.bf16 %v2938, %v2937
          %v2959 = vpack.c.bf16 %v2940, %v2939
          %v2960 = vpack.c.bf16 %v2942, %v2941
          %v2961 = vpack.c.bf16 %v2944, %v2943
          %v2962 = vpack.c.bf16 %v2946, %v2945
          %v2963 = vld [vmem:[#allocation2 + $0x9] sm:$0xff]
          %v2964 = vld [vmem:[#allocation2 + $0x11] sm:$0xff]
          %v2965 = vld [vmem:[#allocation2 + $0x19] sm:$0xff]
          %v2966 = vld [vmem:[#allocation2 + $0x21] sm:$0xff]
          %v2967 = vld [vmem:[#allocation2 + $0x29] sm:$0xff]
          %v2968 = vld [vmem:[#allocation2 + $0x31] sm:$0xff]
          %v2969 = vld [vmem:[#allocation2 + $0x39] sm:$0xff]
          %v2970 = vld [vmem:[#allocation2 + $0x41] sm:$0xff]
          %v2971 = vld [vmem:[#allocation2 + $0x49] sm:$0xff]
          %v2972 = vld [vmem:[#allocation2 + $0x51] sm:$0xff]
          %v2973 = vld [vmem:[#allocation2 + $0x59] sm:$0xff]
          %v2974 = vld [vmem:[#allocation2 + $0x61] sm:$0xff]
          %v2975 = vld [vmem:[#allocation2 + $0x69] sm:$0xff]
          %v2976 = vld [vmem:[#allocation2 + $0x71] sm:$0xff]
          %v2977 = vld [vmem:[#allocation2 + $0x79] sm:$0xff]
          %v2978 = vld [vmem:[#allocation2 + $0x81] sm:$0xff]
          %v2979 = vld [vmem:[#allocation2 + $0x89] sm:$0xff]
          %v2980 = vld [vmem:[#allocation2 + $0x91] sm:$0xff]
          %v2981 = vld [vmem:[#allocation2 + $0x99] sm:$0xff]
          %v2982 = vld [vmem:[#allocation2 + $0xa1] sm:$0xff]
          %v2983 = vld [vmem:[#allocation2 + $0xa9] sm:$0xff]
          %v2984 = vld [vmem:[#allocation2 + $0xb1] sm:$0xff]
          %v2985 = vld [vmem:[#allocation2 + $0xb9] sm:$0xff]
          %v2986 = vld [vmem:[#allocation2 + $0xc1] sm:$0xff]
          %v2987 = vld [vmem:[#allocation2 + $0xc9] sm:$0xff]
          %v2988 = vld [vmem:[#allocation2 + $0xd1] sm:$0xff]
          %v2989 = vld [vmem:[#allocation2 + $0xd9] sm:$0xff]
          %v2990 = vld [vmem:[#allocation2 + $0xe1] sm:$0xff]
          %v2991 = vld [vmem:[#allocation2 + $0xe9] sm:$0xff]
          %v2992 = vld [vmem:[#allocation2 + $0xf1] sm:$0xff]
          %v2993 = vld [vmem:[#allocation2 + $0xf9] sm:$0xff]
          %v2994 = vld [vmem:[#allocation2 + $0x101] sm:$0xff]
          %v2995 = vsel %vm989, %v2963, 0.0
          %v2996 = vsel %vm990, %v2964, 0.0
          %v2997 = vsel %vm991, %v2965, 0.0
          %v2998 = vsel %vm992, %v2966, 0.0
          %v2999 = vsel %vm993, %v2967, 0.0
          %v3000 = vsel %vm994, %v2968, 0.0
          %v3001 = vsel %vm995, %v2969, 0.0
          %v3002 = vsel %vm996, %v2970, 0.0
          %v3003 = vsel %vm997, %v2971, 0.0
          %v3004 = vsel %vm998, %v2972, 0.0
          %v3005 = vsel %vm999, %v2973, 0.0
          %v3006 = vsel %vm1000, %v2974, 0.0
          %v3007 = vsel %vm1001, %v2975, 0.0
          %v3008 = vsel %vm1002, %v2976, 0.0
          %v3009 = vsel %vm1003, %v2977, 0.0
          %v3010 = vsel %vm1004, %v2978, 0.0
          %v3011 = vsel %vm1005, %v2979, 0.0
          %v3012 = vsel %vm1006, %v2980, 0.0
          %v3013 = vsel %vm1007, %v2981, 0.0
          %v3014 = vsel %vm1008, %v2982, 0.0
          %v3015 = vsel %vm1009, %v2983, 0.0
          %v3016 = vsel %vm1010, %v2984, 0.0
          %v3017 = vsel %vm1011, %v2985, 0.0
          %v3018 = vsel %vm1012, %v2986, 0.0
          %v3019 = vsel %vm1013, %v2987, 0.0
          %v3020 = vsel %vm1014, %v2988, 0.0
          %v3021 = vsel %vm1015, %v2989, 0.0
          %v3022 = vsel %vm1016, %v2990, 0.0
          %v3023 = vsel %vm1017, %v2991, 0.0
          %v3024 = vsel %vm1018, %v2992, 0.0
          %v3025 = vsel %vm1019, %v2993, 0.0
          %v3026 = vsel %vm1020, %v2994, 0.0
          %v3027 = vpack.c.bf16 %v2996, %v2995
          %v3028 = vpack.c.bf16 %v2998, %v2997
          %v3029 = vpack.c.bf16 %v3000, %v2999
          %v3030 = vpack.c.bf16 %v3002, %v3001
          %v3031 = vpack.c.bf16 %v3004, %v3003
          %v3032 = vpack.c.bf16 %v3006, %v3005
          %v3033 = vpack.c.bf16 %v3008, %v3007
          %v3034 = vpack.c.bf16 %v3010, %v3009
          %v3035 = vpack.c.bf16 %v3012, %v3011
          %v3036 = vpack.c.bf16 %v3014, %v3013
          %v3037 = vpack.c.bf16 %v3016, %v3015
          %v3038 = vpack.c.bf16 %v3018, %v3017
          %v3039 = vpack.c.bf16 %v3020, %v3019
          %v3040 = vpack.c.bf16 %v3022, %v3021
          %v3041 = vpack.c.bf16 %v3024, %v3023
          %v3042 = vpack.c.bf16 %v3026, %v3025
          %3059 = vrot.lane.b32.xlu0 %v2867, 64
          %v3060 = vpop.permute.xlu0 %3059
          %3061 = vrot.lane.b32.xlu0 %v2868, 64
          %v3062 = vpop.permute.xlu0 %3061
          %3063 = vrot.lane.b32.xlu0 %v2869, 64
          %v3064 = vpop.permute.xlu0 %3063
          %3065 = vrot.lane.b32.xlu0 %v2870, 64
          %v3066 = vpop.permute.xlu0 %3065
          %3067 = vrot.lane.b32.xlu0 %v2871, 64
          %v3068 = vpop.permute.xlu0 %3067
          %3069 = vrot.lane.b32.xlu0 %v2872, 64
          %v3070 = vpop.permute.xlu0 %3069
          %3071 = vrot.lane.b32.xlu0 %v2873, 64
          %v3072 = vpop.permute.xlu0 %3071
          %3073 = vrot.lane.b32.xlu0 %v2874, 64
          %v3074 = vpop.permute.xlu0 %3073
          %3075 = vrot.lane.b32.xlu0 %v2875, 64
          %v3076 = vpop.permute.xlu0 %3075
          %3077 = vrot.lane.b32.xlu0 %v2876, 64
          %v3078 = vpop.permute.xlu0 %3077
          %3079 = vrot.lane.b32.xlu0 %v2877, 64
          %v3080 = vpop.permute.xlu0 %3079
          %3081 = vrot.lane.b32.xlu0 %v2878, 64
          %v3082 = vpop.permute.xlu0 %3081
          %3083 = vrot.lane.b32.xlu0 %v2879, 64
          %v3084 = vpop.permute.xlu0 %3083
          %3085 = vrot.lane.b32.xlu0 %v2880, 64
          %v3086 = vpop.permute.xlu0 %3085
          %3087 = vrot.lane.b32.xlu0 %v2881, 64
          %v3088 = vpop.permute.xlu0 %3087
          %3089 = vrot.lane.b32.xlu0 %v2882, 64
          %v3090 = vpop.permute.xlu0 %3089
          %v3093 = vsel %vm332, %v2947, %v3060
          %v3096 = vsel %vm332, %v2948, %v3062
          %v3099 = vsel %vm332, %v2949, %v3064
          %v3102 = vsel %vm332, %v2950, %v3066
          %v3105 = vsel %vm332, %v2951, %v3068
          %v3108 = vsel %vm332, %v2952, %v3070
          %v3111 = vsel %vm332, %v2953, %v3072
          %v3114 = vsel %vm332, %v2954, %v3074
          %v3117 = vsel %vm332, %v2955, %v3076
          %v3120 = vsel %vm332, %v2956, %v3078
          %v3123 = vsel %vm332, %v2957, %v3080
          %v3126 = vsel %vm332, %v2958, %v3082
          %v3129 = vsel %vm332, %v2959, %v3084
          %v3132 = vsel %vm332, %v2960, %v3086
          %v3135 = vsel %vm332, %v2961, %v3088
          %v3138 = vsel %vm332, %v2962, %v3090
          %v3155 = vunpack.c.l.b16 %v3093
          %v3156 = vunpack.c.h.b16 %v3093
          %v3157 = vunpack.c.l.b16 %v3096
          %v3158 = vunpack.c.h.b16 %v3096
          %v3159 = vunpack.c.l.b16 %v3099
          %v3160 = vunpack.c.h.b16 %v3099
          %v3161 = vunpack.c.l.b16 %v3102
          %v3162 = vunpack.c.h.b16 %v3102
          %v3163 = vunpack.c.l.b16 %v3105
          %v3164 = vunpack.c.h.b16 %v3105
          %v3165 = vunpack.c.l.b16 %v3108
          %v3166 = vunpack.c.h.b16 %v3108
          %v3167 = vunpack.c.l.b16 %v3111
          %v3168 = vunpack.c.h.b16 %v3111
          %v3169 = vunpack.c.l.b16 %v3114
          %v3170 = vunpack.c.h.b16 %v3114
          %v3171 = vunpack.c.l.b16 %v3117
          %v3172 = vunpack.c.h.b16 %v3117
          %v3173 = vunpack.c.l.b16 %v3120
          %v3174 = vunpack.c.h.b16 %v3120
          %v3175 = vunpack.c.l.b16 %v3123
          %v3176 = vunpack.c.h.b16 %v3123
          %v3177 = vunpack.c.l.b16 %v3126
          %v3178 = vunpack.c.h.b16 %v3126
          %v3179 = vunpack.c.l.b16 %v3129
          %v3180 = vunpack.c.h.b16 %v3129
          %v3181 = vunpack.c.l.b16 %v3132
          %v3182 = vunpack.c.h.b16 %v3132
          %v3183 = vunpack.c.l.b16 %v3135
          %v3184 = vunpack.c.h.b16 %v3135
          %v3185 = vunpack.c.l.b16 %v3138
          %v3186 = vunpack.c.h.b16 %v3138
          %v3187 = vpack.c.b16 %v3155, %v3155
          %v3188 = vpack.c.b16 %v3156, %v3156
          %v3189 = vpack.c.b16 %v3157, %v3157
          %v3190 = vpack.c.b16 %v3158, %v3158
          %v3191 = vpack.c.b16 %v3159, %v3159
          %v3192 = vpack.c.b16 %v3160, %v3160
          %v3193 = vpack.c.b16 %v3161, %v3161
          %v3194 = vpack.c.b16 %v3162, %v3162
          %v3195 = vpack.c.b16 %v3163, %v3163
          %v3196 = vpack.c.b16 %v3164, %v3164
          %v3197 = vpack.c.b16 %v3165, %v3165
          %v3198 = vpack.c.b16 %v3166, %v3166
          %v3199 = vpack.c.b16 %v3167, %v3167
          %v3200 = vpack.c.b16 %v3168, %v3168
          %v3201 = vpack.c.b16 %v3169, %v3169
          %v3202 = vpack.c.b16 %v3170, %v3170
          %v3203 = vpack.c.b16 %v3171, %v3171
          %v3204 = vpack.c.b16 %v3172, %v3172
          %v3205 = vpack.c.b16 %v3173, %v3173
          %v3206 = vpack.c.b16 %v3174, %v3174
          %v3207 = vpack.c.b16 %v3175, %v3175
          %v3208 = vpack.c.b16 %v3176, %v3176
          %v3209 = vpack.c.b16 %v3177, %v3177
          %v3210 = vpack.c.b16 %v3178, %v3178
          %v3211 = vpack.c.b16 %v3179, %v3179
          %v3212 = vpack.c.b16 %v3180, %v3180
          %v3213 = vpack.c.b16 %v3181, %v3181
          %v3214 = vpack.c.b16 %v3182, %v3182
          %v3215 = vpack.c.b16 %v3183, %v3183
          %v3216 = vpack.c.b16 %v3184, %v3184
          %v3217 = vpack.c.b16 %v3185, %v3185
          %v3218 = vpack.c.b16 %v3186, %v3186
          %3251 = vst [vmem:[#allocation3 + $0x10] sm:$0xf] %v3187
          %3252 = vst [vmem:[#allocation3 + $0x18] sm:$0xf] %v3188
          %3253 = vst [vmem:[#allocation3 + $0x20] sm:$0xf] %v3189
          %3254 = vst [vmem:[#allocation3 + $0x28] sm:$0xf] %v3190
          %3255 = vst [vmem:[#allocation3 + $0x30] sm:$0xf] %v3191
          %3256 = vst [vmem:[#allocation3 + $0x38] sm:$0xf] %v3192
          %3257 = vst [vmem:[#allocation3 + $0x40] sm:$0xf] %v3193
          %3258 = vst [vmem:[#allocation3 + $0x48] sm:$0xf] %v3194
          %3259 = vst [vmem:[#allocation3 + $0x50] sm:$0xf] %v3195
          %3260 = vst [vmem:[#allocation3 + $0x58] sm:$0xf] %v3196
          %3261 = vst [vmem:[#allocation3 + $0x60] sm:$0xf] %v3197
          %3262 = vst [vmem:[#allocation3 + $0x68] sm:$0xf] %v3198
          %3263 = vst [vmem:[#allocation3 + $0x70] sm:$0xf] %v3199
          %3264 = vst [vmem:[#allocation3 + $0x78] sm:$0xf] %v3200
          %3265 = vst [vmem:[#allocation3 + $0x80] sm:$0xf] %v3201
          %3266 = vst [vmem:[#allocation3 + $0x88] sm:$0xf] %v3202
          %3267 = vst [vmem:[#allocation3 + $0x90] sm:$0xf] %v3203
          %3268 = vst [vmem:[#allocation3 + $0x98] sm:$0xf] %v3204
          %3269 = vst [vmem:[#allocation3 + $0xa0] sm:$0xf] %v3205
          %3270 = vst [vmem:[#allocation3 + $0xa8] sm:$0xf] %v3206
          %3271 = vst [vmem:[#allocation3 + $0xb0] sm:$0xf] %v3207
          %3272 = vst [vmem:[#allocation3 + $0xb8] sm:$0xf] %v3208
          %3273 = vst [vmem:[#allocation3 + $0xc0] sm:$0xf] %v3209
          %3274 = vst [vmem:[#allocation3 + $0xc8] sm:$0xf] %v3210
          %3275 = vst [vmem:[#allocation3 + $0xd0] sm:$0xf] %v3211
          %3276 = vst [vmem:[#allocation3 + $0xd8] sm:$0xf] %v3212
          %3277 = vst [vmem:[#allocation3 + $0xe0] sm:$0xf] %v3213
          %3278 = vst [vmem:[#allocation3 + $0xe8] sm:$0xf] %v3214
          %3279 = vst [vmem:[#allocation3 + $0xf0] sm:$0xf] %v3215
          %3280 = vst [vmem:[#allocation3 + $0xf8] sm:$0xf] %v3216
          %3281 = vst [vmem:[#allocation3 + $0x100] sm:$0xf] %v3217
          %3282 = vst [vmem:[#allocation3 + $0x108] sm:$0xf] %v3218
          %v3299 = vunpack.c.l.b16 %v3027
          %v3300 = vunpack.c.h.b16 %v3027
          %v3301 = vunpack.c.l.b16 %v3028
          %v3302 = vunpack.c.h.b16 %v3028
          %v3303 = vunpack.c.l.b16 %v3029
          %v3304 = vunpack.c.h.b16 %v3029
          %v3305 = vunpack.c.l.b16 %v3030
          %v3306 = vunpack.c.h.b16 %v3030
          %v3307 = vunpack.c.l.b16 %v3031
          %v3308 = vunpack.c.h.b16 %v3031
          %v3309 = vunpack.c.l.b16 %v3032
          %v3310 = vunpack.c.h.b16 %v3032
          %v3311 = vunpack.c.l.b16 %v3033
          %v3312 = vunpack.c.h.b16 %v3033
          %v3313 = vunpack.c.l.b16 %v3034
          %v3314 = vunpack.c.h.b16 %v3034
          %v3315 = vunpack.c.l.b16 %v3035
          %v3316 = vunpack.c.h.b16 %v3035
          %v3317 = vunpack.c.l.b16 %v3036
          %v3318 = vunpack.c.h.b16 %v3036
          %v3319 = vunpack.c.l.b16 %v3037
          %v3320 = vunpack.c.h.b16 %v3037
          %v3321 = vunpack.c.l.b16 %v3038
          %v3322 = vunpack.c.h.b16 %v3038
          %v3323 = vunpack.c.l.b16 %v3039
          %v3324 = vunpack.c.h.b16 %v3039
          %v3325 = vunpack.c.l.b16 %v3040
          %v3326 = vunpack.c.h.b16 %v3040
          %v3327 = vunpack.c.l.b16 %v3041
          %v3328 = vunpack.c.h.b16 %v3041
          %v3329 = vunpack.c.l.b16 %v3042
          %v3330 = vunpack.c.h.b16 %v3042
          %v3331 = vpack.c.b16 %v3299, %v3299
          %v3332 = vpack.c.b16 %v3300, %v3300
          %v3333 = vpack.c.b16 %v3301, %v3301
          %v3334 = vpack.c.b16 %v3302, %v3302
          %v3335 = vpack.c.b16 %v3303, %v3303
          %v3336 = vpack.c.b16 %v3304, %v3304
          %v3337 = vpack.c.b16 %v3305, %v3305
          %v3338 = vpack.c.b16 %v3306, %v3306
          %v3339 = vpack.c.b16 %v3307, %v3307
          %v3340 = vpack.c.b16 %v3308, %v3308
          %v3341 = vpack.c.b16 %v3309, %v3309
          %v3342 = vpack.c.b16 %v3310, %v3310
          %v3343 = vpack.c.b16 %v3311, %v3311
          %v3344 = vpack.c.b16 %v3312, %v3312
          %v3345 = vpack.c.b16 %v3313, %v3313
          %v3346 = vpack.c.b16 %v3314, %v3314
          %v3347 = vpack.c.b16 %v3315, %v3315
          %v3348 = vpack.c.b16 %v3316, %v3316
          %v3349 = vpack.c.b16 %v3317, %v3317
          %v3350 = vpack.c.b16 %v3318, %v3318
          %v3351 = vpack.c.b16 %v3319, %v3319
          %v3352 = vpack.c.b16 %v3320, %v3320
          %v3353 = vpack.c.b16 %v3321, %v3321
          %v3354 = vpack.c.b16 %v3322, %v3322
          %v3355 = vpack.c.b16 %v3323, %v3323
          %v3356 = vpack.c.b16 %v3324, %v3324
          %v3357 = vpack.c.b16 %v3325, %v3325
          %v3358 = vpack.c.b16 %v3326, %v3326
          %v3359 = vpack.c.b16 %v3327, %v3327
          %v3360 = vpack.c.b16 %v3328, %v3328
          %v3361 = vpack.c.b16 %v3329, %v3329
          %v3362 = vpack.c.b16 %v3330, %v3330
          %3395 = vst.msk [vmem:[#allocation3 + $0x14] sm:$0xf] %vm1453, %v3331
          %3396 = vst.msk [vmem:[#allocation3 + $0x1c] sm:$0xf] %vm1453, %v3332
          %3397 = vst.msk [vmem:[#allocation3 + $0x24] sm:$0xf] %vm1453, %v3333
          %3398 = vst.msk [vmem:[#allocation3 + $0x2c] sm:$0xf] %vm1453, %v3334
          %3399 = vst.msk [vmem:[#allocation3 + $0x34] sm:$0xf] %vm1453, %v3335
          %3400 = vst.msk [vmem:[#allocation3 + $0x3c] sm:$0xf] %vm1453, %v3336
          %3401 = vst.msk [vmem:[#allocation3 + $0x44] sm:$0xf] %vm1453, %v3337
          %3402 = vst.msk [vmem:[#allocation3 + $0x4c] sm:$0xf] %vm1453, %v3338
          %3403 = vst.msk [vmem:[#allocation3 + $0x54] sm:$0xf] %vm1453, %v3339
          %3404 = vst.msk [vmem:[#allocation3 + $0x5c] sm:$0xf] %vm1453, %v3340
          %3405 = vst.msk [vmem:[#allocation3 + $0x64] sm:$0xf] %vm1453, %v3341
          %3406 = vst.msk [vmem:[#allocation3 + $0x6c] sm:$0xf] %vm1453, %v3342
          %3407 = vst.msk [vmem:[#allocation3 + $0x74] sm:$0xf] %vm1453, %v3343
          %3408 = vst.msk [vmem:[#allocation3 + $0x7c] sm:$0xf] %vm1453, %v3344
          %3409 = vst.msk [vmem:[#allocation3 + $0x84] sm:$0xf] %vm1453, %v3345
          %3410 = vst.msk [vmem:[#allocation3 + $0x8c] sm:$0xf] %vm1453, %v3346
          %3411 = vst.msk [vmem:[#allocation3 + $0x94] sm:$0xf] %vm1453, %v3347
          %3412 = vst.msk [vmem:[#allocation3 + $0x9c] sm:$0xf] %vm1453, %v3348
          %3413 = vst.msk [vmem:[#allocation3 + $0xa4] sm:$0xf] %vm1453, %v3349
          %3414 = vst.msk [vmem:[#allocation3 + $0xac] sm:$0xf] %vm1453, %v3350
          %3415 = vst.msk [vmem:[#allocation3 + $0xb4] sm:$0xf] %vm1453, %v3351
          %3416 = vst.msk [vmem:[#allocation3 + $0xbc] sm:$0xf] %vm1453, %v3352
          %3417 = vst.msk [vmem:[#allocation3 + $0xc4] sm:$0xf] %vm1453, %v3353
          %3418 = vst.msk [vmem:[#allocation3 + $0xcc] sm:$0xf] %vm1453, %v3354
          %3419 = vst.msk [vmem:[#allocation3 + $0xd4] sm:$0xf] %vm1453, %v3355
          %3420 = vst.msk [vmem:[#allocation3 + $0xdc] sm:$0xf] %vm1453, %v3356
          %3421 = vst.msk [vmem:[#allocation3 + $0xe4] sm:$0xf] %vm1453, %v3357
          %3422 = vst.msk [vmem:[#allocation3 + $0xec] sm:$0xf] %vm1453, %v3358
          %3423 = vst.msk [vmem:[#allocation3 + $0xf4] sm:$0xf] %vm1453, %v3359
          %3424 = vst.msk [vmem:[#allocation3 + $0xfc] sm:$0xf] %vm1453, %v3360
          %3425 = vst.msk [vmem:[#allocation3 + $0x104] sm:$0xf] %vm1453, %v3361
          %3426 = vst.msk [vmem:[#allocation3 + $0x10c] sm:$0xf] %vm1453, %v3362
          %v3427 = vld [vmem:[#allocation3] sm:$0xff]
          %v3428 = vld [vmem:[#allocation3 + $0x8] sm:$0xff]
          %v3429 = vld [vmem:[#allocation3 + $0x10] sm:$0xff]
          %v3430 = vld [vmem:[#allocation3 + $0x18] sm:$0xff]
          %v3431 = vld [vmem:[#allocation3 + $0x20] sm:$0xff]
          %v3432 = vld [vmem:[#allocation3 + $0x28] sm:$0xff]
          %v3433 = vld [vmem:[#allocation3 + $0x30] sm:$0xff]
          %v3434 = vld [vmem:[#allocation3 + $0x38] sm:$0xff]
          %v3435 = vld [vmem:[#allocation3 + $0x40] sm:$0xff]
          %v3436 = vld [vmem:[#allocation3 + $0x48] sm:$0xff]
          %v3437 = vld [vmem:[#allocation3 + $0x50] sm:$0xff]
          %v3438 = vld [vmem:[#allocation3 + $0x58] sm:$0xff]
          %v3439 = vld [vmem:[#allocation3 + $0x60] sm:$0xff]
          %v3440 = vld [vmem:[#allocation3 + $0x68] sm:$0xff]
          %v3441 = vld [vmem:[#allocation3 + $0x70] sm:$0xff]
          %v3442 = vld [vmem:[#allocation3 + $0x78] sm:$0xff]
          %v3443 = vld [vmem:[#allocation3 + $0x80] sm:$0xff]
          %v3444 = vld [vmem:[#allocation3 + $0x88] sm:$0xff]
          %v3445 = vld [vmem:[#allocation3 + $0x90] sm:$0xff]
          %v3446 = vld [vmem:[#allocation3 + $0x98] sm:$0xff]
          %v3447 = vld [vmem:[#allocation3 + $0xa0] sm:$0xff]
          %v3448 = vld [vmem:[#allocation3 + $0xa8] sm:$0xff]
          %v3449 = vld [vmem:[#allocation3 + $0xb0] sm:$0xff]
          %v3450 = vld [vmem:[#allocation3 + $0xb8] sm:$0xff]
          %v3451 = vld [vmem:[#allocation3 + $0xc0] sm:$0xff]
          %v3452 = vld [vmem:[#allocation3 + $0xc8] sm:$0xff]
          %v3453 = vld [vmem:[#allocation3 + $0xd0] sm:$0xff]
          %v3454 = vld [vmem:[#allocation3 + $0xd8] sm:$0xff]
          %v3455 = vld [vmem:[#allocation3 + $0xe0] sm:$0xff]
          %v3456 = vld [vmem:[#allocation3 + $0xe8] sm:$0xff]
          %v3457 = vld [vmem:[#allocation3 + $0xf0] sm:$0xff]
          %v3458 = vld [vmem:[#allocation3 + $0xf8] sm:$0xff]
          %s3459 = smul.addr %s1519, 4
          %s3460 = scalar_lea.vmem %s3, %s3459
          %v3461 = vld [vmem:[%s3460] sm:$0xf]
          %v3462 = vld [vmem:[%s3460 + $0x4] sm:$0xf]
          %v3463 = vld [vmem:[%s3460 + $0x8] sm:$0xf]
          %v3464 = vld [vmem:[%s3460 + $0xc] sm:$0xf]
          %v3465 = vld [vmem:[%s3460 + $0x10] sm:$0xf]
          %v3466 = vld [vmem:[%s3460 + $0x14] sm:$0xf]
          %v3467 = vld [vmem:[%s3460 + $0x18] sm:$0xf]
          %v3468 = vld [vmem:[%s3460 + $0x1c] sm:$0xf]
          %v3469 = vld [vmem:[%s3460 + $0x20] sm:$0xf]
          %v3470 = vld [vmem:[%s3460 + $0x24] sm:$0xf]
          %v3471 = vld [vmem:[%s3460 + $0x28] sm:$0xf]
          %v3472 = vld [vmem:[%s3460 + $0x2c] sm:$0xf]
          %v3473 = vld [vmem:[%s3460 + $0x30] sm:$0xf]
          %v3474 = vld [vmem:[%s3460 + $0x34] sm:$0xf]
          %v3475 = vld [vmem:[%s3460 + $0x38] sm:$0xf]
          %v3476 = vld [vmem:[%s3460 + $0x3c] sm:$0xf]
          %v3477 = vld [vmem:[%s3460 + $0x40] sm:$0xf]
          %v3478 = vld [vmem:[%s3460 + $0x44] sm:$0xf]
          %v3479 = vld [vmem:[%s3460 + $0x48] sm:$0xf]
          %v3480 = vld [vmem:[%s3460 + $0x4c] sm:$0xf]
          %v3481 = vld [vmem:[%s3460 + $0x50] sm:$0xf]
          %v3482 = vld [vmem:[%s3460 + $0x54] sm:$0xf]
          %v3483 = vld [vmem:[%s3460 + $0x58] sm:$0xf]
          %v3484 = vld [vmem:[%s3460 + $0x5c] sm:$0xf]
          %v3485 = vld [vmem:[#allocation3 + $0x100] sm:$0xff]
          %v3486 = vld [vmem:[#allocation3 + $0x108] sm:$0xff]
          %s3487 = smul.addr %s1549, 4
          %s3488 = scalar_lea.vmem %s3, %s3487
          %v3489 = vld [vmem:[%s3488] sm:$0xf]
          %v3490 = vld [vmem:[%s3488 + $0x4] sm:$0xf]
          %v3491 = vld [vmem:[%s3488 + $0x8] sm:$0xf]
          %v3492 = vld [vmem:[%s3488 + $0xc] sm:$0xf]
          %v3493 = vld [vmem:[%s3488 + $0x10] sm:$0xf]
          %v3494 = vld [vmem:[%s3488 + $0x14] sm:$0xf]
          %v3495 = vld [vmem:[%s3488 + $0x18] sm:$0xf]
          %v3496 = vld [vmem:[%s3488 + $0x1c] sm:$0xf]
          %v3497 = vld [vmem:[%s3488 + $0x20] sm:$0xf]
          %v3498 = vld [vmem:[%s3488 + $0x24] sm:$0xf]
          %v3499 = vld [vmem:[%s3488 + $0x28] sm:$0xf]
          %v3500 = vld [vmem:[%s3488 + $0x2c] sm:$0xf]
          %v3501 = vld [vmem:[%s3488 + $0x30] sm:$0xf]
          %v3502 = vld [vmem:[%s3488 + $0x34] sm:$0xf]
          %v3503 = vld [vmem:[%s3488 + $0x38] sm:$0xf]
          %v3504 = vld [vmem:[%s3488 + $0x3c] sm:$0xf]
          %v3505 = vld [vmem:[%s3488 + $0x40] sm:$0xf]
          %v3506 = vld [vmem:[%s3488 + $0x44] sm:$0xf]
          %v3507 = vld [vmem:[%s3488 + $0x48] sm:$0xf]
          %v3508 = vld [vmem:[%s3488 + $0x4c] sm:$0xf]
          %v3509 = vld [vmem:[%s3488 + $0x50] sm:$0xf]
          %v3510 = vld [vmem:[%s3488 + $0x54] sm:$0xf]
          %v3511 = vld [vmem:[%s3488 + $0x58] sm:$0xf]
          %v3512 = vld [vmem:[%s3488 + $0x5c] sm:$0xf]
          %v3545 = vunpack.c.l.b16 %v3429
          %v3546 = vunpack.c.h.b16 %v3429
          %v3547 = vunpack.c.l.b16 %v3430
          %v3548 = vunpack.c.h.b16 %v3430
          %v3549 = vunpack.c.l.b16 %v3431
          %v3550 = vunpack.c.h.b16 %v3431
          %v3551 = vunpack.c.l.b16 %v3432
          %v3552 = vunpack.c.h.b16 %v3432
          %v3553 = vunpack.c.l.b16 %v3433
          %v3554 = vunpack.c.h.b16 %v3433
          %v3555 = vunpack.c.l.b16 %v3434
          %v3556 = vunpack.c.h.b16 %v3434
          %v3557 = vunpack.c.l.b16 %v3435
          %v3558 = vunpack.c.h.b16 %v3435
          %v3559 = vunpack.c.l.b16 %v3436
          %v3560 = vunpack.c.h.b16 %v3436
          %v3561 = vunpack.c.l.b16 %v3437
          %v3562 = vunpack.c.h.b16 %v3437
          %v3563 = vunpack.c.l.b16 %v3438
          %v3564 = vunpack.c.h.b16 %v3438
          %v3565 = vunpack.c.l.b16 %v3439
          %v3566 = vunpack.c.h.b16 %v3439
          %v3567 = vunpack.c.l.b16 %v3440
          %v3568 = vunpack.c.h.b16 %v3440
          %v3569 = vunpack.c.l.b16 %v3441
          %v3570 = vunpack.c.h.b16 %v3441
          %v3571 = vunpack.c.l.b16 %v3442
          %v3572 = vunpack.c.h.b16 %v3442
          %v3573 = vunpack.c.l.b16 %v3443
          %v3574 = vunpack.c.h.b16 %v3443
          %v3575 = vunpack.c.l.b16 %v3444
          %v3576 = vunpack.c.h.b16 %v3444
          %v3577 = vunpack.c.l.b16 %v3445
          %v3578 = vunpack.c.h.b16 %v3445
          %v3579 = vunpack.c.l.b16 %v3446
          %v3580 = vunpack.c.h.b16 %v3446
          %v3581 = vunpack.c.l.b16 %v3447
          %v3582 = vunpack.c.h.b16 %v3447
          %v3583 = vunpack.c.l.b16 %v3448
          %v3584 = vunpack.c.h.b16 %v3448
          %v3585 = vunpack.c.l.b16 %v3449
          %v3586 = vunpack.c.h.b16 %v3449
          %v3587 = vunpack.c.l.b16 %v3450
          %v3588 = vunpack.c.h.b16 %v3450
          %v3589 = vunpack.c.l.b16 %v3451
          %v3590 = vunpack.c.h.b16 %v3451
          %v3591 = vunpack.c.l.b16 %v3452
          %v3592 = vunpack.c.h.b16 %v3452
          %v3593 = vunpack.c.l.b16 %v3453
          %v3594 = vunpack.c.h.b16 %v3453
          %v3595 = vunpack.c.l.b16 %v3454
          %v3596 = vunpack.c.h.b16 %v3454
          %v3597 = vunpack.c.l.b16 %v3455
          %v3598 = vunpack.c.h.b16 %v3455
          %v3599 = vunpack.c.l.b16 %v3456
          %v3600 = vunpack.c.h.b16 %v3456
          %v3601 = vunpack.c.l.b16 %v3457
          %v3602 = vunpack.c.h.b16 %v3457
          %v3603 = vunpack.c.l.b16 %v3458
          %v3604 = vunpack.c.h.b16 %v3458
          %v3605 = vunpack.c.l.b16 %v3485
          %v3606 = vunpack.c.h.b16 %v3485
          %v3607 = vunpack.c.l.b16 %v3486
          %v3608 = vunpack.c.h.b16 %v3486
          %v3609 = vpack.c.b16 %v3547, %v3545
          %v3610 = vpack.c.b16 %v3548, %v3546
          %v3611 = vpack.c.b16 %v3551, %v3549
          %v3612 = vpack.c.b16 %v3552, %v3550
          %v3613 = vpack.c.b16 %v3555, %v3553
          %v3614 = vpack.c.b16 %v3556, %v3554
          %v3615 = vpack.c.b16 %v3559, %v3557
          %v3616 = vpack.c.b16 %v3560, %v3558
          %v3617 = vpack.c.b16 %v3563, %v3561
          %v3618 = vpack.c.b16 %v3564, %v3562
          %v3619 = vpack.c.b16 %v3567, %v3565
          %v3620 = vpack.c.b16 %v3568, %v3566
          %v3621 = vpack.c.b16 %v3571, %v3569
          %v3622 = vpack.c.b16 %v3572, %v3570
          %v3623 = vpack.c.b16 %v3575, %v3573
          %v3624 = vpack.c.b16 %v3576, %v3574
          %v3625 = vpack.c.b16 %v3579, %v3577
          %v3626 = vpack.c.b16 %v3580, %v3578
          %v3627 = vpack.c.b16 %v3583, %v3581
          %v3628 = vpack.c.b16 %v3584, %v3582
          %v3629 = vpack.c.b16 %v3587, %v3585
          %v3630 = vpack.c.b16 %v3588, %v3586
          %v3631 = vpack.c.b16 %v3591, %v3589
          %v3632 = vpack.c.b16 %v3592, %v3590
          %v3633 = vpack.c.b16 %v3595, %v3593
          %v3634 = vpack.c.b16 %v3596, %v3594
          %v3635 = vpack.c.b16 %v3599, %v3597
          %v3636 = vpack.c.b16 %v3600, %v3598
          %v3637 = vpack.c.b16 %v3603, %v3601
          %v3638 = vpack.c.b16 %v3604, %v3602
          %v3639 = vpack.c.b16 %v3607, %v3605
          %v3640 = vpack.c.b16 %v3608, %v3606
          %v3681 = vunpack.c.l.b16 %v3489
          %v3682 = vunpack.c.l.b16 %v3490
          %v3683 = vunpack.c.l.b16 %v3491
          %v3684 = vunpack.c.l.b16 %v3492
          %v3685 = vunpack.c.l.b16 %v3493
          %v3686 = vunpack.c.l.b16 %v3494
          %v3687 = vunpack.c.l.b16 %v3495
          %v3688 = vunpack.c.l.b16 %v3496
          %v3689 = vunpack.c.l.b16 %v3497
          %v3690 = vunpack.c.l.b16 %v3498
          %v3691 = vunpack.c.l.b16 %v3499
          %v3692 = vunpack.c.l.b16 %v3500
          %v3693 = vunpack.c.l.b16 %v3501
          %v3694 = vunpack.c.l.b16 %v3502
          %v3695 = vunpack.c.l.b16 %v3503
          %v3696 = vunpack.c.l.b16 %v3504
          %v3697 = vunpack.c.l.b16 %v3505
          %v3698 = vunpack.c.l.b16 %v3506
          %v3699 = vunpack.c.l.b16 %v3507
          %v3700 = vunpack.c.l.b16 %v3508
          %v3701 = vunpack.c.l.b16 %v3509
          %v3702 = vunpack.c.l.b16 %v3510
          %v3703 = vunpack.c.l.b16 %v3511
          %v3704 = vunpack.c.l.b16 %v3512
          %v3705 = vpack.c.b16 %v3682, %v3681
          %v3706 = vpack.c.b16 %v3684, %v3683
          %v3707 = vpack.c.b16 %v3686, %v3685
          %v3708 = vpack.c.b16 %v3688, %v3687
          %v3709 = vpack.c.b16 %v3690, %v3689
          %v3710 = vpack.c.b16 %v3692, %v3691
          %v3711 = vpack.c.b16 %v3694, %v3693
          %v3712 = vpack.c.b16 %v3696, %v3695
          %v3713 = vpack.c.b16 %v3698, %v3697
          %v3714 = vpack.c.b16 %v3700, %v3699
          %v3715 = vpack.c.b16 %v3702, %v3701
          %v3716 = vpack.c.b16 %v3704, %v3703
          %v3730 = vsel %vm332, %v3610, 0
          %v3733 = vsel %vm332, %v3612, 0
          %v3736 = vsel %vm332, %v3614, 0
          %v3739 = vsel %vm332, %v3616, 0
          %v3742 = vsel %vm332, %v3618, 0
          %v3745 = vsel %vm332, %v3620, 0
          %v3748 = vsel %vm332, %v3622, 0
          %v3751 = vsel %vm332, %v3624, 0
          %v3754 = vsel %vm332, %v3626, 0
          %v3757 = vsel %vm332, %v3628, 0
          %v3760 = vsel %vm332, %v3630, 0
          %v3763 = vsel %vm332, %v3632, 0
          %v3766 = vsel %vm332, %v3634, 0
          %v3769 = vsel %vm332, %v3636, 0
          %v3772 = vsel %vm332, %v3638, 0
          %v3775 = vsel %vm332, %v3640, 0
          %3777 = vmatprep.subr.bf16.mxu0 0
          %3778 = vmatpush1.bf16.msra.mxu0 %v3712
          %3779 = vmatprep.subr.bf16.mxu0 0
          %3780 = vmatpush1.bf16.msra.mxu0 %v3711
          %3781 = vmatprep.subr.bf16.mxu0 0
          %3782 = vmatpush1.bf16.msra.mxu0 %v3710
          %3783 = vmatprep.subr.bf16.mxu0 0
          %3784 = vmatpush1.bf16.msra.mxu0 %v3709
          %3785 = vmatprep.subr.bf16.mxu0 0
          %3786 = vmatpush1.bf16.msra.mxu0 %v3708
          %3787 = vmatprep.subr.bf16.mxu0 0
          %3788 = vmatpush1.bf16.msra.mxu0 %v3707
          %3789 = vmatprep.subr.bf16.mxu0 0
          %3790 = vmatpush1.bf16.msra.mxu0 %v3706
          %3791 = vmatprep.subr.bf16.mxu0 0
          %3792 = vmatpush1.bf16.msra.mxu0 %v3705
          %3793 = vmatprep.subr.bf16.mxu0 0
          %3794 = vmatpush2.bf16.msra.mxu0 0
          %3795 = vmatprep.subr.bf16.mxu0 0
          %3796 = vmatpush2.bf16.msra.mxu0 0
          %3797 = vmatprep.subr.bf16.mxu0 0
          %3798 = vmatpush2.bf16.msra.mxu0 0
          %3799 = vmatprep.subr.bf16.mxu0 0
          %3800 = vmatpush2.bf16.msra.mxu0 0
          %3801 = vmatprep.subr.bf16.mxu0 0
          %3802 = vmatpush2.bf16.msra.mxu0 %v3716
          %3803 = vmatprep.subr.bf16.mxu0 0
          %3804 = vmatpush2.bf16.msra.mxu0 %v3715
          %3805 = vmatprep.subr.bf16.mxu0 0
          %3806 = vmatpush2.bf16.msra.mxu0 %v3714
          %3807 = vmatprep.subr.bf16.mxu0 0
          %3808 = vmatpush2.bf16.msra.mxu0 %v3713
          %3809 = vmatprep.mubr.bf16.mxu0 %v3730
          %3810 = vmatmul.mubr.bf16.gmra.mxu0 %v3609
          %v3811 = vpop.f32.mrf.mxu0
          %v3812 = vadd.f32 0.0, %v3811
          %v3813 = vpop.f32.mrf.mxu0
          %v3814 = vpop.f32.mrf.mxu0
          %v3815 = vadd.f32 0.0, %v3814
          %v3816 = vpop.f32.mrf.mxu0
          %3817 = vmatprep.mubr.bf16.mxu0 %v3733
          %3818 = vmatmul.mubr.bf16.gmra.mxu0 %v3611
          %v3819 = vpop.f32.mrf.mxu0
          %v3820 = vadd.f32 0.0, %v3819
          %v3821 = vpop.f32.mrf.mxu0
          %v3822 = vpop.f32.mrf.mxu0
          %v3823 = vadd.f32 0.0, %v3822
          %v3824 = vpop.f32.mrf.mxu0
          %3825 = vmatprep.mubr.bf16.mxu0 %v3736
          %3826 = vmatmul.mubr.bf16.gmra.mxu0 %v3613
          %v3827 = vpop.f32.mrf.mxu0
          %v3828 = vadd.f32 0.0, %v3827
          %v3829 = vpop.f32.mrf.mxu0
          %v3830 = vpop.f32.mrf.mxu0
          %v3831 = vadd.f32 0.0, %v3830
          %v3832 = vpop.f32.mrf.mxu0
          %3833 = vmatprep.mubr.bf16.mxu0 %v3739
          %3834 = vmatmul.mubr.bf16.gmra.mxu0 %v3615
          %v3835 = vpop.f32.mrf.mxu0
          %v3836 = vadd.f32 0.0, %v3835
          %v3837 = vpop.f32.mrf.mxu0
          %v3838 = vpop.f32.mrf.mxu0
          %v3839 = vadd.f32 0.0, %v3838
          %v3840 = vpop.f32.mrf.mxu0
          %3841 = vmatprep.mubr.bf16.mxu0 %v3742
          %3842 = vmatmul.mubr.bf16.gmra.mxu0 %v3617
          %v3843 = vpop.f32.mrf.mxu0
          %v3844 = vadd.f32 0.0, %v3843
          %v3845 = vpop.f32.mrf.mxu0
          %v3846 = vpop.f32.mrf.mxu0
          %v3847 = vadd.f32 0.0, %v3846
          %v3848 = vpop.f32.mrf.mxu0
          %3849 = vmatprep.mubr.bf16.mxu0 %v3745
          %3850 = vmatmul.mubr.bf16.gmra.mxu0 %v3619
          %v3851 = vpop.f32.mrf.mxu0
          %v3852 = vadd.f32 0.0, %v3851
          %v3853 = vpop.f32.mrf.mxu0
          %v3854 = vpop.f32.mrf.mxu0
          %v3855 = vadd.f32 0.0, %v3854
          %v3856 = vpop.f32.mrf.mxu0
          %3857 = vmatprep.mubr.bf16.mxu0 %v3748
          %3858 = vmatmul.mubr.bf16.gmra.mxu0 %v3621
          %v3859 = vpop.f32.mrf.mxu0
          %v3860 = vadd.f32 0.0, %v3859
          %v3861 = vpop.f32.mrf.mxu0
          %v3862 = vpop.f32.mrf.mxu0
          %v3863 = vadd.f32 0.0, %v3862
          %v3864 = vpop.f32.mrf.mxu0
          %3865 = vmatprep.mubr.bf16.mxu0 %v3751
          %3866 = vmatmul.mubr.bf16.gmra.mxu0 %v3623
          %v3867 = vpop.f32.mrf.mxu0
          %v3868 = vadd.f32 0.0, %v3867
          %v3869 = vpop.f32.mrf.mxu0
          %v3870 = vpop.f32.mrf.mxu0
          %v3871 = vadd.f32 0.0, %v3870
          %v3872 = vpop.f32.mrf.mxu0
          %3873 = vmatprep.mubr.bf16.mxu0 %v3754
          %3874 = vmatmul.mubr.bf16.gmra.mxu0 %v3625
          %v3875 = vpop.f32.mrf.mxu0
          %v3876 = vadd.f32 0.0, %v3875
          %v3877 = vpop.f32.mrf.mxu0
          %v3878 = vpop.f32.mrf.mxu0
          %v3879 = vadd.f32 0.0, %v3878
          %v3880 = vpop.f32.mrf.mxu0
          %3881 = vmatprep.mubr.bf16.mxu0 %v3757
          %3882 = vmatmul.mubr.bf16.gmra.mxu0 %v3627
          %v3883 = vpop.f32.mrf.mxu0
          %v3884 = vadd.f32 0.0, %v3883
          %v3885 = vpop.f32.mrf.mxu0
          %v3886 = vpop.f32.mrf.mxu0
          %v3887 = vadd.f32 0.0, %v3886
          %v3888 = vpop.f32.mrf.mxu0
          %3889 = vmatprep.mubr.bf16.mxu0 %v3760
          %3890 = vmatmul.mubr.bf16.gmra.mxu0 %v3629
          %v3891 = vpop.f32.mrf.mxu0
          %v3892 = vadd.f32 0.0, %v3891
          %v3893 = vpop.f32.mrf.mxu0
          %v3894 = vpop.f32.mrf.mxu0
          %v3895 = vadd.f32 0.0, %v3894
          %v3896 = vpop.f32.mrf.mxu0
          %3897 = vmatprep.mubr.bf16.mxu0 %v3763
          %3898 = vmatmul.mubr.bf16.gmra.mxu0 %v3631
          %v3899 = vpop.f32.mrf.mxu0
          %v3900 = vadd.f32 0.0, %v3899
          %v3901 = vpop.f32.mrf.mxu0
          %v3902 = vpop.f32.mrf.mxu0
          %v3903 = vadd.f32 0.0, %v3902
          %v3904 = vpop.f32.mrf.mxu0
          %3905 = vmatprep.mubr.bf16.mxu0 %v3766
          %3906 = vmatmul.mubr.bf16.gmra.mxu0 %v3633
          %v3907 = vpop.f32.mrf.mxu0
          %v3908 = vadd.f32 0.0, %v3907
          %v3909 = vpop.f32.mrf.mxu0
          %v3910 = vpop.f32.mrf.mxu0
          %v3911 = vadd.f32 0.0, %v3910
          %v3912 = vpop.f32.mrf.mxu0
          %3913 = vmatprep.mubr.bf16.mxu0 %v3769
          %3914 = vmatmul.mubr.bf16.gmra.mxu0 %v3635
          %v3915 = vpop.f32.mrf.mxu0
          %v3916 = vadd.f32 0.0, %v3915
          %v3917 = vpop.f32.mrf.mxu0
          %v3918 = vpop.f32.mrf.mxu0
          %v3919 = vadd.f32 0.0, %v3918
          %v3920 = vpop.f32.mrf.mxu0
          %3921 = vmatprep.mubr.bf16.mxu0 %v3772
          %3922 = vmatmul.mubr.bf16.gmra.mxu0 %v3637
          %v3923 = vpop.f32.mrf.mxu0
          %v3924 = vadd.f32 0.0, %v3923
          %v3925 = vpop.f32.mrf.mxu0
          %v3926 = vpop.f32.mrf.mxu0
          %v3927 = vadd.f32 0.0, %v3926
          %v3928 = vpop.f32.mrf.mxu0
          %3929 = vmatprep.mubr.bf16.mxu0 %v3775
          %3930 = vmatmul.mubr.bf16.gmra.mxu0 %v3639
          %v3931 = vpop.f32.mrf.mxu0
          %v3932 = vadd.f32 0.0, %v3931
          %v3933 = vpop.f32.mrf.mxu0
          %v3934 = vpop.f32.mrf.mxu0
          %v3935 = vadd.f32 0.0, %v3934
          %v3936 = vpop.f32.mrf.mxu0
          %3937 = vdwg.mxu0
          %v3940 = vunpack.c.l.b16 %v3427
          %v3941 = vunpack.c.h.b16 %v3427
          %v3942 = vunpack.c.l.b16 %v3428
          %v3943 = vunpack.c.h.b16 %v3428
          %v3944 = vpack.c.b16 %v3942, %v3940
          %v3945 = vpack.c.b16 %v3943, %v3941
          %v3971 = vunpack.c.l.b16 %v3461
          %v3972 = vunpack.c.l.b16 %v3462
          %v3973 = vunpack.c.l.b16 %v3463
          %v3974 = vunpack.c.l.b16 %v3464
          %v3975 = vunpack.c.l.b16 %v3465
          %v3976 = vunpack.c.l.b16 %v3466
          %v3977 = vunpack.c.l.b16 %v3467
          %v3978 = vunpack.c.l.b16 %v3468
          %v3979 = vunpack.c.l.b16 %v3469
          %v3980 = vunpack.c.l.b16 %v3470
          %v3981 = vunpack.c.l.b16 %v3471
          %v3982 = vunpack.c.l.b16 %v3472
          %v3983 = vunpack.c.l.b16 %v3473
          %v3984 = vunpack.c.l.b16 %v3474
          %v3985 = vunpack.c.l.b16 %v3475
          %v3986 = vunpack.c.l.b16 %v3476
          %v3987 = vunpack.c.l.b16 %v3477
          %v3988 = vunpack.c.l.b16 %v3478
          %v3989 = vunpack.c.l.b16 %v3479
          %v3990 = vunpack.c.l.b16 %v3480
          %v3991 = vunpack.c.l.b16 %v3481
          %v3992 = vunpack.c.l.b16 %v3482
          %v3993 = vunpack.c.l.b16 %v3483
          %v3994 = vunpack.c.l.b16 %v3484
          %v3995 = vpack.c.b16 %v3972, %v3971
          %v3996 = vpack.c.b16 %v3974, %v3973
          %v3997 = vpack.c.b16 %v3976, %v3975
          %v3998 = vpack.c.b16 %v3978, %v3977
          %v3999 = vpack.c.b16 %v3980, %v3979
          %v4000 = vpack.c.b16 %v3982, %v3981
          %v4001 = vpack.c.b16 %v3984, %v3983
          %v4002 = vpack.c.b16 %v3986, %v3985
          %v4003 = vpack.c.b16 %v3988, %v3987
          %v4004 = vpack.c.b16 %v3990, %v3989
          %v4005 = vpack.c.b16 %v3992, %v3991
          %v4006 = vpack.c.b16 %v3994, %v3993
          %v4020 = vsel %vm332, %v3945, 0
          %4022 = vmatprep.subr.bf16.mxu0 0
          %4023 = vmatpush1.bf16.msra.mxu0 %v4002
          %4024 = vmatprep.subr.bf16.mxu0 0
          %4025 = vmatpush1.bf16.msra.mxu0 %v4001
          %4026 = vmatprep.subr.bf16.mxu0 0
          %4027 = vmatpush1.bf16.msra.mxu0 %v4000
          %4028 = vmatprep.subr.bf16.mxu0 0
          %4029 = vmatpush1.bf16.msra.mxu0 %v3999
          %4030 = vmatprep.subr.bf16.mxu0 0
          %4031 = vmatpush1.bf16.msra.mxu0 %v3998
          %4032 = vmatprep.subr.bf16.mxu0 0
          %4033 = vmatpush1.bf16.msra.mxu0 %v3997
          %4034 = vmatprep.subr.bf16.mxu0 0
          %4035 = vmatpush1.bf16.msra.mxu0 %v3996
          %4036 = vmatprep.subr.bf16.mxu0 0
          %4037 = vmatpush1.bf16.msra.mxu0 %v3995
          %4038 = vmatprep.subr.bf16.mxu0 0
          %4039 = vmatpush2.bf16.msra.mxu0 0
          %4040 = vmatprep.subr.bf16.mxu0 0
          %4041 = vmatpush2.bf16.msra.mxu0 0
          %4042 = vmatprep.subr.bf16.mxu0 0
          %4043 = vmatpush2.bf16.msra.mxu0 0
          %4044 = vmatprep.subr.bf16.mxu0 0
          %4045 = vmatpush2.bf16.msra.mxu0 0
          %4046 = vmatprep.subr.bf16.mxu0 0
          %4047 = vmatpush2.bf16.msra.mxu0 %v4006
          %4048 = vmatprep.subr.bf16.mxu0 0
          %4049 = vmatpush2.bf16.msra.mxu0 %v4005
          %4050 = vmatprep.subr.bf16.mxu0 0
          %4051 = vmatpush2.bf16.msra.mxu0 %v4004
          %4052 = vmatprep.subr.bf16.mxu0 0
          %4053 = vmatpush2.bf16.msra.mxu0 %v4003
          %4054 = vmatprep.mubr.bf16.mxu0 %v4020
          %4055 = vmatmul.mubr.bf16.gmra.mxu0 %v3944
          %v4056 = vpop.f32.mrf.mxu0
          %v4057 = vadd.f32 %v3812, %v4056
          %v4058 = vpop.f32.mrf.mxu0
          %v4059 = vpop.f32.mrf.mxu0
          %v4060 = vadd.f32 %v3815, %v4059
          %v4061 = vpop.f32.mrf.mxu0
          %4062 = vmatprep.mubr.bf16.mxu0 %v3730
          %4063 = vmatmul.mubr.bf16.gmra.mxu0 %v3609
          %v4064 = vpop.f32.mrf.mxu0
          %v4065 = vadd.f32 %v3820, %v4064
          %v4066 = vpop.f32.mrf.mxu0
          %v4067 = vpop.f32.mrf.mxu0
          %v4068 = vadd.f32 %v3823, %v4067
          %v4069 = vpop.f32.mrf.mxu0
          %4070 = vmatprep.mubr.bf16.mxu0 %v3733
          %4071 = vmatmul.mubr.bf16.gmra.mxu0 %v3611
          %v4072 = vpop.f32.mrf.mxu0
          %v4073 = vadd.f32 %v3828, %v4072
          %v4074 = vpop.f32.mrf.mxu0
          %v4075 = vpop.f32.mrf.mxu0
          %v4076 = vadd.f32 %v3831, %v4075
          %v4077 = vpop.f32.mrf.mxu0
          %4078 = vmatprep.mubr.bf16.mxu0 %v3736
          %4079 = vmatmul.mubr.bf16.gmra.mxu0 %v3613
          %v4080 = vpop.f32.mrf.mxu0
          %v4081 = vadd.f32 %v3836, %v4080
          %v4082 = vpop.f32.mrf.mxu0
          %v4083 = vpop.f32.mrf.mxu0
          %v4084 = vadd.f32 %v3839, %v4083
          %v4085 = vpop.f32.mrf.mxu0
          %4086 = vmatprep.mubr.bf16.mxu0 %v3739
          %4087 = vmatmul.mubr.bf16.gmra.mxu0 %v3615
          %v4088 = vpop.f32.mrf.mxu0
          %v4089 = vadd.f32 %v3844, %v4088
          %v4090 = vpop.f32.mrf.mxu0
          %v4091 = vpop.f32.mrf.mxu0
          %v4092 = vadd.f32 %v3847, %v4091
          %v4093 = vpop.f32.mrf.mxu0
          %4094 = vmatprep.mubr.bf16.mxu0 %v3742
          %4095 = vmatmul.mubr.bf16.gmra.mxu0 %v3617
          %v4096 = vpop.f32.mrf.mxu0
          %v4097 = vadd.f32 %v3852, %v4096
          %v4098 = vpop.f32.mrf.mxu0
          %v4099 = vpop.f32.mrf.mxu0
          %v4100 = vadd.f32 %v3855, %v4099
          %v4101 = vpop.f32.mrf.mxu0
          %4102 = vmatprep.mubr.bf16.mxu0 %v3745
          %4103 = vmatmul.mubr.bf16.gmra.mxu0 %v3619
          %v4104 = vpop.f32.mrf.mxu0
          %v4105 = vadd.f32 %v3860, %v4104
          %v4106 = vpop.f32.mrf.mxu0
          %v4107 = vpop.f32.mrf.mxu0
          %v4108 = vadd.f32 %v3863, %v4107
          %v4109 = vpop.f32.mrf.mxu0
          %4110 = vmatprep.mubr.bf16.mxu0 %v3748
          %4111 = vmatmul.mubr.bf16.gmra.mxu0 %v3621
          %v4112 = vpop.f32.mrf.mxu0
          %v4113 = vadd.f32 %v3868, %v4112
          %v4114 = vpop.f32.mrf.mxu0
          %v4115 = vpop.f32.mrf.mxu0
          %v4116 = vadd.f32 %v3871, %v4115
          %v4117 = vpop.f32.mrf.mxu0
          %4118 = vmatprep.mubr.bf16.mxu0 %v3751
          %4119 = vmatmul.mubr.bf16.gmra.mxu0 %v3623
          %v4120 = vpop.f32.mrf.mxu0
          %v4121 = vadd.f32 %v3876, %v4120
          %v4122 = vpop.f32.mrf.mxu0
          %v4123 = vpop.f32.mrf.mxu0
          %v4124 = vadd.f32 %v3879, %v4123
          %v4125 = vpop.f32.mrf.mxu0
          %4126 = vmatprep.mubr.bf16.mxu0 %v3754
          %4127 = vmatmul.mubr.bf16.gmra.mxu0 %v3625
          %v4128 = vpop.f32.mrf.mxu0
          %v4129 = vadd.f32 %v3884, %v4128
          %v4130 = vpop.f32.mrf.mxu0
          %v4131 = vpop.f32.mrf.mxu0
          %v4132 = vadd.f32 %v3887, %v4131
          %v4133 = vpop.f32.mrf.mxu0
          %4134 = vmatprep.mubr.bf16.mxu0 %v3757
          %4135 = vmatmul.mubr.bf16.gmra.mxu0 %v3627
          %v4136 = vpop.f32.mrf.mxu0
          %v4137 = vadd.f32 %v3892, %v4136
          %v4138 = vpop.f32.mrf.mxu0
          %v4139 = vpop.f32.mrf.mxu0
          %v4140 = vadd.f32 %v3895, %v4139
          %v4141 = vpop.f32.mrf.mxu0
          %4142 = vmatprep.mubr.bf16.mxu0 %v3760
          %4143 = vmatmul.mubr.bf16.gmra.mxu0 %v3629
          %v4144 = vpop.f32.mrf.mxu0
          %v4145 = vadd.f32 %v3900, %v4144
          %v4146 = vpop.f32.mrf.mxu0
          %v4147 = vpop.f32.mrf.mxu0
          %v4148 = vadd.f32 %v3903, %v4147
          %v4149 = vpop.f32.mrf.mxu0
          %4150 = vmatprep.mubr.bf16.mxu0 %v3763
          %4151 = vmatmul.mubr.bf16.gmra.mxu0 %v3631
          %v4152 = vpop.f32.mrf.mxu0
          %v4153 = vadd.f32 %v3908, %v4152
          %v4154 = vpop.f32.mrf.mxu0
          %v4155 = vpop.f32.mrf.mxu0
          %v4156 = vadd.f32 %v3911, %v4155
          %v4157 = vpop.f32.mrf.mxu0
          %4158 = vmatprep.mubr.bf16.mxu0 %v3766
          %4159 = vmatmul.mubr.bf16.gmra.mxu0 %v3633
          %v4160 = vpop.f32.mrf.mxu0
          %v4161 = vadd.f32 %v3916, %v4160
          %v4162 = vpop.f32.mrf.mxu0
          %v4163 = vpop.f32.mrf.mxu0
          %v4164 = vadd.f32 %v3919, %v4163
          %v4165 = vpop.f32.mrf.mxu0
          %4166 = vmatprep.mubr.bf16.mxu0 %v3769
          %4167 = vmatmul.mubr.bf16.gmra.mxu0 %v3635
          %v4168 = vpop.f32.mrf.mxu0
          %v4169 = vadd.f32 %v3924, %v4168
          %v4170 = vpop.f32.mrf.mxu0
          %v4171 = vpop.f32.mrf.mxu0
          %v4172 = vadd.f32 %v3927, %v4171
          %v4173 = vpop.f32.mrf.mxu0
          %4174 = vmatprep.mubr.bf16.mxu0 %v3772
          %4175 = vmatmul.mubr.bf16.gmra.mxu0 %v3637
          %v4176 = vpop.f32.mrf.mxu0
          %v4177 = vadd.f32 %v3932, %v4176
          %v4178 = vpop.f32.mrf.mxu0
          %v4179 = vpop.f32.mrf.mxu0
          %v4180 = vadd.f32 %v3935, %v4179
          %v4181 = vpop.f32.mrf.mxu0
          %4182 = vdwg.mxu0
          %v4183 = vld [vmem:[#allocation3 + $0x20] sm:$0xff]
          %v4184 = vld [vmem:[#allocation3 + $0x28] sm:$0xff]
          %v4185 = vld [vmem:[#allocation3 + $0x30] sm:$0xff]
          %v4186 = vld [vmem:[#allocation3 + $0x38] sm:$0xff]
          %v4187 = vld [vmem:[#allocation3 + $0x40] sm:$0xff]
          %v4188 = vld [vmem:[#allocation3 + $0x48] sm:$0xff]
          %v4189 = vld [vmem:[#allocation3 + $0x50] sm:$0xff]
          %v4190 = vld [vmem:[#allocation3 + $0x58] sm:$0xff]
          %v4191 = vld [vmem:[#allocation3 + $0x60] sm:$0xff]
          %v4192 = vld [vmem:[#allocation3 + $0x68] sm:$0xff]
          %v4193 = vld [vmem:[#allocation3 + $0x70] sm:$0xff]
          %v4194 = vld [vmem:[#allocation3 + $0x78] sm:$0xff]
          %v4195 = vld [vmem:[#allocation3 + $0x80] sm:$0xff]
          %v4196 = vld [vmem:[#allocation3 + $0x88] sm:$0xff]
          %v4197 = vld [vmem:[#allocation3 + $0x90] sm:$0xff]
          %v4198 = vld [vmem:[#allocation3 + $0x98] sm:$0xff]
          %v4199 = vld [vmem:[#allocation3 + $0xa0] sm:$0xff]
          %v4200 = vld [vmem:[#allocation3 + $0xa8] sm:$0xff]
          %v4201 = vld [vmem:[#allocation3 + $0xb0] sm:$0xff]
          %v4202 = vld [vmem:[#allocation3 + $0xb8] sm:$0xff]
          %v4203 = vld [vmem:[#allocation3 + $0xc0] sm:$0xff]
          %v4204 = vld [vmem:[#allocation3 + $0xc8] sm:$0xff]
          %v4205 = vld [vmem:[#allocation3 + $0xd0] sm:$0xff]
          %v4206 = vld [vmem:[#allocation3 + $0xd8] sm:$0xff]
          %v4207 = vld [vmem:[#allocation3 + $0xe0] sm:$0xff]
          %v4208 = vld [vmem:[#allocation3 + $0xe8] sm:$0xff]
          %v4209 = vld [vmem:[#allocation3 + $0xf0] sm:$0xff]
          %v4210 = vld [vmem:[#allocation3 + $0xf8] sm:$0xff]
          %v4211 = vld [vmem:[#allocation3 + $0x100] sm:$0xff]
          %v4212 = vld [vmem:[#allocation3 + $0x108] sm:$0xff]
          %v4213 = vld [vmem:[#allocation3 + $0x110] sm:$0xff]
          %v4214 = vld [vmem:[#allocation3 + $0x118] sm:$0xff]
          %s4215 = smul.addr %s2279, 4
          %s4216 = scalar_lea.vmem %s3, %s4215
          %v4217 = vld [vmem:[%s4216] sm:$0xf]
          %v4218 = vld [vmem:[%s4216 + $0x4] sm:$0xf]
          %v4219 = vld [vmem:[%s4216 + $0x8] sm:$0xf]
          %v4220 = vld [vmem:[%s4216 + $0xc] sm:$0xf]
          %v4221 = vld [vmem:[%s4216 + $0x10] sm:$0xf]
          %v4222 = vld [vmem:[%s4216 + $0x14] sm:$0xf]
          %v4223 = vld [vmem:[%s4216 + $0x18] sm:$0xf]
          %v4224 = vld [vmem:[%s4216 + $0x1c] sm:$0xf]
          %v4225 = vld [vmem:[%s4216 + $0x20] sm:$0xf]
          %v4226 = vld [vmem:[%s4216 + $0x24] sm:$0xf]
          %v4227 = vld [vmem:[%s4216 + $0x28] sm:$0xf]
          %v4228 = vld [vmem:[%s4216 + $0x2c] sm:$0xf]
          %v4229 = vld [vmem:[%s4216 + $0x30] sm:$0xf]
          %v4230 = vld [vmem:[%s4216 + $0x34] sm:$0xf]
          %v4231 = vld [vmem:[%s4216 + $0x38] sm:$0xf]
          %v4232 = vld [vmem:[%s4216 + $0x3c] sm:$0xf]
          %v4233 = vld [vmem:[%s4216 + $0x40] sm:$0xf]
          %v4234 = vld [vmem:[%s4216 + $0x44] sm:$0xf]
          %v4235 = vld [vmem:[%s4216 + $0x48] sm:$0xf]
          %v4236 = vld [vmem:[%s4216 + $0x4c] sm:$0xf]
          %v4237 = vld [vmem:[%s4216 + $0x50] sm:$0xf]
          %v4238 = vld [vmem:[%s4216 + $0x54] sm:$0xf]
          %v4239 = vld [vmem:[%s4216 + $0x58] sm:$0xf]
          %v4240 = vld [vmem:[%s4216 + $0x5c] sm:$0xf]
          %v4273 = vunpack.c.l.b16 %v4183
          %v4274 = vunpack.c.h.b16 %v4183
          %v4275 = vunpack.c.l.b16 %v4184
          %v4276 = vunpack.c.h.b16 %v4184
          %v4277 = vunpack.c.l.b16 %v4185
          %v4278 = vunpack.c.h.b16 %v4185
          %v4279 = vunpack.c.l.b16 %v4186
          %v4280 = vunpack.c.h.b16 %v4186
          %v4281 = vunpack.c.l.b16 %v4187
          %v4282 = vunpack.c.h.b16 %v4187
          %v4283 = vunpack.c.l.b16 %v4188
          %v4284 = vunpack.c.h.b16 %v4188
          %v4285 = vunpack.c.l.b16 %v4189
          %v4286 = vunpack.c.h.b16 %v4189
          %v4287 = vunpack.c.l.b16 %v4190
          %v4288 = vunpack.c.h.b16 %v4190
          %v4289 = vunpack.c.l.b16 %v4191
          %v4290 = vunpack.c.h.b16 %v4191
          %v4291 = vunpack.c.l.b16 %v4192
          %v4292 = vunpack.c.h.b16 %v4192
          %v4293 = vunpack.c.l.b16 %v4193
          %v4294 = vunpack.c.h.b16 %v4193
          %v4295 = vunpack.c.l.b16 %v4194
          %v4296 = vunpack.c.h.b16 %v4194
          %v4297 = vunpack.c.l.b16 %v4195
          %v4298 = vunpack.c.h.b16 %v4195
          %v4299 = vunpack.c.l.b16 %v4196
          %v4300 = vunpack.c.h.b16 %v4196
          %v4301 = vunpack.c.l.b16 %v4197
          %v4302 = vunpack.c.h.b16 %v4197
          %v4303 = vunpack.c.l.b16 %v4198
          %v4304 = vunpack.c.h.b16 %v4198
          %v4305 = vunpack.c.l.b16 %v4199
          %v4306 = vunpack.c.h.b16 %v4199
          %v4307 = vunpack.c.l.b16 %v4200
          %v4308 = vunpack.c.h.b16 %v4200
          %v4309 = vunpack.c.l.b16 %v4201
          %v4310 = vunpack.c.h.b16 %v4201
          %v4311 = vunpack.c.l.b16 %v4202
          %v4312 = vunpack.c.h.b16 %v4202
          %v4313 = vunpack.c.l.b16 %v4203
          %v4314 = vunpack.c.h.b16 %v4203
          %v4315 = vunpack.c.l.b16 %v4204
          %v4316 = vunpack.c.h.b16 %v4204
          %v4317 = vunpack.c.l.b16 %v4205
          %v4318 = vunpack.c.h.b16 %v4205
          %v4319 = vunpack.c.l.b16 %v4206
          %v4320 = vunpack.c.h.b16 %v4206
          %v4321 = vunpack.c.l.b16 %v4207
          %v4322 = vunpack.c.h.b16 %v4207
          %v4323 = vunpack.c.l.b16 %v4208
          %v4324 = vunpack.c.h.b16 %v4208
          %v4325 = vunpack.c.l.b16 %v4209
          %v4326 = vunpack.c.h.b16 %v4209
          %v4327 = vunpack.c.l.b16 %v4210
          %v4328 = vunpack.c.h.b16 %v4210
          %v4329 = vunpack.c.l.b16 %v4211
          %v4330 = vunpack.c.h.b16 %v4211
          %v4331 = vunpack.c.l.b16 %v4212
          %v4332 = vunpack.c.h.b16 %v4212
          %v4333 = vunpack.c.l.b16 %v4213
          %v4334 = vunpack.c.h.b16 %v4213
          %v4335 = vunpack.c.l.b16 %v4214
          %v4336 = vunpack.c.h.b16 %v4214
          %v4337 = vpack.c.b16 %v4275, %v4273
          %v4338 = vpack.c.b16 %v4276, %v4274
          %v4339 = vpack.c.b16 %v4279, %v4277
          %v4340 = vpack.c.b16 %v4280, %v4278
          %v4341 = vpack.c.b16 %v4283, %v4281
          %v4342 = vpack.c.b16 %v4284, %v4282
          %v4343 = vpack.c.b16 %v4287, %v4285
          %v4344 = vpack.c.b16 %v4288, %v4286
          %v4345 = vpack.c.b16 %v4291, %v4289
          %v4346 = vpack.c.b16 %v4292, %v4290
          %v4347 = vpack.c.b16 %v4295, %v4293
          %v4348 = vpack.c.b16 %v4296, %v4294
          %v4349 = vpack.c.b16 %v4299, %v4297
          %v4350 = vpack.c.b16 %v4300, %v4298
          %v4351 = vpack.c.b16 %v4303, %v4301
          %v4352 = vpack.c.b16 %v4304, %v4302
          %v4353 = vpack.c.b16 %v4307, %v4305
          %v4354 = vpack.c.b16 %v4308, %v4306
          %v4355 = vpack.c.b16 %v4311, %v4309
          %v4356 = vpack.c.b16 %v4312, %v4310
          %v4357 = vpack.c.b16 %v4315, %v4313
          %v4358 = vpack.c.b16 %v4316, %v4314
          %v4359 = vpack.c.b16 %v4319, %v4317
          %v4360 = vpack.c.b16 %v4320, %v4318
          %v4361 = vpack.c.b16 %v4323, %v4321
          %v4362 = vpack.c.b16 %v4324, %v4322
          %v4363 = vpack.c.b16 %v4327, %v4325
          %v4364 = vpack.c.b16 %v4328, %v4326
          %v4365 = vpack.c.b16 %v4331, %v4329
          %v4366 = vpack.c.b16 %v4332, %v4330
          %v4367 = vpack.c.b16 %v4335, %v4333
          %v4368 = vpack.c.b16 %v4336, %v4334
          %v4409 = vunpack.c.l.b16 %v4217
          %v4410 = vunpack.c.l.b16 %v4218
          %v4411 = vunpack.c.l.b16 %v4219
          %v4412 = vunpack.c.l.b16 %v4220
          %v4413 = vunpack.c.l.b16 %v4221
          %v4414 = vunpack.c.l.b16 %v4222
          %v4415 = vunpack.c.l.b16 %v4223
          %v4416 = vunpack.c.l.b16 %v4224
          %v4417 = vunpack.c.l.b16 %v4225
          %v4418 = vunpack.c.l.b16 %v4226
          %v4419 = vunpack.c.l.b16 %v4227
          %v4420 = vunpack.c.l.b16 %v4228
          %v4421 = vunpack.c.l.b16 %v4229
          %v4422 = vunpack.c.l.b16 %v4230
          %v4423 = vunpack.c.l.b16 %v4231
          %v4424 = vunpack.c.l.b16 %v4232
          %v4425 = vunpack.c.l.b16 %v4233
          %v4426 = vunpack.c.l.b16 %v4234
          %v4427 = vunpack.c.l.b16 %v4235
          %v4428 = vunpack.c.l.b16 %v4236
          %v4429 = vunpack.c.l.b16 %v4237
          %v4430 = vunpack.c.l.b16 %v4238
          %v4431 = vunpack.c.l.b16 %v4239
          %v4432 = vunpack.c.l.b16 %v4240
          %v4433 = vpack.c.b16 %v4410, %v4409
          %v4434 = vpack.c.b16 %v4412, %v4411
          %v4435 = vpack.c.b16 %v4414, %v4413
          %v4436 = vpack.c.b16 %v4416, %v4415
          %v4437 = vpack.c.b16 %v4418, %v4417
          %v4438 = vpack.c.b16 %v4420, %v4419
          %v4439 = vpack.c.b16 %v4422, %v4421
          %v4440 = vpack.c.b16 %v4424, %v4423
          %v4441 = vpack.c.b16 %v4426, %v4425
          %v4442 = vpack.c.b16 %v4428, %v4427
          %v4443 = vpack.c.b16 %v4430, %v4429
          %v4444 = vpack.c.b16 %v4432, %v4431
          %v4458 = vsel %vm332, %v4338, 0
          %v4461 = vsel %vm332, %v4340, 0
          %v4464 = vsel %vm332, %v4342, 0
          %v4467 = vsel %vm332, %v4344, 0
          %v4470 = vsel %vm332, %v4346, 0
          %v4473 = vsel %vm332, %v4348, 0
          %v4476 = vsel %vm332, %v4350, 0
          %v4479 = vsel %vm332, %v4352, 0
          %v4482 = vsel %vm332, %v4354, 0
          %v4485 = vsel %vm332, %v4356, 0
          %v4488 = vsel %vm332, %v4358, 0
          %v4491 = vsel %vm332, %v4360, 0
          %v4494 = vsel %vm332, %v4362, 0
          %v4497 = vsel %vm332, %v4364, 0
          %v4500 = vsel %vm332, %v4366, 0
          %v4503 = vsel %vm332, %v4368, 0
          %4505 = vmatprep.subr.bf16.mxu0 0
          %4506 = vmatpush1.bf16.msra.mxu0 %v4440
          %4507 = vmatprep.subr.bf16.mxu0 0
          %4508 = vmatpush1.bf16.msra.mxu0 %v4439
          %4509 = vmatprep.subr.bf16.mxu0 0
          %4510 = vmatpush1.bf16.msra.mxu0 %v4438
          %4511 = vmatprep.subr.bf16.mxu0 0
          %4512 = vmatpush1.bf16.msra.mxu0 %v4437
          %4513 = vmatprep.subr.bf16.mxu0 0
          %4514 = vmatpush1.bf16.msra.mxu0 %v4436
          %4515 = vmatprep.subr.bf16.mxu0 0
          %4516 = vmatpush1.bf16.msra.mxu0 %v4435
          %4517 = vmatprep.subr.bf16.mxu0 0
          %4518 = vmatpush1.bf16.msra.mxu0 %v4434
          %4519 = vmatprep.subr.bf16.mxu0 0
          %4520 = vmatpush1.bf16.msra.mxu0 %v4433
          %4521 = vmatprep.subr.bf16.mxu0 0
          %4522 = vmatpush2.bf16.msra.mxu0 0
          %4523 = vmatprep.subr.bf16.mxu0 0
          %4524 = vmatpush2.bf16.msra.mxu0 0
          %4525 = vmatprep.subr.bf16.mxu0 0
          %4526 = vmatpush2.bf16.msra.mxu0 0
          %4527 = vmatprep.subr.bf16.mxu0 0
          %4528 = vmatpush2.bf16.msra.mxu0 0
          %4529 = vmatprep.subr.bf16.mxu0 0
          %4530 = vmatpush2.bf16.msra.mxu0 %v4444
          %4531 = vmatprep.subr.bf16.mxu0 0
          %4532 = vmatpush2.bf16.msra.mxu0 %v4443
          %4533 = vmatprep.subr.bf16.mxu0 0
          %4534 = vmatpush2.bf16.msra.mxu0 %v4442
          %4535 = vmatprep.subr.bf16.mxu0 0
          %4536 = vmatpush2.bf16.msra.mxu0 %v4441
          %4537 = vmatprep.mubr.bf16.mxu0 %v4458
          %4538 = vmatmul.mubr.bf16.gmra.mxu0 %v4337
          %v4539 = vpop.f32.mrf.mxu0
          %v4540 = vadd.f32 0.0, %v4539
          %v4541 = vpop.f32.mrf.mxu0
          %v4542 = vpop.f32.mrf.mxu0
          %v4543 = vadd.f32 0.0, %v4542
          %v4544 = vpop.f32.mrf.mxu0
          %4545 = vmatprep.mubr.bf16.mxu0 %v4461
          %4546 = vmatmul.mubr.bf16.gmra.mxu0 %v4339
          %v4547 = vpop.f32.mrf.mxu0
          %v4548 = vadd.f32 0.0, %v4547
          %v4549 = vpop.f32.mrf.mxu0
          %v4550 = vpop.f32.mrf.mxu0
          %v4551 = vadd.f32 0.0, %v4550
          %v4552 = vpop.f32.mrf.mxu0
          %4553 = vmatprep.mubr.bf16.mxu0 %v4464
          %4554 = vmatmul.mubr.bf16.gmra.mxu0 %v4341
          %v4555 = vpop.f32.mrf.mxu0
          %v4556 = vadd.f32 0.0, %v4555
          %v4557 = vpop.f32.mrf.mxu0
          %v4558 = vpop.f32.mrf.mxu0
          %v4559 = vadd.f32 0.0, %v4558
          %v4560 = vpop.f32.mrf.mxu0
          %4561 = vmatprep.mubr.bf16.mxu0 %v4467
          %4562 = vmatmul.mubr.bf16.gmra.mxu0 %v4343
          %v4563 = vpop.f32.mrf.mxu0
          %v4564 = vadd.f32 0.0, %v4563
          %v4565 = vpop.f32.mrf.mxu0
          %v4566 = vpop.f32.mrf.mxu0
          %v4567 = vadd.f32 0.0, %v4566
          %v4568 = vpop.f32.mrf.mxu0
          %4569 = vmatprep.mubr.bf16.mxu0 %v4470
          %4570 = vmatmul.mubr.bf16.gmra.mxu0 %v4345
          %v4571 = vpop.f32.mrf.mxu0
          %v4572 = vadd.f32 0.0, %v4571
          %v4573 = vpop.f32.mrf.mxu0
          %v4574 = vpop.f32.mrf.mxu0
          %v4575 = vadd.f32 0.0, %v4574
          %v4576 = vpop.f32.mrf.mxu0
          %4577 = vmatprep.mubr.bf16.mxu0 %v4473
          %4578 = vmatmul.mubr.bf16.gmra.mxu0 %v4347
          %v4579 = vpop.f32.mrf.mxu0
          %v4580 = vadd.f32 0.0, %v4579
          %v4581 = vpop.f32.mrf.mxu0
          %v4582 = vpop.f32.mrf.mxu0
          %v4583 = vadd.f32 0.0, %v4582
          %v4584 = vpop.f32.mrf.mxu0
          %4585 = vmatprep.mubr.bf16.mxu0 %v4476
          %4586 = vmatmul.mubr.bf16.gmra.mxu0 %v4349
          %v4587 = vpop.f32.mrf.mxu0
          %v4588 = vadd.f32 0.0, %v4587
          %v4589 = vpop.f32.mrf.mxu0
          %v4590 = vpop.f32.mrf.mxu0
          %v4591 = vadd.f32 0.0, %v4590
          %v4592 = vpop.f32.mrf.mxu0
          %4593 = vmatprep.mubr.bf16.mxu0 %v4479
          %4594 = vmatmul.mubr.bf16.gmra.mxu0 %v4351
          %v4595 = vpop.f32.mrf.mxu0
          %v4596 = vadd.f32 0.0, %v4595
          %v4597 = vpop.f32.mrf.mxu0
          %v4598 = vpop.f32.mrf.mxu0
          %v4599 = vadd.f32 0.0, %v4598
          %v4600 = vpop.f32.mrf.mxu0
          %4601 = vmatprep.mubr.bf16.mxu0 %v4482
          %4602 = vmatmul.mubr.bf16.gmra.mxu0 %v4353
          %v4603 = vpop.f32.mrf.mxu0
          %v4604 = vadd.f32 0.0, %v4603
          %v4605 = vpop.f32.mrf.mxu0
          %v4606 = vpop.f32.mrf.mxu0
          %v4607 = vadd.f32 0.0, %v4606
          %v4608 = vpop.f32.mrf.mxu0
          %4609 = vmatprep.mubr.bf16.mxu0 %v4485
          %4610 = vmatmul.mubr.bf16.gmra.mxu0 %v4355
          %v4611 = vpop.f32.mrf.mxu0
          %v4612 = vadd.f32 0.0, %v4611
          %v4613 = vpop.f32.mrf.mxu0
          %v4614 = vpop.f32.mrf.mxu0
          %v4615 = vadd.f32 0.0, %v4614
          %v4616 = vpop.f32.mrf.mxu0
          %4617 = vmatprep.mubr.bf16.mxu0 %v4488
          %4618 = vmatmul.mubr.bf16.gmra.mxu0 %v4357
          %v4619 = vpop.f32.mrf.mxu0
          %v4620 = vadd.f32 0.0, %v4619
          %v4621 = vpop.f32.mrf.mxu0
          %v4622 = vpop.f32.mrf.mxu0
          %v4623 = vadd.f32 0.0, %v4622
          %v4624 = vpop.f32.mrf.mxu0
          %4625 = vmatprep.mubr.bf16.mxu0 %v4491
          %4626 = vmatmul.mubr.bf16.gmra.mxu0 %v4359
          %v4627 = vpop.f32.mrf.mxu0
          %v4628 = vadd.f32 0.0, %v4627
          %v4629 = vpop.f32.mrf.mxu0
          %v4630 = vpop.f32.mrf.mxu0
          %v4631 = vadd.f32 0.0, %v4630
          %v4632 = vpop.f32.mrf.mxu0
          %4633 = vmatprep.mubr.bf16.mxu0 %v4494
          %4634 = vmatmul.mubr.bf16.gmra.mxu0 %v4361
          %v4635 = vpop.f32.mrf.mxu0
          %v4636 = vadd.f32 0.0, %v4635
          %v4637 = vpop.f32.mrf.mxu0
          %v4638 = vpop.f32.mrf.mxu0
          %v4639 = vadd.f32 0.0, %v4638
          %v4640 = vpop.f32.mrf.mxu0
          %4641 = vmatprep.mubr.bf16.mxu0 %v4497
          %4642 = vmatmul.mubr.bf16.gmra.mxu0 %v4363
          %v4643 = vpop.f32.mrf.mxu0
          %v4644 = vadd.f32 0.0, %v4643
          %v4645 = vpop.f32.mrf.mxu0
          %v4646 = vpop.f32.mrf.mxu0
          %v4647 = vadd.f32 0.0, %v4646
          %v4648 = vpop.f32.mrf.mxu0
          %4649 = vmatprep.mubr.bf16.mxu0 %v4500
          %4650 = vmatmul.mubr.bf16.gmra.mxu0 %v4365
          %v4651 = vpop.f32.mrf.mxu0
          %v4652 = vadd.f32 0.0, %v4651
          %v4653 = vpop.f32.mrf.mxu0
          %v4654 = vpop.f32.mrf.mxu0
          %v4655 = vadd.f32 0.0, %v4654
          %v4656 = vpop.f32.mrf.mxu0
          %4657 = vmatprep.mubr.bf16.mxu0 %v4503
          %4658 = vmatmul.mubr.bf16.gmra.mxu0 %v4367
          %v4659 = vpop.f32.mrf.mxu0
          %v4660 = vadd.f32 0.0, %v4659
          %v4661 = vpop.f32.mrf.mxu0
          %v4662 = vpop.f32.mrf.mxu0
          %v4663 = vadd.f32 0.0, %v4662
          %v4664 = vpop.f32.mrf.mxu0
          %4665 = vdwg.mxu0
          %v4666 = vadd.f32 %v4057, %v4540
          %v4667 = vadd.f32 %v4060, %v4543
          %v4668 = vadd.f32 %v4065, %v4548
          %v4669 = vadd.f32 %v4068, %v4551
          %v4670 = vadd.f32 %v4073, %v4556
          %v4671 = vadd.f32 %v4076, %v4559
          %v4672 = vadd.f32 %v4081, %v4564
          %v4673 = vadd.f32 %v4084, %v4567
          %v4674 = vadd.f32 %v4089, %v4572
          %v4675 = vadd.f32 %v4092, %v4575
          %v4676 = vadd.f32 %v4097, %v4580
          %v4677 = vadd.f32 %v4100, %v4583
          %v4678 = vadd.f32 %v4105, %v4588
          %v4679 = vadd.f32 %v4108, %v4591
          %v4680 = vadd.f32 %v4113, %v4596
          %v4681 = vadd.f32 %v4116, %v4599
          %v4682 = vadd.f32 %v4121, %v4604
          %v4683 = vadd.f32 %v4124, %v4607
          %v4684 = vadd.f32 %v4129, %v4612
          %v4685 = vadd.f32 %v4132, %v4615
          %v4686 = vadd.f32 %v4137, %v4620
          %v4687 = vadd.f32 %v4140, %v4623
          %v4688 = vadd.f32 %v4145, %v4628
          %v4689 = vadd.f32 %v4148, %v4631
          %v4690 = vadd.f32 %v4153, %v4636
          %v4691 = vadd.f32 %v4156, %v4639
          %v4692 = vadd.f32 %v4161, %v4644
          %v4693 = vadd.f32 %v4164, %v4647
          %v4694 = vadd.f32 %v4169, %v4652
          %v4695 = vadd.f32 %v4172, %v4655
          %v4696 = vadd.f32 %v4177, %v4660
          %v4697 = vadd.f32 %v4180, %v4663
          %s4698 = scalar_lea.vmem %s4, %s375
          %v4699 = vld [vmem:[%s4698] sm:$0x1]
          %v4701 = vlaneseq
          %v4702 = vshrl.u32 %v4701, 7
          %v4703 = vsub.s32 0, %v4702
          %v4704 = vrot.slane %v4699, %v4703
          %v4706 = vadd.f32 %v4666, %v4704
          %v4707 = vadd.f32 %v4667, %v4704
          %v4708 = vadd.f32 %v4668, %v4704
          %v4709 = vadd.f32 %v4669, %v4704
          %v4710 = vadd.f32 %v4670, %v4704
          %v4711 = vadd.f32 %v4671, %v4704
          %v4712 = vadd.f32 %v4672, %v4704
          %v4713 = vadd.f32 %v4673, %v4704
          %v4714 = vadd.f32 %v4674, %v4704
          %v4715 = vadd.f32 %v4675, %v4704
          %v4716 = vadd.f32 %v4676, %v4704
          %v4717 = vadd.f32 %v4677, %v4704
          %v4718 = vadd.f32 %v4678, %v4704
          %v4719 = vadd.f32 %v4679, %v4704
          %v4720 = vadd.f32 %v4680, %v4704
          %v4721 = vadd.f32 %v4681, %v4704
          %v4722 = vadd.f32 %v4682, %v4704
          %v4723 = vadd.f32 %v4683, %v4704
          %v4724 = vadd.f32 %v4684, %v4704
          %v4725 = vadd.f32 %v4685, %v4704
          %v4726 = vadd.f32 %v4686, %v4704
          %v4727 = vadd.f32 %v4687, %v4704
          %v4728 = vadd.f32 %v4688, %v4704
          %v4729 = vadd.f32 %v4689, %v4704
          %v4730 = vadd.f32 %v4690, %v4704
          %v4731 = vadd.f32 %v4691, %v4704
          %v4732 = vadd.f32 %v4692, %v4704
          %v4733 = vadd.f32 %v4693, %v4704
          %v4734 = vadd.f32 %v4694, %v4704
          %v4735 = vadd.f32 %v4695, %v4704
          %v4736 = vadd.f32 %v4696, %v4704
          %v4737 = vadd.f32 %v4697, %v4704
          %v4738 = vsel %vm332, %v4706, 0.0
          %v4739 = vsel %vm332, %v4707, 0.0
          %v4740 = vadd.f32 %v4738, %v4739
          %v4741 = vsel %vm332, %v4708, 0.0
          %v4742 = vadd.f32 %v4740, %v4741
          %v4743 = vsel %vm332, %v4709, 0.0
          %v4744 = vadd.f32 %v4742, %v4743
          %v4745 = vsel %vm332, %v4710, 0.0
          %v4746 = vadd.f32 %v4744, %v4745
          %v4747 = vsel %vm332, %v4711, 0.0
          %v4748 = vadd.f32 %v4746, %v4747
          %v4749 = vsel %vm332, %v4712, 0.0
          %v4750 = vadd.f32 %v4748, %v4749
          %v4751 = vsel %vm332, %v4713, 0.0
          %v4752 = vadd.f32 %v4750, %v4751
          %v4753 = vsel %vm332, %v4714, 0.0
          %v4754 = vadd.f32 %v4752, %v4753
          %v4755 = vsel %vm332, %v4715, 0.0
          %v4756 = vadd.f32 %v4754, %v4755
          %v4757 = vsel %vm332, %v4716, 0.0
          %v4758 = vadd.f32 %v4756, %v4757
          %v4759 = vsel %vm332, %v4717, 0.0
          %v4760 = vadd.f32 %v4758, %v4759
          %v4761 = vsel %vm332, %v4718, 0.0
          %v4762 = vadd.f32 %v4760, %v4761
          %v4763 = vsel %vm332, %v4719, 0.0
          %v4764 = vadd.f32 %v4762, %v4763
          %v4765 = vsel %vm332, %v4720, 0.0
          %v4766 = vadd.f32 %v4764, %v4765
          %v4767 = vsel %vm332, %v4721, 0.0
          %v4768 = vadd.f32 %v4766, %v4767
          %v4769 = vsel %vm332, %v4722, 0.0
          %v4770 = vadd.f32 %v4768, %v4769
          %v4771 = vsel %vm332, %v4723, 0.0
          %v4772 = vadd.f32 %v4770, %v4771
          %v4773 = vsel %vm332, %v4724, 0.0
          %v4774 = vadd.f32 %v4772, %v4773
          %v4775 = vsel %vm332, %v4725, 0.0
          %v4776 = vadd.f32 %v4774, %v4775
          %v4777 = vsel %vm332, %v4726, 0.0
          %v4778 = vadd.f32 %v4776, %v4777
          %v4779 = vsel %vm332, %v4727, 0.0
          %v4780 = vadd.f32 %v4778, %v4779
          %v4781 = vsel %vm332, %v4728, 0.0
          %v4782 = vadd.f32 %v4780, %v4781
          %v4783 = vsel %vm332, %v4729, 0.0
          %v4784 = vadd.f32 %v4782, %v4783
          %v4785 = vsel %vm332, %v4730, 0.0
          %v4786 = vadd.f32 %v4784, %v4785
          %v4787 = vsel %vm332, %v4731, 0.0
          %v4788 = vadd.f32 %v4786, %v4787
          %v4789 = vsel %vm332, %v4732, 0.0
          %v4790 = vadd.f32 %v4788, %v4789
          %v4791 = vsel %vm332, %v4733, 0.0
          %v4792 = vadd.f32 %v4790, %v4791
          %v4793 = vsel %vm332, %v4734, 0.0
          %v4794 = vadd.f32 %v4792, %v4793
          %v4795 = vsel %vm332, %v4735, 0.0
          %v4796 = vadd.f32 %v4794, %v4795
          %v4797 = vsel %vm332, %v4736, 0.0
          %v4798 = vadd.f32 %v4796, %v4797
          %v4799 = vsel %vm332, %v4737, 0.0
          %v4800 = vadd.f32 %v4798, %v4799
          %v4801 = vrot.slane %v4800, 4
          %v4802 = vadd.f32 %v4800, %v4801
          %v4803 = vrot.slane %v4802, 2
          %v4804 = vadd.f32 %v4802, %v4803
          %v4805 = vrot.slane %v4804, 1
          %v4806 = vadd.f32 %v4804, %v4805
          %v4807 = vrcp.pop 256.0
          %v4808 = vmul.f32 %v4806, %v4807
          %s4809 = smul.u32 %s375, 4
          %s4810 = scalar_lea.vmem %s5, %s4809
          %v4811 = vld [vmem:[%s4810] sm:$0xf]
          %v4812 = vmul.f32 %v4808, %v4811
          %v4813 = vsel %vm1453, %v4812, 0.0
          %4814 = vadd.xlane.f32.xlu0 %v4813
          %v4815 = vpop.xlane.xlu0 %4814
          %s4816 = scalar_lea.vmem %s6, %s4809
          %v4817 = vld [vmem:[%s4816] sm:$0xf]
          %v4818 = vadd.f32 %v4815, %v4817
          %v4819 = vmax.f32 %v4818, 0.0
          %s4820 = scalar_lea.vmem %s7, %s4809
          %v4821 = vld [vmem:[%s4820] sm:$0xf]
          %4823 = vset.pattern.permute.xlu0 0
          %4824 = vperm.xlu0 %4823, %v4819
          %v4825 = vpop.permute.xlu0 %4824
          %v4827 = vmul.f32 %v4825, %v4821
          %v4828 = vsel %vm1453, %v4827, 0.0
          %v4829 = vrot.slane %v4828, 4
          %v4830 = vadd.f32 %v4828, %v4829
          %v4831 = vrot.slane %v4830, 2
          %v4832 = vadd.f32 %v4830, %v4831
          %v4833 = vrot.slane %v4832, 1
          %v4834 = vadd.f32 %v4832, %v4833
          %s4835 = scalar_lea.vmem %s8, %s375
          %v4836 = vld [vmem:[%s4835] sm:$0x1]
          %v4837 = vadd.f32 %v4834, %v4836
          %v4838 = vxor.u32 %v4837, 2147483648
          %v4839 = vmul.f32 %v4838, 1.442695
          %v4840 = vpow.pop %v4839
          %v4841 = vadd.f32 %v4840, 1.0
          %v4842 = vrcp.pop %v4841
          %v4843 = vmul.f32 1.0, %v4842
          %v4844 = vlaneseq
          %v4845 = vshrl.u32 %v4844, 7
          %v4846 = vsub.s32 0, %v4845
          %v4847 = vrot.slane %v4843, %v4846
          %v4848 = vmul.f32 %v4706, %v4847
          %v4849 = vmul.f32 %v4707, %v4847
          %v4850 = vmul.f32 %v4708, %v4847
          %v4851 = vmul.f32 %v4709, %v4847
          %v4852 = vmul.f32 %v4710, %v4847
          %v4853 = vmul.f32 %v4711, %v4847
          %v4854 = vmul.f32 %v4712, %v4847
          %v4855 = vmul.f32 %v4713, %v4847
          %v4856 = vmul.f32 %v4714, %v4847
          %v4857 = vmul.f32 %v4715, %v4847
          %v4858 = vmul.f32 %v4716, %v4847
          %v4859 = vmul.f32 %v4717, %v4847
          %v4860 = vmul.f32 %v4718, %v4847
          %v4861 = vmul.f32 %v4719, %v4847
          %v4862 = vmul.f32 %v4720, %v4847
          %v4863 = vmul.f32 %v4721, %v4847
          %v4864 = vmul.f32 %v4722, %v4847
          %v4865 = vmul.f32 %v4723, %v4847
          %v4866 = vmul.f32 %v4724, %v4847
          %v4867 = vmul.f32 %v4725, %v4847
          %v4868 = vmul.f32 %v4726, %v4847
          %v4869 = vmul.f32 %v4727, %v4847
          %v4870 = vmul.f32 %v4728, %v4847
          %v4871 = vmul.f32 %v4729, %v4847
          %v4872 = vmul.f32 %v4730, %v4847
          %v4873 = vmul.f32 %v4731, %v4847
          %v4874 = vmul.f32 %v4732, %v4847
          %v4875 = vmul.f32 %v4733, %v4847
          %v4876 = vmul.f32 %v4734, %v4847
          %v4877 = vmul.f32 %v4735, %v4847
          %v4878 = vmul.f32 %v4736, %v4847
          %v4879 = vmul.f32 %v4737, %v4847
          %v4880 = vadd.f32 %v380, %v4848
          %v4881 = vadd.f32 %v381, %v4849
          %v4882 = vadd.f32 %v382, %v4850
          %v4883 = vadd.f32 %v383, %v4851
          %v4884 = vadd.f32 %v384, %v4852
          %v4885 = vadd.f32 %v385, %v4853
          %v4886 = vadd.f32 %v386, %v4854
          %v4887 = vadd.f32 %v387, %v4855
          %v4888 = vadd.f32 %v388, %v4856
          %v4889 = vadd.f32 %v389, %v4857
          %v4890 = vadd.f32 %v390, %v4858
          %v4891 = vadd.f32 %v391, %v4859
          %v4892 = vadd.f32 %v392, %v4860
          %v4893 = vadd.f32 %v393, %v4861
          %v4894 = vadd.f32 %v394, %v4862
          %v4895 = vadd.f32 %v395, %v4863
          %v4896 = vadd.f32 %v396, %v4864
          %v4897 = vadd.f32 %v397, %v4865
          %v4898 = vadd.f32 %v398, %v4866
          %v4899 = vadd.f32 %v399, %v4867
          %v4900 = vadd.f32 %v400, %v4868
          %v4901 = vadd.f32 %v401, %v4869
          %v4902 = vadd.f32 %v402, %v4870
          %v4903 = vadd.f32 %v403, %v4871
          %v4904 = vadd.f32 %v404, %v4872
          %v4905 = vadd.f32 %v405, %v4873
          %v4906 = vadd.f32 %v406, %v4874
          %v4907 = vadd.f32 %v407, %v4875
          %v4908 = vadd.f32 %v408, %v4876
          %v4909 = vadd.f32 %v409, %v4877
          %v4910 = vadd.f32 %v410, %v4878
          %v4911 = vadd.f32 %v411, %v4879
        $region61: #{basic_u_forward.1} parent=55 // loop_footer
          %s379 = sadd.s32 1, %s375
        $region62: #{basic_u_forward.1} parent=55 // loop_footer_branch
          %374 = sbr.rel target = $region58
        $region63: #{basic_u_forward.1} parent=55 // loop_exit
          _
        %v4912 = vld [vmem:[%s330] sm:$0xff]
        %v4913 = vld [vmem:[%s330 + $0x8] sm:$0xff]
        %v4914 = vld [vmem:[%s330 + $0x10] sm:$0xff]
        %v4915 = vld [vmem:[%s330 + $0x18] sm:$0xff]
        %v4916 = vld [vmem:[%s330 + $0x20] sm:$0xff]
        %v4917 = vld [vmem:[%s330 + $0x28] sm:$0xff]
        %v4918 = vld [vmem:[%s330 + $0x30] sm:$0xff]
        %v4919 = vld [vmem:[%s330 + $0x38] sm:$0xff]
        %v4920 = vld [vmem:[%s330 + $0x40] sm:$0xff]
        %v4921 = vld [vmem:[%s330 + $0x48] sm:$0xff]
        %v4922 = vld [vmem:[%s330 + $0x50] sm:$0xff]
        %v4923 = vld [vmem:[%s330 + $0x58] sm:$0xff]
        %v4924 = vld [vmem:[%s330 + $0x60] sm:$0xff]
        %v4925 = vld [vmem:[%s330 + $0x68] sm:$0xff]
        %v4926 = vld [vmem:[%s330 + $0x70] sm:$0xff]
        %v4927 = vld [vmem:[%s330 + $0x78] sm:$0xff]
        %v4928 = vld [vmem:[%s330 + $0x80] sm:$0xff]
        %v4929 = vld [vmem:[%s330 + $0x88] sm:$0xff]
        %v4930 = vld [vmem:[%s330 + $0x90] sm:$0xff]
        %v4931 = vld [vmem:[%s330 + $0x98] sm:$0xff]
        %v4932 = vld [vmem:[%s330 + $0xa0] sm:$0xff]
        %v4933 = vld [vmem:[%s330 + $0xa8] sm:$0xff]
        %v4934 = vld [vmem:[%s330 + $0xb0] sm:$0xff]
        %v4935 = vld [vmem:[%s330 + $0xb8] sm:$0xff]
        %v4936 = vld [vmem:[%s330 + $0xc0] sm:$0xff]
        %v4937 = vld [vmem:[%s330 + $0xc8] sm:$0xff]
        %v4938 = vld [vmem:[%s330 + $0xd0] sm:$0xff]
        %v4939 = vld [vmem:[%s330 + $0xd8] sm:$0xff]
        %v4940 = vld [vmem:[%s330 + $0xe0] sm:$0xff]
        %v4941 = vld [vmem:[%s330 + $0xe8] sm:$0xff]
        %v4942 = vld [vmem:[%s330 + $0xf0] sm:$0xff]
        %v4943 = vld [vmem:[%s330 + $0xf8] sm:$0xff]
        %v4944 = vadd.f32 %v4912, %v380
        %v4945 = vadd.f32 %v4913, %v381
        %v4946 = vadd.f32 %v4914, %v382
        %v4947 = vadd.f32 %v4915, %v383
        %v4948 = vadd.f32 %v4916, %v384
        %v4949 = vadd.f32 %v4917, %v385
        %v4950 = vadd.f32 %v4918, %v386
        %v4951 = vadd.f32 %v4919, %v387
        %v4952 = vadd.f32 %v4920, %v388
        %v4953 = vadd.f32 %v4921, %v389
        %v4954 = vadd.f32 %v4922, %v390
        %v4955 = vadd.f32 %v4923, %v391
        %v4956 = vadd.f32 %v4924, %v392
        %v4957 = vadd.f32 %v4925, %v393
        %v4958 = vadd.f32 %v4926, %v394
        %v4959 = vadd.f32 %v4927, %v395
        %v4960 = vadd.f32 %v4928, %v396
        %v4961 = vadd.f32 %v4929, %v397
        %v4962 = vadd.f32 %v4930, %v398
        %v4963 = vadd.f32 %v4931, %v399
        %v4964 = vadd.f32 %v4932, %v400
        %v4965 = vadd.f32 %v4933, %v401
        %v4966 = vadd.f32 %v4934, %v402
        %v4967 = vadd.f32 %v4935, %v403
        %v4968 = vadd.f32 %v4936, %v404
        %v4969 = vadd.f32 %v4937, %v405
        %v4970 = vadd.f32 %v4938, %v406
        %v4971 = vadd.f32 %v4939, %v407
        %v4972 = vadd.f32 %v4940, %v408
        %v4973 = vadd.f32 %v4941, %v409
        %v4974 = vadd.f32 %v4942, %v410
        %v4975 = vadd.f32 %v4943, %v411
        %4976 = vst.msk [vmem:[%s325] sm:$0xff] %vm332, %v4944
        %4977 = vst.msk [vmem:[%s325 + $0x8] sm:$0xff] %vm332, %v4945
        %4978 = vst.msk [vmem:[%s325 + $0x10] sm:$0xff] %vm332, %v4946
        %4979 = vst.msk [vmem:[%s325 + $0x18] sm:$0xff] %vm332, %v4947
        %4980 = vst.msk [vmem:[%s325 + $0x20] sm:$0xff] %vm332, %v4948
        %4981 = vst.msk [vmem:[%s325 + $0x28] sm:$0xff] %vm332, %v4949
        %4982 = vst.msk [vmem:[%s325 + $0x30] sm:$0xff] %vm332, %v4950
        %4983 = vst.msk [vmem:[%s325 + $0x38] sm:$0xff] %vm332, %v4951
        %4984 = vst.msk [vmem:[%s325 + $0x40] sm:$0xff] %vm332, %v4952
        %4985 = vst.msk [vmem:[%s325 + $0x48] sm:$0xff] %vm332, %v4953
        %4986 = vst.msk [vmem:[%s325 + $0x50] sm:$0xff] %vm332, %v4954
        %4987 = vst.msk [vmem:[%s325 + $0x58] sm:$0xff] %vm332, %v4955
        %4988 = vst.msk [vmem:[%s325 + $0x60] sm:$0xff] %vm332, %v4956
        %4989 = vst.msk [vmem:[%s325 + $0x68] sm:$0xff] %vm332, %v4957
        %4990 = vst.msk [vmem:[%s325 + $0x70] sm:$0xff] %vm332, %v4958
        %4991 = vst.msk [vmem:[%s325 + $0x78] sm:$0xff] %vm332, %v4959
        %4992 = vst.msk [vmem:[%s325 + $0x80] sm:$0xff] %vm332, %v4960
        %4993 = vst.msk [vmem:[%s325 + $0x88] sm:$0xff] %vm332, %v4961
        %4994 = vst.msk [vmem:[%s325 + $0x90] sm:$0xff] %vm332, %v4962
        %4995 = vst.msk [vmem:[%s325 + $0x98] sm:$0xff] %vm332, %v4963
        %4996 = vst.msk [vmem:[%s325 + $0xa0] sm:$0xff] %vm332, %v4964
        %4997 = vst.msk [vmem:[%s325 + $0xa8] sm:$0xff] %vm332, %v4965
        %4998 = vst.msk [vmem:[%s325 + $0xb0] sm:$0xff] %vm332, %v4966
        %4999 = vst.msk [vmem:[%s325 + $0xb8] sm:$0xff] %vm332, %v4967
        %5000 = vst.msk [vmem:[%s325 + $0xc0] sm:$0xff] %vm332, %v4968
        %5001 = vst.msk [vmem:[%s325 + $0xc8] sm:$0xff] %vm332, %v4969
        %5002 = vst.msk [vmem:[%s325 + $0xd0] sm:$0xff] %vm332, %v4970
        %5003 = vst.msk [vmem:[%s325 + $0xd8] sm:$0xff] %vm332, %v4971
        %5004 = vst.msk [vmem:[%s325 + $0xe0] sm:$0xff] %vm332, %v4972
        %5005 = vst.msk [vmem:[%s325 + $0xe8] sm:$0xff] %vm332, %v4973
        %5006 = vst.msk [vmem:[%s325 + $0xf0] sm:$0xff] %vm332, %v4974
        %5007 = vst.msk [vmem:[%s325 + $0xf8] sm:$0xff] %vm332, %v4975
        %s5008 = sand.u32 %s225, 1
        %s5009 = scalar_lea.sflag [#allocation5], %s5008
        %s5010 = sand.u32 %s225, 1
        %s5011 = smul.addr %s5010, 256
        %s5012 = scalar_lea.vmem [#allocation4], %s5011
        // Predicated region
        $region64: #{basic_u_forward.1} parent=55 // pred_check
          %p5013 = pneg %p235
        $region65: #{basic_u_forward.1} parent=55 // pred_check_branch
          %5015 = sbr.rel (%p5013) target = $region67
        $region66: #{basic_u_forward.1} parent=55 // pred_region
          %s5017 = ssub.s32 4096, 4096
          %5018 = vsyncadd %s5009, %s5017
          %s5019 = smul.addr %s23, 32
          %s5020 = smul.addr %s5019, 128
          %s5021 = scalar_lea.hbm %s9, %s5020
          %s5022 = sshll.u32 %s5012, 4
          %s5023 = int_to_ptr.vmem [resolvable:$true] %s5022
          %5028 = dma.vmem_to_hbm [thread:$0]  %s5023, 4096, %s5021, %s5009, 128, 128, 8
        $region67: #{basic_u_forward.1} parent=55 // pred_fallthru
          _
      $region56: #{basic_u_forward.1} parent=5 // pred_fallthru
        _
      %p5029 = scmp.le.s32.totalorder 2, %s18
      // Predicated region
      $region68: #{basic_u_forward.1} parent=5 // pred_check
        %p5030 = pneg %p5029
      $region69: #{basic_u_forward.1} parent=5 // pred_check_branch
        %5032 = sbr.rel (%p5030) target = $region71
      $region70: #{basic_u_forward.1} parent=5 // pred_region
        %s5033 = ssub.s32 %s18, 2
        // Predicated region
        $region72: #{basic_u_forward.1} parent=70 // pred_check
          %p5034 = pneg %p241
        $region73: #{basic_u_forward.1} parent=70 // pred_check_branch
          %5036 = sbr.rel (%p5034) target = $region75
        $region74: #{basic_u_forward.1} parent=70 // pred_region
          %s5037 = sand.u32 %s226, 1
          %s5038 = scalar_lea.sflag [#allocation5], %s5037
          %s5039 = sand.u32 %s226, 1
          %s5040 = smul.addr %s5039, 256
          %s5041 = scalar_lea.vmem [#allocation4], %s5040
          %5042 = dma.done %s5038, 4096
        $region75: #{basic_u_forward.1} parent=70 // pred_fallthru
          _
      $region71: #{basic_u_forward.1} parent=5 // pred_fallthru
        _
    $region6: #{basic_u_forward.1} parent=1 // loop_footer
      %s22 = sadd.s32 1, %s18
    $region7: #{basic_u_forward.1} parent=1 // loop_footer_branch
      %17 = sbr.rel target = $region3
    $region8: #{basic_u_forward.1} parent=1 // loop_exit
      _
    %5043 = vsyncpa [#allocation5], 1
    %s5044 = scalar_lea.sflag [#allocation5], 1
    %5045 = vsyncpa %s5044, 1

</llo_original>
